<compile_context>
chip_gen: v6e
topology: v6e:2x2x1
jax: 0.10.0
libtpu: 0.0.40
codegen_flags: <defaults>
</compile_context>

<pallas_src>
import functools
import math

import jax
import jax.numpy as jnp
from jax.experimental import pallas as pl
from jax.experimental.pallas import tpu as pltpu


def building_block_kernel(x_ref,
                          a1_ref, g1_ref,
                          wqkv_ref, bqkv_ref,
                          wo_ref, bo_ref,
                          a2_ref, g2_ref,
                          w1_ref, bf1_ref,
                          w2_ref, bf2_ref,
                          o_ref,
                          *, num_heads, eps):
    bt, seq, d = x_ref.shape
    nh = num_heads
    dk = d // nh
    rows = bt * seq

    # flatten batch block to rows (layout-free: collapses leading dims)
    x = x_ref[...].astype(jnp.float32).reshape(rows, d)

    def torch_norm(v, alpha, beta):
        # alpha * (v - mean) / (std_unbiased + eps) + beta
        mean = jnp.sum(v, axis=-1, keepdims=True) * (1.0 / d)
        c = v - mean
        var = jnp.sum(c * c, axis=-1, keepdims=True) * (1.0 / (d - 1))
        inv = pl.reciprocal(jnp.sqrt(var) + eps, approx=True)
        return alpha * (c * inv) + beta

    # ---- norm_1 (f32) ----
    x2 = torch_norm(x, a1_ref[...], g1_ref[...])

    # ---- fused QKV projection: one big MXU matmul (bf16 in, f32 accum) ----
    qkv = jnp.dot(x2.astype(jnp.bfloat16), wqkv_ref[...],
                  preferred_element_type=jnp.float32) + bqkv_ref[...]
    q = qkv[:, 0 * d:1 * d]
    k = qkv[:, 1 * d:2 * d]
    v = qkv[:, 2 * d:3 * d]

    def to_heads(t):
        # (rows, d) -> (nh*bt, seq, dk); batch index = head*bt + batch_in_block
        parts = [t[:, i * dk:(i + 1) * dk].reshape(bt, seq, dk) for i in range(nh)]
        return jnp.concatenate(parts, axis=0)

    qh = to_heads(q).astype(jnp.bfloat16)
    kh = to_heads(k).astype(jnp.bfloat16)
    vh = to_heads(v).astype(jnp.bfloat16)

    # ---- head-batched attention ----
    scale = 1.0 / math.sqrt(dk)
    s = jnp.einsum('bqd,bkd->bqk', qh, kh,
                   preferred_element_type=jnp.float32) * scale          # (nh*bt, seq, seq)

    # sublane-packed softmax (f32) over all (head, batch, query) rows at once
    s2 = s.reshape(nh * bt * seq, seq)
    m = jnp.max(s2, axis=-1, keepdims=True)
    e = jnp.exp(s2 - m)
    p = e * pl.reciprocal(jnp.sum(e, axis=-1, keepdims=True), approx=True)
    p = p.reshape(nh * bt, seq, seq).astype(jnp.bfloat16)

    ctx = jnp.einsum('bqk,bkd->bqd', p, vh,
                     preferred_element_type=jnp.float32)                # (nh*bt, seq, dk)

    # merge heads back to (rows, d), head-major along features (matches torch concat)
    merged = jnp.concatenate(
        [ctx[i * bt:(i + 1) * bt].reshape(rows, dk) for i in range(nh)], axis=-1)

    attn_out = jnp.dot(merged.astype(jnp.bfloat16), wo_ref[...],
                       preferred_element_type=jnp.float32) + bo_ref[...]

    # ---- residual 1 (dropout_1 identity at eval), in f32 ----
    new_x = x + attn_out

    # ---- norm_2 (f32) ----
    x2b = torch_norm(new_x, a2_ref[...], g2_ref[...])

    # ---- position-wise feed-forward (bf16 matmuls, f32 accum / relu) ----
    h1 = jnp.dot(x2b.astype(jnp.bfloat16), w1_ref[...],
                 preferred_element_type=jnp.float32) + bf1_ref[...]
    h1 = jnp.maximum(h1, 0.0)
    ffn = jnp.dot(h1.astype(jnp.bfloat16), w2_ref[...],
                  preferred_element_type=jnp.float32) + bf2_ref[...]

    # ---- residual 2 (dropout_2 identity at eval) ----
    o_ref[...] = (new_x + ffn).reshape(bt, seq, d).astype(o_ref.dtype)


def _choose_bt(B, S, rows_target):
    """Largest batch-block that divides B and keeps Bt*S <= rows_target.

    If the MXU can already be fed with >=128 rows per step, prefer keeping >=2 grid
    steps so both v7x TensorCores get work."""
    divisors = [d for d in range(1, B + 1) if B % d == 0]
    fits = [d for d in divisors if d * S <= rows_target] or [1]
    multi = [d for d in fits if B // d >= 2 and d * S >= 128]
    return max(multi) if multi else max(fits)


def building_block(x, params, *, num_heads, eps=1e-6, rows_target=512):
    B, S, D = x.shape
    assert D % num_heads == 0
    d_ff = params["w1"].shape[1]

    bt = _choose_bt(B, S, rows_target)
    grid = (B // bt,)

    f32, bf16 = jnp.float32, jnp.bfloat16

    # Fuse Q/K/V weights into one (D, 3D) matmul operand; cast matmul weights to bf16.
    wqkv = jnp.concatenate([params["wq"], params["wk"], params["wv"]], axis=1).astype(bf16)
    bqkv = jnp.concatenate([params["bq"], params["bk"], params["bv"]], axis=1).astype(f32)

    plist = [
        params["alpha1"].astype(f32), params["beta1"].astype(f32),
        wqkv, bqkv,
        params["wo"].astype(bf16), params["bo"].astype(f32),
        params["alpha2"].astype(f32), params["beta2"].astype(f32),
        params["w1"].astype(bf16), params["b1"].astype(f32),
        params["w2"].astype(bf16), params["b2"].astype(f32),
    ]

    def full_spec(shape):
        n = len(shape)
        return pl.BlockSpec(shape, lambda i, n=n: (0,) * n)

    in_specs = [pl.BlockSpec((bt, S, D), lambda i: (i, 0, 0))] + \
               [full_spec(p.shape) for p in plist]
    out_specs = pl.BlockSpec((bt, S, D), lambda i: (i, 0, 0))

    # advisory cost estimate for the XLA scheduler
    H = num_heads
    dk = D // H
    flops = 2 * B * S * (3 * D * D + D * D + 2 * D * d_ff) + 4 * B * H * S * S * dk
    bytes_accessed = (2 * B * S * D * x.dtype.itemsize
                      + sum(int(p.size) * p.dtype.itemsize for p in plist))
    transcendentals = B * H * S * S + 4 * B * S

    kernel = functools.partial(building_block_kernel, num_heads=num_heads, eps=eps)

    return pl.pallas_call(
        kernel,
        out_shape=jax.ShapeDtypeStruct((B, S, D), x.dtype),
        grid=grid,
        in_specs=in_specs,
        out_specs=out_specs,
        compiler_params=pltpu.CompilerParams(
            dimension_semantics=("parallel",),
            vmem_limit_bytes=48 * 1024 * 1024,
        ),
        cost_estimate=pl.CostEstimate(
            flops=flops,
            transcendentals=transcendentals,
            bytes_accessed=bytes_accessed,
        ),
    )(x, *plist)


def building_block_reference(x, params, *, num_heads, eps=1e-6):
    """Pure-JAX f32 reference mirroring the PyTorch module (eval mode)."""
    B, S, D = x.shape
    H = num_heads
    dk = D // H

    def norm(v, a, b):
        mean = jnp.mean(v, axis=-1, keepdims=True)
        c = v - mean
        std = jnp.sqrt(jnp.sum(c * c, axis=-1, keepdims=True) / (D - 1))
        return a * c / (std + eps) + b

    x2 = norm(x, params["alpha1"], params["beta1"])
    q = x2 @ params["wq"] + params["bq"]
    k = x2 @ params["wk"] + params["bk"]
    v = x2 @ params["wv"] + params["bv"]

    def split(t):
        return t.reshape(B, S, H, dk).transpose(0, 2, 1, 3)

    qh, kh, vh = split(q), split(k), split(v)
    s = jnp.einsum('bhqd,bhkd->bhqk', qh, kh) / math.sqrt(dk)
    p = jax.nn.softmax(s, axis=-1)
    ctx = jnp.einsum('bhqk,bhkd->bhqd', p, vh).transpose(0, 2, 1, 3).reshape(B, S, D)
    attn = ctx @ params["wo"] + params["bo"]
    new_x = x + attn
    x2b = norm(new_x, params["alpha2"], params["beta2"])
    ffn = jnp.maximum(x2b @ params["w1"] + params["b1"], 0.0) @ params["w2"] + params["b2"]
    return new_x + ffn


def init_params(key, d_model, d_ff):
    keys = jax.random.split(key, 12)
    scale = 0.02

    def w(k, shape):
        return (scale * jax.random.normal(k, shape)).astype(jnp.float32)

    return {
        # Norm 1 / Norm 2 (alpha=1, bias=0 like nn.Parameter init)
        "alpha1": jnp.ones((1, d_model), jnp.float32),
        "beta1": jnp.zeros((1, d_model), jnp.float32),
        "alpha2": jnp.ones((1, d_model), jnp.float32),
        "beta2": jnp.zeros((1, d_model), jnp.float32),
        # attention linears, stored as (in, out) so the kernel does x @ W
        "wq": w(keys[0], (d_model, d_model)), "bq": w(keys[1], (1, d_model)),
        "wk": w(keys[2], (d_model, d_model)), "bk": w(keys[3], (1, d_model)),
        "wv": w(keys[4], (d_model, d_model)), "bv": w(keys[5], (1, d_model)),
        "wo": w(keys[6], (d_model, d_model)), "bo": w(keys[7], (1, d_model)),
        # feed-forward (d_model -> d_ff -> d_model)
        "w1": w(keys[8], (d_model, d_ff)), "b1": w(keys[9], (1, d_ff)),
        "w2": w(keys[10], (d_ff, d_model)), "b2": w(keys[11], (1, d_model)),
    }


if __name__ == "__main__":
    # Module hyperparameters (small, consistent with Building_Block.__init__)
    num_variable = 4
    hidden_features = 32
    num_heads = 4
    d_model = num_variable * hidden_features   # 128
    d_ff = 2048                                # FeedForward default d_ff

    B, S = 2, 8
    key = jax.random.PRNGKey(0)
    k_x, k_p = jax.random.split(key)
    x = jax.random.normal(k_x, (B, S, d_model), dtype=jnp.float32)
    params = init_params(k_p, d_model, d_ff)

    out = building_block(x, params, num_heads=num_heads)
    out = jax.block_until_ready(out)
    ref = building_block_reference(x, params, num_heads=num_heads)

    assert out.shape == (B, S, d_model)
    assert jnp.all(jnp.isfinite(out))
    max_err = float(jnp.max(jnp.abs(out - ref)))
    # bf16 matmul operands + approx reciprocals: allow a small numerical tolerance.
    assert max_err < 5e-2, f"max abs error vs f32 reference: {max_err}"
    print("KERNEL_OK")
</pallas_src>

<mosaic_0001>
module attributes {stable_mosaic.version = 11 : i64} {
  func.func @building_block_kernel(%arg0: i32, %arg1: memref<2x8x128xf32, #tpu.memory_space<vmem>>, %arg2: memref<1x128xf32, #tpu.memory_space<vmem>>, %arg3: memref<1x128xf32, #tpu.memory_space<vmem>>, %arg4: memref<128x384xbf16, #tpu.memory_space<vmem>>, %arg5: memref<1x384xf32, #tpu.memory_space<vmem>>, %arg6: memref<128x128xbf16, #tpu.memory_space<vmem>>, %arg7: memref<1x128xf32, #tpu.memory_space<vmem>>, %arg8: memref<1x128xf32, #tpu.memory_space<vmem>>, %arg9: memref<1x128xf32, #tpu.memory_space<vmem>>, %arg10: memref<128x2048xbf16, #tpu.memory_space<vmem>>, %arg11: memref<1x2048xf32, #tpu.memory_space<vmem>>, %arg12: memref<2048x128xbf16, #tpu.memory_space<vmem>>, %arg13: memref<1x128xf32, #tpu.memory_space<vmem>>, %arg14: memref<2x8x128xf32, #tpu.memory_space<vmem>>) attributes {dimension_semantics = [#tpu.dimension_semantics<parallel>], iteration_bounds = array<i64: 1>, scalar_prefetch = 0 : i64, scratch_operands = 0 : i64, tpu.core_type = #tpu.core_type<tc>, window_params = [{transform_indices = @transform_0, window_bounds = array<i64: 2, 8, 128>}, {pipeline_mode = #tpu.pipeline_mode<synchronous>, transform_indices = @transform_1, window_bounds = array<i64: 1, 128>}, {pipeline_mode = #tpu.pipeline_mode<synchronous>, transform_indices = @transform_2, window_bounds = array<i64: 1, 128>}, {pipeline_mode = #tpu.pipeline_mode<synchronous>, transform_indices = @transform_3, window_bounds = array<i64: 128, 384>}, {pipeline_mode = #tpu.pipeline_mode<synchronous>, transform_indices = @transform_4, window_bounds = array<i64: 1, 384>}, {pipeline_mode = #tpu.pipeline_mode<synchronous>, transform_indices = @transform_5, window_bounds = array<i64: 128, 128>}, {pipeline_mode = #tpu.pipeline_mode<synchronous>, transform_indices = @transform_6, window_bounds = array<i64: 1, 128>}, {pipeline_mode = #tpu.pipeline_mode<synchronous>, transform_indices = @transform_7, window_bounds = array<i64: 1, 128>}, {pipeline_mode = #tpu.pipeline_mode<synchronous>, transform_indices = @transform_8, window_bounds = array<i64: 1, 128>}, {pipeline_mode = #tpu.pipeline_mode<synchronous>, transform_indices = @transform_9, window_bounds = array<i64: 128, 2048>}, {pipeline_mode = #tpu.pipeline_mode<synchronous>, transform_indices = @transform_10, window_bounds = array<i64: 1, 2048>}, {pipeline_mode = #tpu.pipeline_mode<synchronous>, transform_indices = @transform_11, window_bounds = array<i64: 2048, 128>}, {pipeline_mode = #tpu.pipeline_mode<synchronous>, transform_indices = @transform_12, window_bounds = array<i64: 1, 128>}, {transform_indices = @transform_13, window_bounds = array<i64: 2, 8, 128>}]} {
    %c0 = arith.constant 0 : index
    %c0_0 = arith.constant 0 : index
    %c0_1 = arith.constant 0 : index
    %0 = vector.load %arg1[%c0, %c0_0, %c0_1] : memref<2x8x128xf32, #tpu.memory_space<vmem>>, vector<2x8x128xf32>
    %1 = vector.shape_cast %0 : vector<2x8x128xf32> to vector<16x128xf32>
    %c0_2 = arith.constant 0 : index
    %c0_3 = arith.constant 0 : index
    %2 = vector.load %arg2[%c0_2, %c0_3] : memref<1x128xf32, #tpu.memory_space<vmem>>, vector<1x128xf32>
    %c0_4 = arith.constant 0 : index
    %c0_5 = arith.constant 0 : index
    %3 = vector.load %arg3[%c0_4, %c0_5] : memref<1x128xf32, #tpu.memory_space<vmem>>, vector<1x128xf32>
    %cst = arith.constant dense<0.000000e+00> : vector<16xf32>
    %4 = vector.multi_reduction <add>, %1, %cst [1] : vector<16x128xf32> to vector<16xf32>
    %5 = vector.shape_cast %4 : vector<16xf32> to vector<16x1xf32>
    %cst_6 = arith.constant 7.812500e-03 : f32
    %6 = vector.broadcast %cst_6 : f32 to vector<16x1xf32>
    %7 = arith.mulf %5, %6 : vector<16x1xf32>
    %8 = vector.broadcast %7 : vector<16x1xf32> to vector<16x128xf32>
    %9 = arith.subf %1, %8 : vector<16x128xf32>
    %10 = arith.mulf %9, %9 : vector<16x128xf32>
    %cst_7 = arith.constant dense<0.000000e+00> : vector<16xf32>
    %11 = vector.multi_reduction <add>, %10, %cst_7 [1] : vector<16x128xf32> to vector<16xf32>
    %12 = vector.shape_cast %11 : vector<16xf32> to vector<16x1xf32>
    %cst_8 = arith.constant 0.00787401571 : f32
    %13 = vector.broadcast %cst_8 : f32 to vector<16x1xf32>
    %14 = arith.mulf %12, %13 : vector<16x1xf32>
    %15 = math.sqrt %14 : vector<16x1xf32>
    %cst_9 = arith.constant 9.99999997E-7 : f32
    %16 = vector.broadcast %cst_9 : f32 to vector<16x1xf32>
    %17 = arith.addf %15, %16 : vector<16x1xf32>
    %18 = tpu.reciprocal %17 {approx = true} : vector<16x1xf32> -> vector<16x1xf32>
    %19 = vector.broadcast %18 : vector<16x1xf32> to vector<16x128xf32>
    %20 = arith.mulf %9, %19 : vector<16x128xf32>
    %21 = vector.broadcast %2 : vector<1x128xf32> to vector<16x128xf32>
    %22 = arith.mulf %21, %20 : vector<16x128xf32>
    %23 = vector.broadcast %3 : vector<1x128xf32> to vector<16x128xf32>
    %24 = arith.addf %22, %23 : vector<16x128xf32>
    %25 = arith.truncf %24 : vector<16x128xf32> to vector<16x128xbf16>
    %c0_10 = arith.constant 0 : index
    %c0_11 = arith.constant 0 : index
    %26 = vector.load %arg4[%c0_10, %c0_11] : memref<128x384xbf16, #tpu.memory_space<vmem>>, vector<128x384xbf16>
    %cst_12 = arith.constant dense<0.000000e+00> : vector<16x384xf32>
    %27 = tpu.matmul %25, %26, %cst_12 {dimension_numbers = #tpu.dot_dimension_numbers<[1], [0], [0], [1], [0, 0, 1, 1], [], []>} : vector<16x128xbf16>, vector<128x384xbf16>, vector<16x384xf32> -> vector<16x384xf32>
    %c0_13 = arith.constant 0 : index
    %c0_14 = arith.constant 0 : index
    %28 = vector.load %arg5[%c0_13, %c0_14] : memref<1x384xf32, #tpu.memory_space<vmem>>, vector<1x384xf32>
    %29 = vector.broadcast %28 : vector<1x384xf32> to vector<16x384xf32>
    %30 = arith.addf %27, %29 : vector<16x384xf32>
    %31 = vector.extract_strided_slice %30 {offsets = [0, 0], sizes = [16, 128], strides = [1, 1]} : vector<16x384xf32> to vector<16x128xf32>
    %32 = vector.extract_strided_slice %30 {offsets = [0, 128], sizes = [16, 128], strides = [1, 1]} : vector<16x384xf32> to vector<16x128xf32>
    %33 = vector.extract_strided_slice %30 {offsets = [0, 256], sizes = [16, 128], strides = [1, 1]} : vector<16x384xf32> to vector<16x128xf32>
    %34 = vector.extract_strided_slice %31 {offsets = [0, 0], sizes = [16, 32], strides = [1, 1]} : vector<16x128xf32> to vector<16x32xf32>
    %35 = vector.shape_cast %34 : vector<16x32xf32> to vector<2x8x32xf32>
    %36 = vector.extract_strided_slice %31 {offsets = [0, 32], sizes = [16, 32], strides = [1, 1]} : vector<16x128xf32> to vector<16x32xf32>
    %37 = vector.shape_cast %36 : vector<16x32xf32> to vector<2x8x32xf32>
    %38 = vector.extract_strided_slice %31 {offsets = [0, 64], sizes = [16, 32], strides = [1, 1]} : vector<16x128xf32> to vector<16x32xf32>
    %39 = vector.shape_cast %38 : vector<16x32xf32> to vector<2x8x32xf32>
    %40 = vector.extract_strided_slice %31 {offsets = [0, 96], sizes = [16, 32], strides = [1, 1]} : vector<16x128xf32> to vector<16x32xf32>
    %41 = vector.shape_cast %40 : vector<16x32xf32> to vector<2x8x32xf32>
    %42 = tpu.concatenate %35, %37, %39, %41 in 0 : vector<2x8x32xf32>, vector<2x8x32xf32>, vector<2x8x32xf32>, vector<2x8x32xf32> -> vector<8x8x32xf32>
    %43 = arith.truncf %42 : vector<8x8x32xf32> to vector<8x8x32xbf16>
    %44 = vector.extract_strided_slice %32 {offsets = [0, 0], sizes = [16, 32], strides = [1, 1]} : vector<16x128xf32> to vector<16x32xf32>
    %45 = vector.shape_cast %44 : vector<16x32xf32> to vector<2x8x32xf32>
    %46 = vector.extract_strided_slice %32 {offsets = [0, 32], sizes = [16, 32], strides = [1, 1]} : vector<16x128xf32> to vector<16x32xf32>
    %47 = vector.shape_cast %46 : vector<16x32xf32> to vector<2x8x32xf32>
    %48 = vector.extract_strided_slice %32 {offsets = [0, 64], sizes = [16, 32], strides = [1, 1]} : vector<16x128xf32> to vector<16x32xf32>
    %49 = vector.shape_cast %48 : vector<16x32xf32> to vector<2x8x32xf32>
    %50 = vector.extract_strided_slice %32 {offsets = [0, 96], sizes = [16, 32], strides = [1, 1]} : vector<16x128xf32> to vector<16x32xf32>
    %51 = vector.shape_cast %50 : vector<16x32xf32> to vector<2x8x32xf32>
    %52 = tpu.concatenate %45, %47, %49, %51 in 0 : vector<2x8x32xf32>, vector<2x8x32xf32>, vector<2x8x32xf32>, vector<2x8x32xf32> -> vector<8x8x32xf32>
    %53 = arith.truncf %52 : vector<8x8x32xf32> to vector<8x8x32xbf16>
    %54 = vector.extract_strided_slice %33 {offsets = [0, 0], sizes = [16, 32], strides = [1, 1]} : vector<16x128xf32> to vector<16x32xf32>
    %55 = vector.shape_cast %54 : vector<16x32xf32> to vector<2x8x32xf32>
    %56 = vector.extract_strided_slice %33 {offsets = [0, 32], sizes = [16, 32], strides = [1, 1]} : vector<16x128xf32> to vector<16x32xf32>
    %57 = vector.shape_cast %56 : vector<16x32xf32> to vector<2x8x32xf32>
    %58 = vector.extract_strided_slice %33 {offsets = [0, 64], sizes = [16, 32], strides = [1, 1]} : vector<16x128xf32> to vector<16x32xf32>
    %59 = vector.shape_cast %58 : vector<16x32xf32> to vector<2x8x32xf32>
    %60 = vector.extract_strided_slice %33 {offsets = [0, 96], sizes = [16, 32], strides = [1, 1]} : vector<16x128xf32> to vector<16x32xf32>
    %61 = vector.shape_cast %60 : vector<16x32xf32> to vector<2x8x32xf32>
    %62 = tpu.concatenate %55, %57, %59, %61 in 0 : vector<2x8x32xf32>, vector<2x8x32xf32>, vector<2x8x32xf32>, vector<2x8x32xf32> -> vector<8x8x32xf32>
    %63 = arith.truncf %62 : vector<8x8x32xf32> to vector<8x8x32xbf16>
    "tpu.trace_start"() <{level = 10 : i32, message = "bqd,bkd->bqk"}> : () -> ()
    %cst_15 = arith.constant dense<0.000000e+00> : vector<8x8x8xf32>
    %64 = tpu.matmul %43, %53, %cst_15 {dimension_numbers = #tpu.dot_dimension_numbers<[2], [2], [1], [1], [0, 0, 0, 1, 1, 1], [0], [0]>} : vector<8x8x32xbf16>, vector<8x8x32xbf16>, vector<8x8x8xf32> -> vector<8x8x8xf32>
    "tpu.trace_stop"() : () -> ()
    %cst_16 = arith.constant 0.176776692 : f32
    %65 = vector.broadcast %cst_16 : f32 to vector<8x8x8xf32>
    %66 = arith.mulf %64, %65 : vector<8x8x8xf32>
    %67 = vector.shape_cast %66 : vector<8x8x8xf32> to vector<64x8xf32>
    %cst_17 = arith.constant dense<0xFF800000> : vector<64xf32>
    %68 = vector.multi_reduction <maximumf>, %67, %cst_17 [1] : vector<64x8xf32> to vector<64xf32>
    %69 = vector.shape_cast %68 : vector<64xf32> to vector<64x1xf32>
    %70 = vector.broadcast %69 : vector<64x1xf32> to vector<64x8xf32>
    %71 = arith.subf %67, %70 : vector<64x8xf32>
    %72 = math.exp %71 : vector<64x8xf32>
    %cst_18 = arith.constant dense<0.000000e+00> : vector<64xf32>
    %73 = vector.multi_reduction <add>, %72, %cst_18 [1] : vector<64x8xf32> to vector<64xf32>
    %74 = vector.shape_cast %73 : vector<64xf32> to vector<64x1xf32>
    %75 = tpu.reciprocal %74 {approx = true} : vector<64x1xf32> -> vector<64x1xf32>
    %76 = vector.broadcast %75 : vector<64x1xf32> to vector<64x8xf32>
    %77 = arith.mulf %72, %76 : vector<64x8xf32>
    %78 = vector.shape_cast %77 : vector<64x8xf32> to vector<8x8x8xf32>
    %79 = arith.truncf %78 : vector<8x8x8xf32> to vector<8x8x8xbf16>
    "tpu.trace_start"() <{level = 10 : i32, message = "bqk,bkd->bqd"}> : () -> ()
    %cst_19 = arith.constant dense<0.000000e+00> : vector<8x8x32xf32>
    %80 = tpu.matmul %79, %63, %cst_19 {dimension_numbers = #tpu.dot_dimension_numbers<[2], [1], [1], [2], [0, 0, 0, 1, 1, 2], [0], [0]>} : vector<8x8x8xbf16>, vector<8x8x32xbf16>, vector<8x8x32xf32> -> vector<8x8x32xf32>
    "tpu.trace_stop"() : () -> ()
    %81 = vector.extract_strided_slice %80 {offsets = [0, 0, 0], sizes = [2, 8, 32], strides = [1, 1, 1]} : vector<8x8x32xf32> to vector<2x8x32xf32>
    %82 = vector.shape_cast %81 : vector<2x8x32xf32> to vector<16x32xf32>
    %83 = vector.extract_strided_slice %80 {offsets = [2, 0, 0], sizes = [2, 8, 32], strides = [1, 1, 1]} : vector<8x8x32xf32> to vector<2x8x32xf32>
    %84 = vector.shape_cast %83 : vector<2x8x32xf32> to vector<16x32xf32>
    %85 = vector.extract_strided_slice %80 {offsets = [4, 0, 0], sizes = [2, 8, 32], strides = [1, 1, 1]} : vector<8x8x32xf32> to vector<2x8x32xf32>
    %86 = vector.shape_cast %85 : vector<2x8x32xf32> to vector<16x32xf32>
    %87 = vector.extract_strided_slice %80 {offsets = [6, 0, 0], sizes = [2, 8, 32], strides = [1, 1, 1]} : vector<8x8x32xf32> to vector<2x8x32xf32>
    %88 = vector.shape_cast %87 : vector<2x8x32xf32> to vector<16x32xf32>
    %89 = tpu.concatenate %82, %84, %86, %88 in 1 : vector<16x32xf32>, vector<16x32xf32>, vector<16x32xf32>, vector<16x32xf32> -> vector<16x128xf32>
    %90 = arith.truncf %89 : vector<16x128xf32> to vector<16x128xbf16>
    %c0_20 = arith.constant 0 : index
    %c0_21 = arith.constant 0 : index
    %91 = vector.load %arg6[%c0_20, %c0_21] : memref<128x128xbf16, #tpu.memory_space<vmem>>, vector<128x128xbf16>
    %cst_22 = arith.constant dense<0.000000e+00> : vector<16x128xf32>
    %92 = tpu.matmul %90, %91, %cst_22 {dimension_numbers = #tpu.dot_dimension_numbers<[1], [0], [0], [1], [0, 0, 1, 1], [], []>} : vector<16x128xbf16>, vector<128x128xbf16>, vector<16x128xf32> -> vector<16x128xf32>
    %c0_23 = arith.constant 0 : index
    %c0_24 = arith.constant 0 : index
    %93 = vector.load %arg7[%c0_23, %c0_24] : memref<1x128xf32, #tpu.memory_space<vmem>>, vector<1x128xf32>
    %94 = vector.broadcast %93 : vector<1x128xf32> to vector<16x128xf32>
    %95 = arith.addf %92, %94 : vector<16x128xf32>
    %96 = arith.addf %1, %95 : vector<16x128xf32>
    %c0_25 = arith.constant 0 : index
    %c0_26 = arith.constant 0 : index
    %97 = vector.load %arg8[%c0_25, %c0_26] : memref<1x128xf32, #tpu.memory_space<vmem>>, vector<1x128xf32>
    %c0_27 = arith.constant 0 : index
    %c0_28 = arith.constant 0 : index
    %98 = vector.load %arg9[%c0_27, %c0_28] : memref<1x128xf32, #tpu.memory_space<vmem>>, vector<1x128xf32>
    %cst_29 = arith.constant dense<0.000000e+00> : vector<16xf32>
    %99 = vector.multi_reduction <add>, %96, %cst_29 [1] : vector<16x128xf32> to vector<16xf32>
    %100 = vector.shape_cast %99 : vector<16xf32> to vector<16x1xf32>
    %cst_30 = arith.constant 7.812500e-03 : f32
    %101 = vector.broadcast %cst_30 : f32 to vector<16x1xf32>
    %102 = arith.mulf %100, %101 : vector<16x1xf32>
    %103 = vector.broadcast %102 : vector<16x1xf32> to vector<16x128xf32>
    %104 = arith.subf %96, %103 : vector<16x128xf32>
    %105 = arith.mulf %104, %104 : vector<16x128xf32>
    %cst_31 = arith.constant dense<0.000000e+00> : vector<16xf32>
    %106 = vector.multi_reduction <add>, %105, %cst_31 [1] : vector<16x128xf32> to vector<16xf32>
    %107 = vector.shape_cast %106 : vector<16xf32> to vector<16x1xf32>
    %cst_32 = arith.constant 0.00787401571 : f32
    %108 = vector.broadcast %cst_32 : f32 to vector<16x1xf32>
    %109 = arith.mulf %107, %108 : vector<16x1xf32>
    %110 = math.sqrt %109 : vector<16x1xf32>
    %cst_33 = arith.constant 9.99999997E-7 : f32
    %111 = vector.broadcast %cst_33 : f32 to vector<16x1xf32>
    %112 = arith.addf %110, %111 : vector<16x1xf32>
    %113 = tpu.reciprocal %112 {approx = true} : vector<16x1xf32> -> vector<16x1xf32>
    %114 = vector.broadcast %113 : vector<16x1xf32> to vector<16x128xf32>
    %115 = arith.mulf %104, %114 : vector<16x128xf32>
    %116 = vector.broadcast %97 : vector<1x128xf32> to vector<16x128xf32>
    %117 = arith.mulf %116, %115 : vector<16x128xf32>
    %118 = vector.broadcast %98 : vector<1x128xf32> to vector<16x128xf32>
    %119 = arith.addf %117, %118 : vector<16x128xf32>
    %120 = arith.truncf %119 : vector<16x128xf32> to vector<16x128xbf16>
    %c0_34 = arith.constant 0 : index
    %c0_35 = arith.constant 0 : index
    %121 = vector.load %arg10[%c0_34, %c0_35] : memref<128x2048xbf16, #tpu.memory_space<vmem>>, vector<128x2048xbf16>
    %cst_36 = arith.constant dense<0.000000e+00> : vector<16x2048xf32>
    %122 = tpu.matmul %120, %121, %cst_36 {dimension_numbers = #tpu.dot_dimension_numbers<[1], [0], [0], [1], [0, 0, 1, 1], [], []>} : vector<16x128xbf16>, vector<128x2048xbf16>, vector<16x2048xf32> -> vector<16x2048xf32>
    %c0_37 = arith.constant 0 : index
    %c0_38 = arith.constant 0 : index
    %123 = vector.load %arg11[%c0_37, %c0_38] : memref<1x2048xf32, #tpu.memory_space<vmem>>, vector<1x2048xf32>
    %124 = vector.broadcast %123 : vector<1x2048xf32> to vector<16x2048xf32>
    %125 = arith.addf %122, %124 : vector<16x2048xf32>
    %cst_39 = arith.constant 0.000000e+00 : f32
    %126 = vector.broadcast %cst_39 : f32 to vector<16x2048xf32>
    %127 = arith.maximumf %125, %126 : vector<16x2048xf32>
    %128 = arith.truncf %127 : vector<16x2048xf32> to vector<16x2048xbf16>
    %c0_40 = arith.constant 0 : index
    %c0_41 = arith.constant 0 : index
    %129 = vector.load %arg12[%c0_40, %c0_41] : memref<2048x128xbf16, #tpu.memory_space<vmem>>, vector<2048x128xbf16>
    %cst_42 = arith.constant dense<0.000000e+00> : vector<16x128xf32>
    %130 = tpu.matmul %128, %129, %cst_42 {dimension_numbers = #tpu.dot_dimension_numbers<[1], [0], [0], [1], [0, 0, 1, 1], [], []>} : vector<16x2048xbf16>, vector<2048x128xbf16>, vector<16x128xf32> -> vector<16x128xf32>
    %c0_43 = arith.constant 0 : index
    %c0_44 = arith.constant 0 : index
    %131 = vector.load %arg13[%c0_43, %c0_44] : memref<1x128xf32, #tpu.memory_space<vmem>>, vector<1x128xf32>
    %132 = vector.broadcast %131 : vector<1x128xf32> to vector<16x128xf32>
    %133 = arith.addf %130, %132 : vector<16x128xf32>
    %134 = arith.addf %96, %133 : vector<16x128xf32>
    %135 = vector.shape_cast %134 : vector<16x128xf32> to vector<2x8x128xf32>
    %c0_45 = arith.constant 0 : index
    %c0_46 = arith.constant 0 : index
    %c0_47 = arith.constant 0 : index
    %136 = vector.load %arg14[%c0_45, %c0_46, %c0_47] : memref<2x8x128xf32, #tpu.memory_space<vmem>>, vector<2x8x128xf32>
    tpu.vector_store %arg14[%c0_45, %c0_46, %c0_47], %135 {strides = array<i32>} : memref<2x8x128xf32, #tpu.memory_space<vmem>>, vector<2x8x128xf32>,
    return
  }
  func.func @transform_0(%arg0: i32) -> (i32, i32, i32) {
    %c0_i32 = arith.constant 0 : i32
    %c0_i32_0 = arith.constant 0 : i32
    %c0_i32_1 = arith.constant 0 : i32
    return %arg0, %c0_i32, %c0_i32_0 : i32, i32, i32
  }
  func.func @transform_1(%arg0: i32) -> (i32, i32) {
    %c0_i32 = arith.constant 0 : i32
    %c0_i32_0 = arith.constant 0 : i32
    %c0_i32_1 = arith.constant 0 : i32
    return %c0_i32, %c0_i32_0 : i32, i32
  }
  func.func @transform_2(%arg0: i32) -> (i32, i32) {
    %c0_i32 = arith.constant 0 : i32
    %c0_i32_0 = arith.constant 0 : i32
    %c0_i32_1 = arith.constant 0 : i32
    return %c0_i32, %c0_i32_0 : i32, i32
  }
  func.func @transform_3(%arg0: i32) -> (i32, i32) {
    %c0_i32 = arith.constant 0 : i32
    %c0_i32_0 = arith.constant 0 : i32
    %c0_i32_1 = arith.constant 0 : i32
    return %c0_i32, %c0_i32_0 : i32, i32
  }
  func.func @transform_4(%arg0: i32) -> (i32, i32) {
    %c0_i32 = arith.constant 0 : i32
    %c0_i32_0 = arith.constant 0 : i32
    %c0_i32_1 = arith.constant 0 : i32
    return %c0_i32, %c0_i32_0 : i32, i32
  }
  func.func @transform_5(%arg0: i32) -> (i32, i32) {
    %c0_i32 = arith.constant 0 : i32
    %c0_i32_0 = arith.constant 0 : i32
    %c0_i32_1 = arith.constant 0 : i32
    return %c0_i32, %c0_i32_0 : i32, i32
  }
  func.func @transform_6(%arg0: i32) -> (i32, i32) {
    %c0_i32 = arith.constant 0 : i32
    %c0_i32_0 = arith.constant 0 : i32
    %c0_i32_1 = arith.constant 0 : i32
    return %c0_i32, %c0_i32_0 : i32, i32
  }
  func.func @transform_7(%arg0: i32) -> (i32, i32) {
    %c0_i32 = arith.constant 0 : i32
    %c0_i32_0 = arith.constant 0 : i32
    %c0_i32_1 = arith.constant 0 : i32
    return %c0_i32, %c0_i32_0 : i32, i32
  }
  func.func @transform_8(%arg0: i32) -> (i32, i32) {
    %c0_i32 = arith.constant 0 : i32
    %c0_i32_0 = arith.constant 0 : i32
    %c0_i32_1 = arith.constant 0 : i32
    return %c0_i32, %c0_i32_0 : i32, i32
  }
  func.func @transform_9(%arg0: i32) -> (i32, i32) {
    %c0_i32 = arith.constant 0 : i32
    %c0_i32_0 = arith.constant 0 : i32
    %c0_i32_1 = arith.constant 0 : i32
    return %c0_i32, %c0_i32_0 : i32, i32
  }
  func.func @transform_10(%arg0: i32) -> (i32, i32) {
    %c0_i32 = arith.constant 0 : i32
    %c0_i32_0 = arith.constant 0 : i32
    %c0_i32_1 = arith.constant 0 : i32
    return %c0_i32, %c0_i32_0 : i32, i32
  }
  func.func @transform_11(%arg0: i32) -> (i32, i32) {
    %c0_i32 = arith.constant 0 : i32
    %c0_i32_0 = arith.constant 0 : i32
    %c0_i32_1 = arith.constant 0 : i32
    return %c0_i32, %c0_i32_0 : i32, i32
  }
  func.func @transform_12(%arg0: i32) -> (i32, i32) {
    %c0_i32 = arith.constant 0 : i32
    %c0_i32_0 = arith.constant 0 : i32
    %c0_i32_1 = arith.constant 0 : i32
    return %c0_i32, %c0_i32_0 : i32, i32
  }
  func.func @transform_13(%arg0: i32) -> (i32, i32, i32) {
    %c0_i32 = arith.constant 0 : i32
    %c0_i32_0 = arith.constant 0 : i32
    %c0_i32_1 = arith.constant 0 : i32
    return %arg0, %c0_i32, %c0_i32_0 : i32, i32, i32
  }
}

</mosaic_0001>

<llo_original>
// kernel: tpu_custom_call.1
$region0: #{tpu_custom_call.1}
  #allocation0 [shape = 'u32[]', space=smem, size = 0x4, offset = 0x4, fixed_abs, tag = 'smem constant byte address 0x4 - core index']
  #allocation1 [shape = 'u32[144,128]{1,0:T(1,128)}', space=vmem, size = 0x12000, scoped, tag = 'internal scratch']
  %s0 = inlined_call_operand.hbm [shape: f32[2,8,128], index: 0, kind: input, shape index: {}]
  %s1 = inlined_call_operand.vmem [shape: f32[1,128], index: 1, kind: input, shape index: {}]
  %s2 = inlined_call_operand.vmem [shape: f32[1,128], index: 2, kind: input, shape index: {}]
  %s3 = inlined_call_operand.hbm [shape: bf16[128,384], index: 3, kind: input, shape index: {}]
  %s4 = inlined_call_operand.hbm [shape: f32[1,384], index: 4, kind: input, shape index: {}]
  %s5 = inlined_call_operand.hbm [shape: bf16[128,128], index: 5, kind: input, shape index: {}]
  %s6 = inlined_call_operand.hbm [shape: f32[1,128], index: 6, kind: input, shape index: {}]
  %s7 = inlined_call_operand.hbm [shape: f32[1,128], index: 7, kind: input, shape index: {}]
  %s8 = inlined_call_operand.hbm [shape: f32[1,128], index: 8, kind: input, shape index: {}]
  %s9 = inlined_call_operand.hbm [shape: bf16[128,2048], index: 9, kind: input, shape index: {}]
  %s10 = inlined_call_operand.vmem [shape: f32[1,2048], index: 10, kind: input, shape index: {}]
  %s11 = inlined_call_operand.hbm [shape: bf16[2048,128], index: 11, kind: input, shape index: {}]
  %s12 = inlined_call_operand.vmem [shape: f32[1,128], index: 12, kind: input, shape index: {}]
  %s13 = inlined_call_operand.hbm [shape: f32[2,8,128], index: 13, kind: output, shape index: {}]
  %s14 = sld [smem:[#allocation0]]
  $region98: #{tpu_custom_call.1} parent=0
    _
  %s16 = ssub.s32 1, %s14
  %s17 = scalar_select 0, %s16, %s14
  $region1: #{tpu_custom_call.1} parent=0
    #allocation2 [shape = 'u8[8192]{0}', space=vmem, size = 0x2000, scoped, tag = 'input window, operand 0, single buffered']
    #allocation3 [shape = 's32[1]{0}', space=sflag, size = 0x4, scoped, tag = 'scoped memory for tpu_custom_call.1']
    #allocation4 [shape = 's32[1]{0}', space=sflag, size = 0x4, scoped, tag = 'scoped memory for tpu_custom_call.1']
    #allocation5 [shape = 'u8[98304]{0}', space=vmem, size = 0x18000, scoped, tag = 'input window, operand 3, single buffered']
    #allocation6 [shape = 's32[1]{0}', space=sflag, size = 0x4, scoped, tag = 'scoped memory for tpu_custom_call.1']
    #allocation7 [shape = 'u8[1536]{0}', space=vmem, size = 0x800, scoped, tag = 'input window, operand 4, single buffered']
    #allocation8 [shape = 'u8[32768]{0}', space=vmem, size = 0x8000, scoped, tag = 'input window, operand 5, single buffered']
    #allocation9 [shape = 's32[1]{0}', space=sflag, size = 0x4, scoped, tag = 'scoped memory for tpu_custom_call.1']
    #allocation10 [shape = 'u8[512]{0}', space=vmem, size = 0x400, scoped, tag = 'input window, operand 6, single buffered']
    #allocation11 [shape = 'u8[512]{0}', space=vmem, size = 0x400, scoped, tag = 'input window, operand 7, single buffered']
    #allocation12 [shape = 's32[1]{0}', space=sflag, size = 0x4, scoped, tag = 'scoped memory for tpu_custom_call.1']
    #allocation13 [shape = 'u8[512]{0}', space=vmem, size = 0x400, scoped, tag = 'input window, operand 8, single buffered']
    #allocation14 [shape = 'u8[524288]{0}', space=vmem, size = 0x80000, scoped, tag = 'input window, operand 9, single buffered']
    #allocation15 [shape = 's32[1]{0}', space=sflag, size = 0x4, scoped, tag = 'scoped memory for tpu_custom_call.1']
    #allocation16 [shape = 'u8[524288]{0}', space=vmem, size = 0x80000, scoped, tag = 'input window, operand 11, single buffered']
    #allocation17 [shape = 'u8[8192]{0}', space=vmem, size = 0x2000, scoped, tag = 'output window, operand 0, single buffered']
    %18 = vsyncpa [#allocation3], 0
    %19 = vsyncpa [#allocation6], 0
    %20 = vsyncpa [#allocation9], 0
    %21 = vsyncpa [#allocation12], 0
    %22 = vsyncpa [#allocation15], 0
    %23 = vsyncpa [#allocation4], 0
    // Predicated region
    $region2: #{tpu_custom_call.1} parent=1 // pred_check
      _
    $region3: #{tpu_custom_call.1} parent=1 // pred_check_branch
      %25 = sbr.rel (0) target = $region5
    $region4: #{tpu_custom_call.1} parent=1 // pred_region
      %s27 = ssub.s32 256, 256
      %28 = vsyncadd [#allocation3], %s27
      %s29 = sshll.u32 [#allocation2], 4
      %s30 = int_to_ptr.vmem [resolvable:$true] %s29
      %35 = dma.hbm_to_vmem [thread:$0]  %s0, 256, %s30, [#allocation3], 128, 128, 8
    $region5: #{tpu_custom_call.1} parent=1 // pred_fallthru
      _
    // Predicated region
    $region6: #{tpu_custom_call.1} parent=1 // pred_check
      _
    $region7: #{tpu_custom_call.1} parent=1 // pred_check_branch
      %37 = sbr.rel (0) target = $region9
    $region8: #{tpu_custom_call.1} parent=1 // pred_region
      _
    $region9: #{tpu_custom_call.1} parent=1 // pred_fallthru
      _
    // Predicated region
    $region10: #{tpu_custom_call.1} parent=1 // pred_check
      _
    $region11: #{tpu_custom_call.1} parent=1 // pred_check_branch
      %39 = sbr.rel (0) target = $region13
    $region12: #{tpu_custom_call.1} parent=1 // pred_region
      _
    $region13: #{tpu_custom_call.1} parent=1 // pred_fallthru
      _
    // Predicated region
    $region14: #{tpu_custom_call.1} parent=1 // pred_check
      _
    $region15: #{tpu_custom_call.1} parent=1 // pred_check_branch
      %41 = sbr.rel (0) target = $region17
    $region16: #{tpu_custom_call.1} parent=1 // pred_region
      %s43 = ssub.s32 3072, 3072
      %44 = vsyncadd [#allocation6], %s43
      %s45 = sshll.u32 [#allocation5], 4
      %s46 = int_to_ptr.vmem [resolvable:$true] %s45
      %51 = dma.hbm_to_vmem [thread:$0]  %s3, 3072, %s46, [#allocation6], 192, 192, 12
    $region17: #{tpu_custom_call.1} parent=1 // pred_fallthru
      _
    // Predicated region
    $region18: #{tpu_custom_call.1} parent=1 // pred_check
      _
    $region19: #{tpu_custom_call.1} parent=1 // pred_check_branch
      %53 = sbr.rel (0) target = $region21
    $region20: #{tpu_custom_call.1} parent=1 // pred_region
      %s55 = ssub.s32 48, 48
      %56 = vsyncadd [#allocation6], %s55
      %s58 = sshll.u32 [#allocation7], 4
      %s59 = int_to_ptr.vmem [resolvable:$true] %s58
      %61 = dma.hbm_to_vmem [thread:$0]  %s4, 48, %s59, [#allocation6]
    $region21: #{tpu_custom_call.1} parent=1 // pred_fallthru
      _
    // Predicated region
    $region22: #{tpu_custom_call.1} parent=1 // pred_check
      _
    $region23: #{tpu_custom_call.1} parent=1 // pred_check_branch
      %63 = sbr.rel (0) target = $region25
    $region24: #{tpu_custom_call.1} parent=1 // pred_region
      %s65 = ssub.s32 1024, 1024
      %66 = vsyncadd [#allocation9], %s65
      %s67 = sshll.u32 [#allocation8], 4
      %s68 = int_to_ptr.vmem [resolvable:$true] %s67
      %73 = dma.hbm_to_vmem [thread:$0]  %s5, 1024, %s68, [#allocation9], 64, 64, 4
    $region25: #{tpu_custom_call.1} parent=1 // pred_fallthru
      _
    // Predicated region
    $region26: #{tpu_custom_call.1} parent=1 // pred_check
      _
    $region27: #{tpu_custom_call.1} parent=1 // pred_check_branch
      %75 = sbr.rel (0) target = $region29
    $region28: #{tpu_custom_call.1} parent=1 // pred_region
      %s77 = ssub.s32 16, 16
      %78 = vsyncadd [#allocation9], %s77
      %s80 = sshll.u32 [#allocation10], 4
      %s81 = int_to_ptr.vmem [resolvable:$true] %s80
      %83 = dma.hbm_to_vmem [thread:$0]  %s6, 16, %s81, [#allocation9]
    $region29: #{tpu_custom_call.1} parent=1 // pred_fallthru
      _
    // Predicated region
    $region30: #{tpu_custom_call.1} parent=1 // pred_check
      _
    $region31: #{tpu_custom_call.1} parent=1 // pred_check_branch
      %85 = sbr.rel (0) target = $region33
    $region32: #{tpu_custom_call.1} parent=1 // pred_region
      %s87 = ssub.s32 16, 16
      %88 = vsyncadd [#allocation12], %s87
      %s90 = sshll.u32 [#allocation11], 4
      %s91 = int_to_ptr.vmem [resolvable:$true] %s90
      %93 = dma.hbm_to_vmem [thread:$0]  %s7, 16, %s91, [#allocation12]
    $region33: #{tpu_custom_call.1} parent=1 // pred_fallthru
      _
    // Predicated region
    $region34: #{tpu_custom_call.1} parent=1 // pred_check
      _
    $region35: #{tpu_custom_call.1} parent=1 // pred_check_branch
      %95 = sbr.rel (0) target = $region37
    $region36: #{tpu_custom_call.1} parent=1 // pred_region
      %s97 = ssub.s32 16, 16
      %98 = vsyncadd [#allocation12], %s97
      %s100 = sshll.u32 [#allocation13], 4
      %s101 = int_to_ptr.vmem [resolvable:$true] %s100
      %103 = dma.hbm_to_vmem [thread:$0]  %s8, 16, %s101, [#allocation12]
    $region37: #{tpu_custom_call.1} parent=1 // pred_fallthru
      _
    // Predicated region
    $region38: #{tpu_custom_call.1} parent=1 // pred_check
      _
    $region39: #{tpu_custom_call.1} parent=1 // pred_check_branch
      %105 = sbr.rel (0) target = $region41
    $region40: #{tpu_custom_call.1} parent=1 // pred_region
      %s107 = ssub.s32 16384, 16384
      %108 = vsyncadd [#allocation15], %s107
      %s109 = sshll.u32 [#allocation14], 4
      %s110 = int_to_ptr.vmem [resolvable:$true] %s109
      %115 = dma.hbm_to_vmem [thread:$0]  %s9, 16384, %s110, [#allocation15], 1024, 1024, 64
    $region41: #{tpu_custom_call.1} parent=1 // pred_fallthru
      _
    // Predicated region
    $region42: #{tpu_custom_call.1} parent=1 // pred_check
      _
    $region43: #{tpu_custom_call.1} parent=1 // pred_check_branch
      %117 = sbr.rel (0) target = $region45
    $region44: #{tpu_custom_call.1} parent=1 // pred_region
      _
    $region45: #{tpu_custom_call.1} parent=1 // pred_fallthru
      _
    // Predicated region
    $region46: #{tpu_custom_call.1} parent=1 // pred_check
      _
    $region47: #{tpu_custom_call.1} parent=1 // pred_check_branch
      %119 = sbr.rel (0) target = $region49
    $region48: #{tpu_custom_call.1} parent=1 // pred_region
      %s121 = ssub.s32 16384, 16384
      %122 = vsyncadd [#allocation15], %s121
      %s123 = sshll.u32 [#allocation16], 4
      %s124 = int_to_ptr.vmem [resolvable:$true] %s123
      %129 = dma.hbm_to_vmem [thread:$0]  %s11, 16384, %s124, [#allocation15], 64, 64, 4
    $region49: #{tpu_custom_call.1} parent=1 // pred_fallthru
      _
    // Predicated region
    $region50: #{tpu_custom_call.1} parent=1 // pred_check
      _
    $region51: #{tpu_custom_call.1} parent=1 // pred_check_branch
      %131 = sbr.rel (0) target = $region53
    $region52: #{tpu_custom_call.1} parent=1 // pred_region
      _
    $region53: #{tpu_custom_call.1} parent=1 // pred_fallthru
      _
    // Predicated region
    $region54: #{tpu_custom_call.1} parent=1 // pred_check
      _
    $region55: #{tpu_custom_call.1} parent=1 // pred_check_branch
      %133 = sbr.rel (0) target = $region57
    $region56: #{tpu_custom_call.1} parent=1 // pred_region
      %134 = dma.done [#allocation3], 256
    $region57: #{tpu_custom_call.1} parent=1 // pred_fallthru
      _
    // Predicated region
    $region58: #{tpu_custom_call.1} parent=1 // pred_check
      _
    $region59: #{tpu_custom_call.1} parent=1 // pred_check_branch
      %136 = sbr.rel (0) target = $region61
    $region60: #{tpu_custom_call.1} parent=1 // pred_region
      %137 = dma.done [#allocation6], 3072
    $region61: #{tpu_custom_call.1} parent=1 // pred_fallthru
      _
    // Predicated region
    $region62: #{tpu_custom_call.1} parent=1 // pred_check
      _
    $region63: #{tpu_custom_call.1} parent=1 // pred_check_branch
      %139 = sbr.rel (0) target = $region65
    $region64: #{tpu_custom_call.1} parent=1 // pred_region
      %140 = dma.done [#allocation6], 48
    $region65: #{tpu_custom_call.1} parent=1 // pred_fallthru
      _
    // Predicated region
    $region66: #{tpu_custom_call.1} parent=1 // pred_check
      _
    $region67: #{tpu_custom_call.1} parent=1 // pred_check_branch
      %142 = sbr.rel (0) target = $region69
    $region68: #{tpu_custom_call.1} parent=1 // pred_region
      %143 = dma.done [#allocation9], 1024
    $region69: #{tpu_custom_call.1} parent=1 // pred_fallthru
      _
    // Predicated region
    $region70: #{tpu_custom_call.1} parent=1 // pred_check
      _
    $region71: #{tpu_custom_call.1} parent=1 // pred_check_branch
      %145 = sbr.rel (0) target = $region73
    $region72: #{tpu_custom_call.1} parent=1 // pred_region
      %146 = dma.done [#allocation9], 16
    $region73: #{tpu_custom_call.1} parent=1 // pred_fallthru
      _
    // Predicated region
    $region74: #{tpu_custom_call.1} parent=1 // pred_check
      _
    $region75: #{tpu_custom_call.1} parent=1 // pred_check_branch
      %148 = sbr.rel (0) target = $region77
    $region76: #{tpu_custom_call.1} parent=1 // pred_region
      %149 = dma.done [#allocation12], 16
    $region77: #{tpu_custom_call.1} parent=1 // pred_fallthru
      _
    // Predicated region
    $region78: #{tpu_custom_call.1} parent=1 // pred_check
      _
    $region79: #{tpu_custom_call.1} parent=1 // pred_check_branch
      %151 = sbr.rel (0) target = $region81
    $region80: #{tpu_custom_call.1} parent=1 // pred_region
      %152 = dma.done [#allocation12], 16
    $region81: #{tpu_custom_call.1} parent=1 // pred_fallthru
      _
    // Predicated region
    $region82: #{tpu_custom_call.1} parent=1 // pred_check
      _
    $region83: #{tpu_custom_call.1} parent=1 // pred_check_branch
      %154 = sbr.rel (0) target = $region85
    $region84: #{tpu_custom_call.1} parent=1 // pred_region
      %155 = dma.done [#allocation15], 16384
    $region85: #{tpu_custom_call.1} parent=1 // pred_fallthru
      _
    // Predicated region
    $region86: #{tpu_custom_call.1} parent=1 // pred_check
      _
    $region87: #{tpu_custom_call.1} parent=1 // pred_check_branch
      %157 = sbr.rel (0) target = $region89
    $region88: #{tpu_custom_call.1} parent=1 // pred_region
      %158 = dma.done [#allocation15], 16384
    $region89: #{tpu_custom_call.1} parent=1 // pred_fallthru
      _
    %v160 = vld [vmem:[#allocation2] sm:$0xff]
    %v161 = vld [vmem:[#allocation2 + $0x8] sm:$0xff]
    %v162 = vld [vmem:[%s1] sm:$0x1]
    %v163 = vld [vmem:[%s2] sm:$0x1]
    %164 = vadd.xlane.f32.xlu0 %v160
    %v165 = vpop.xlane.xlu0 %164
    %166 = vadd.xlane.f32.xlu0 %v161
    %v167 = vpop.xlane.xlu0 %166
    %v168 = vmul.f32 %v165, 0.0078125
    %v169 = vmul.f32 %v167, 0.0078125
    %v170 = vsub.f32 %v160, %v168
    %v171 = vsub.f32 %v161, %v169
    %v172 = vmul.f32 %v170, %v170
    %v173 = vmul.f32 %v171, %v171
    %174 = vadd.xlane.f32.xlu0 %v172
    %v175 = vpop.xlane.xlu0 %174
    %176 = vadd.xlane.f32.xlu0 %v173
    %v177 = vpop.xlane.xlu0 %176
    %v178 = vmul.f32 %v175, 0.007874016
    %v179 = vmul.f32 %v177, 0.007874016
    %v180 = vrsqrt.pop %v178
    %v181 = vmul.f32 %v178, %v180
    %vm182 = vcmp.eq.f32.partialorder %v178, inf
    %v183 = vsel %vm182, %v178, %v181
    %vm184 = vcmp.eq.f32.partialorder %v178, 0.0
    %v185 = vand.u32 %v178, 2147483648
    %v186 = vsel %vm184, %v185, %v183
    %v187 = vrsqrt.pop %v179
    %v188 = vmul.f32 %v179, %v187
    %vm189 = vcmp.eq.f32.partialorder %v179, inf
    %v190 = vsel %vm189, %v179, %v188
    %vm191 = vcmp.eq.f32.partialorder %v179, 0.0
    %v192 = vand.u32 %v179, 2147483648
    %v193 = vsel %vm191, %v192, %v190
    %v194 = vadd.f32 %v186, 1e-06
    %v195 = vadd.f32 %v193, 1e-06
    %v196 = vrcp.pop %v194
    %v197 = vrcp.pop %v195
    %v198 = vmul.f32 %v170, %v196
    %v199 = vmul.f32 %v171, %v197
    %v201 = vlaneseq
    %v202 = vshrl.u32 %v201, 7
    %v203 = vsub.s32 0, %v202
    %v204 = vrot.slane %v162, %v203
    %v206 = vmul.f32 %v204, %v198
    %v207 = vmul.f32 %v204, %v199
    %v209 = vlaneseq
    %v210 = vshrl.u32 %v209, 7
    %v211 = vsub.s32 0, %v210
    %v212 = vrot.slane %v163, %v211
    %v214 = vadd.f32 %v206, %v212
    %v215 = vadd.f32 %v207, %v212
    %v216 = vpack.c.bf16 %v215, %v214
    %v217 = vld [vmem:[#allocation5] sm:$0xff]
    %v218 = vld [vmem:[#allocation5 + $0x8] sm:$0xf]
    %v219 = vld [vmem:[#allocation5 + $0xc] sm:$0xff]
    %v220 = vld [vmem:[#allocation5 + $0x14] sm:$0xf]
    %v221 = vld [vmem:[#allocation5 + $0x18] sm:$0xff]
    %v222 = vld [vmem:[#allocation5 + $0x20] sm:$0xf]
    %v223 = vld [vmem:[#allocation5 + $0x24] sm:$0xff]
    %v224 = vld [vmem:[#allocation5 + $0x2c] sm:$0xf]
    %v225 = vld [vmem:[#allocation5 + $0x30] sm:$0xff]
    %v226 = vld [vmem:[#allocation5 + $0x38] sm:$0xf]
    %v227 = vld [vmem:[#allocation5 + $0x3c] sm:$0xff]
    %v228 = vld [vmem:[#allocation5 + $0x44] sm:$0xf]
    %v229 = vld [vmem:[#allocation5 + $0x48] sm:$0xff]
    %v230 = vld [vmem:[#allocation5 + $0x50] sm:$0xf]
    %v231 = vld [vmem:[#allocation5 + $0x54] sm:$0xff]
    %v232 = vld [vmem:[#allocation5 + $0x5c] sm:$0xf]
    %v233 = vld [vmem:[#allocation5 + $0x60] sm:$0xff]
    %v234 = vld [vmem:[#allocation5 + $0x68] sm:$0xf]
    %v235 = vld [vmem:[#allocation5 + $0x6c] sm:$0xff]
    %v236 = vld [vmem:[#allocation5 + $0x74] sm:$0xf]
    %v237 = vld [vmem:[#allocation5 + $0x78] sm:$0xff]
    %v238 = vld [vmem:[#allocation5 + $0x80] sm:$0xf]
    %v239 = vld [vmem:[#allocation5 + $0x84] sm:$0xff]
    %v240 = vld [vmem:[#allocation5 + $0x8c] sm:$0xf]
    %v241 = vld [vmem:[#allocation5 + $0x90] sm:$0xff]
    %v242 = vld [vmem:[#allocation5 + $0x98] sm:$0xf]
    %v243 = vld [vmem:[#allocation5 + $0x9c] sm:$0xff]
    %v244 = vld [vmem:[#allocation5 + $0xa4] sm:$0xf]
    %v245 = vld [vmem:[#allocation5 + $0xa8] sm:$0xff]
    %v246 = vld [vmem:[#allocation5 + $0xb0] sm:$0xf]
    %v247 = vld [vmem:[#allocation5 + $0xb4] sm:$0xff]
    %v248 = vld [vmem:[#allocation5 + $0xbc] sm:$0xf]
    %v249 = vld [vmem:[#allocation7] sm:$0x7]
    %v251 = vlaneseq
    %v252 = vshrl.u32 %v251, 7
    %v253 = vsub.s32 0, %v252
    %v254 = vrot.slane %v249, %v253
    %v255 = vlaneseq
    %v256 = vshrl.u32 %v255, 7
    %v257 = vsub.s32 1, %v256
    %v258 = vrot.slane %v249, %v257
    %v259 = vlaneseq
    %v260 = vshrl.u32 %v259, 7
    %v261 = vsub.s32 2, %v260
    %v262 = vrot.slane %v249, %v261
    %v298 = vunpack.c.l.b16 %v217
    %v299 = vunpack.c.h.b16 %v217
    %v300 = vunpack.c.l.b16 %v218
    %v301 = vunpack.c.l.b16 %v219
    %v302 = vunpack.c.h.b16 %v219
    %v303 = vunpack.c.l.b16 %v220
    %v304 = vunpack.c.l.b16 %v221
    %v305 = vunpack.c.h.b16 %v221
    %v306 = vunpack.c.l.b16 %v222
    %v307 = vunpack.c.l.b16 %v223
    %v308 = vunpack.c.h.b16 %v223
    %v309 = vunpack.c.l.b16 %v224
    %v310 = vunpack.c.l.b16 %v225
    %v311 = vunpack.c.h.b16 %v225
    %v312 = vunpack.c.l.b16 %v226
    %v313 = vunpack.c.l.b16 %v227
    %v314 = vunpack.c.h.b16 %v227
    %v315 = vunpack.c.l.b16 %v228
    %v316 = vunpack.c.l.b16 %v229
    %v317 = vunpack.c.h.b16 %v229
    %v318 = vunpack.c.l.b16 %v230
    %v319 = vunpack.c.l.b16 %v231
    %v320 = vunpack.c.h.b16 %v231
    %v321 = vunpack.c.l.b16 %v232
    %v322 = vunpack.c.l.b16 %v233
    %v323 = vunpack.c.h.b16 %v233
    %v324 = vunpack.c.l.b16 %v234
    %v325 = vunpack.c.l.b16 %v235
    %v326 = vunpack.c.h.b16 %v235
    %v327 = vunpack.c.l.b16 %v236
    %v328 = vunpack.c.l.b16 %v237
    %v329 = vunpack.c.h.b16 %v237
    %v330 = vunpack.c.l.b16 %v238
    %v331 = vunpack.c.l.b16 %v239
    %v332 = vunpack.c.h.b16 %v239
    %v333 = vunpack.c.l.b16 %v240
    %v334 = vunpack.c.l.b16 %v241
    %v335 = vunpack.c.h.b16 %v241
    %v336 = vunpack.c.l.b16 %v242
    %v337 = vunpack.c.l.b16 %v243
    %v338 = vunpack.c.h.b16 %v243
    %v339 = vunpack.c.l.b16 %v244
    %v340 = vunpack.c.l.b16 %v245
    %v341 = vunpack.c.h.b16 %v245
    %v342 = vunpack.c.l.b16 %v246
    %v343 = vunpack.c.l.b16 %v247
    %v344 = vunpack.c.h.b16 %v247
    %v345 = vunpack.c.l.b16 %v248
    %v346 = vpack.c.b16 %v301, %v298
    %v347 = vpack.c.b16 %v302, %v299
    %v348 = vpack.c.b16 %v303, %v300
    %v349 = vpack.c.b16 %v307, %v304
    %v350 = vpack.c.b16 %v308, %v305
    %v351 = vpack.c.b16 %v309, %v306
    %v352 = vpack.c.b16 %v313, %v310
    %v353 = vpack.c.b16 %v314, %v311
    %v354 = vpack.c.b16 %v315, %v312
    %v355 = vpack.c.b16 %v319, %v316
    %v356 = vpack.c.b16 %v320, %v317
    %v357 = vpack.c.b16 %v321, %v318
    %v358 = vpack.c.b16 %v325, %v322
    %v359 = vpack.c.b16 %v326, %v323
    %v360 = vpack.c.b16 %v327, %v324
    %v361 = vpack.c.b16 %v331, %v328
    %v362 = vpack.c.b16 %v332, %v329
    %v363 = vpack.c.b16 %v333, %v330
    %v364 = vpack.c.b16 %v337, %v334
    %v365 = vpack.c.b16 %v338, %v335
    %v366 = vpack.c.b16 %v339, %v336
    %v367 = vpack.c.b16 %v343, %v340
    %v368 = vpack.c.b16 %v344, %v341
    %v369 = vpack.c.b16 %v345, %v342
    %394 = vmatprep.subr.bf16.mxu0 %v368
    %395 = vmatpush1.bf16.msra.mxu0 %v367
    %396 = vmatprep.subr.bf16.mxu0 %v365
    %397 = vmatpush1.bf16.msra.mxu0 %v364
    %398 = vmatprep.subr.bf16.mxu0 %v362
    %399 = vmatpush1.bf16.msra.mxu0 %v361
    %400 = vmatprep.subr.bf16.mxu0 %v359
    %401 = vmatpush1.bf16.msra.mxu0 %v358
    %402 = vmatprep.subr.bf16.mxu0 %v356
    %403 = vmatpush1.bf16.msra.mxu0 %v355
    %404 = vmatprep.subr.bf16.mxu0 %v353
    %405 = vmatpush1.bf16.msra.mxu0 %v352
    %406 = vmatprep.subr.bf16.mxu0 %v350
    %407 = vmatpush1.bf16.msra.mxu0 %v349
    %408 = vmatprep.subr.bf16.mxu0 %v347
    %409 = vmatpush1.bf16.msra.mxu0 %v346
    %410 = vmatprep.subr.bf16.mxu0 0
    %411 = vmatpush2.bf16.msra.mxu0 0
    %412 = vmatprep.subr.bf16.mxu0 0
    %413 = vmatpush2.bf16.msra.mxu0 0
    %414 = vmatprep.subr.bf16.mxu0 0
    %415 = vmatpush2.bf16.msra.mxu0 0
    %416 = vmatprep.subr.bf16.mxu0 0
    %417 = vmatpush2.bf16.msra.mxu0 0
    %418 = vmatprep.subr.bf16.mxu0 0
    %419 = vmatpush2.bf16.msra.mxu0 0
    %420 = vmatprep.subr.bf16.mxu0 0
    %421 = vmatpush2.bf16.msra.mxu0 0
    %422 = vmatprep.subr.bf16.mxu0 0
    %423 = vmatpush2.bf16.msra.mxu0 0
    %424 = vmatprep.subr.bf16.mxu0 0
    %425 = vmatpush2.bf16.msra.mxu0 0
    %426 = vmatprep.mubr.bf16.mxu0 0
    %427 = vmatmul.mubr.bf16.gmra.mxu0 %v216
    %v428 = vpop.f32.mrf.mxu0
    %v429 = vadd.f32 %v254, %v428
    %v430 = vpop.f32.mrf.mxu0
    %v431 = vadd.f32 %v258, %v430
    %v432 = vpop.f32.mrf.mxu0
    %v433 = vadd.f32 %v254, %v432
    %v434 = vpop.f32.mrf.mxu0
    %v435 = vadd.f32 %v258, %v434
    %436 = vdwg.mxu0
    %437 = vmatprep.subr.bf16.mxu0 0
    %438 = vmatpush1.bf16.msra.mxu0 %v369
    %439 = vmatprep.subr.bf16.mxu0 0
    %440 = vmatpush1.bf16.msra.mxu0 %v366
    %441 = vmatprep.subr.bf16.mxu0 0
    %442 = vmatpush1.bf16.msra.mxu0 %v363
    %443 = vmatprep.subr.bf16.mxu0 0
    %444 = vmatpush1.bf16.msra.mxu0 %v360
    %445 = vmatprep.subr.bf16.mxu0 0
    %446 = vmatpush1.bf16.msra.mxu0 %v357
    %447 = vmatprep.subr.bf16.mxu0 0
    %448 = vmatpush1.bf16.msra.mxu0 %v354
    %449 = vmatprep.subr.bf16.mxu0 0
    %450 = vmatpush1.bf16.msra.mxu0 %v351
    %451 = vmatprep.subr.bf16.mxu0 0
    %452 = vmatpush1.bf16.msra.mxu0 %v348
    %453 = vmatprep.subr.bf16.mxu0 0
    %454 = vmatpush2.bf16.msra.mxu0 0
    %455 = vmatprep.subr.bf16.mxu0 0
    %456 = vmatpush2.bf16.msra.mxu0 0
    %457 = vmatprep.subr.bf16.mxu0 0
    %458 = vmatpush2.bf16.msra.mxu0 0
    %459 = vmatprep.subr.bf16.mxu0 0
    %460 = vmatpush2.bf16.msra.mxu0 0
    %461 = vmatprep.subr.bf16.mxu0 0
    %462 = vmatpush2.bf16.msra.mxu0 0
    %463 = vmatprep.subr.bf16.mxu0 0
    %464 = vmatpush2.bf16.msra.mxu0 0
    %465 = vmatprep.subr.bf16.mxu0 0
    %466 = vmatpush2.bf16.msra.mxu0 0
    %467 = vmatprep.subr.bf16.mxu0 0
    %468 = vmatpush2.bf16.msra.mxu0 0
    %469 = vmatprep.mubr.bf16.mxu0 0
    %470 = vmatmul.mubr.bf16.gmra.mxu0 %v216
    %v471 = vpop.f32.mrf.mxu0
    %v472 = vadd.f32 %v262, %v471
    %v473 = vpop.f32.mrf.mxu0
    %v474 = vpop.f32.mrf.mxu0
    %v475 = vadd.f32 %v262, %v474
    %v476 = vpop.f32.mrf.mxu0
    %477 = vdwg.mxu0
    %480 = vrot.lane.b32.xlu0 %v429, 96
    %v481 = vpop.permute.xlu0 %480
    %482 = vrot.lane.b32.xlu0 %v433, 96
    %v483 = vpop.permute.xlu0 %482
    %486 = vrot.lane.b32.xlu0 %v429, 64
    %v487 = vpop.permute.xlu0 %486
    %488 = vrot.lane.b32.xlu0 %v433, 64
    %v489 = vpop.permute.xlu0 %488
    %492 = vrot.lane.b32.xlu0 %v429, 32
    %v493 = vpop.permute.xlu0 %492
    %494 = vrot.lane.b32.xlu0 %v433, 32
    %v495 = vpop.permute.xlu0 %494
    %v498 = vpack.c.bf16 %v429, %v429
    %v499 = vpack.c.bf16 %v433, %v433
    %v500 = vpack.c.bf16 %v481, %v481
    %v501 = vpack.c.bf16 %v483, %v483
    %v502 = vpack.c.bf16 %v487, %v487
    %v503 = vpack.c.bf16 %v489, %v489
    %v504 = vpack.c.bf16 %v493, %v493
    %v505 = vpack.c.bf16 %v495, %v495
    %508 = vrot.lane.b32.xlu0 %v431, 96
    %v509 = vpop.permute.xlu0 %508
    %510 = vrot.lane.b32.xlu0 %v435, 96
    %v511 = vpop.permute.xlu0 %510
    %514 = vrot.lane.b32.xlu0 %v431, 64
    %v515 = vpop.permute.xlu0 %514
    %516 = vrot.lane.b32.xlu0 %v435, 64
    %v517 = vpop.permute.xlu0 %516
    %520 = vrot.lane.b32.xlu0 %v431, 32
    %v521 = vpop.permute.xlu0 %520
    %522 = vrot.lane.b32.xlu0 %v435, 32
    %v523 = vpop.permute.xlu0 %522
    %v526 = vpack.c.bf16 %v431, %v431
    %v527 = vpack.c.bf16 %v435, %v435
    %v528 = vpack.c.bf16 %v509, %v509
    %v529 = vpack.c.bf16 %v511, %v511
    %v530 = vpack.c.bf16 %v515, %v515
    %v531 = vpack.c.bf16 %v517, %v517
    %v532 = vpack.c.bf16 %v521, %v521
    %v533 = vpack.c.bf16 %v523, %v523
    %536 = vrot.lane.b32.xlu0 %v472, 96
    %v537 = vpop.permute.xlu0 %536
    %538 = vrot.lane.b32.xlu0 %v475, 96
    %v539 = vpop.permute.xlu0 %538
    %542 = vrot.lane.b32.xlu0 %v472, 64
    %v543 = vpop.permute.xlu0 %542
    %544 = vrot.lane.b32.xlu0 %v475, 64
    %v545 = vpop.permute.xlu0 %544
    %548 = vrot.lane.b32.xlu0 %v472, 32
    %v549 = vpop.permute.xlu0 %548
    %550 = vrot.lane.b32.xlu0 %v475, 32
    %v551 = vpop.permute.xlu0 %550
    %v554 = vpack.c.bf16 %v472, %v472
    %v555 = vpack.c.bf16 %v475, %v475
    %v556 = vpack.c.bf16 %v537, %v537
    %v557 = vpack.c.bf16 %v539, %v539
    %v558 = vpack.c.bf16 %v543, %v543
    %v559 = vpack.c.bf16 %v545, %v545
    %v560 = vpack.c.bf16 %v549, %v549
    %v561 = vpack.c.bf16 %v551, %v551
    %vm562 = vcmask 261120
    %v564 = vsel %vm562, %v498, 0
    %v567 = vsel %vm562, %v526, 0
    %569 = vmatprep.subr.bf16.mxu0 0
    %570 = vmatpush1.bf16.xpose.msra.mxu0 0
    %571 = vmatprep.subr.bf16.mxu0 0
    %572 = vmatpush1.bf16.xpose.msra.mxu0 0
    %573 = vmatprep.subr.bf16.mxu0 0
    %574 = vmatpush1.bf16.xpose.msra.mxu0 0
    %575 = vmatprep.subr.bf16.mxu0 0
    %576 = vmatpush1.bf16.xpose.msra.mxu0 0
    %577 = vmatprep.subr.bf16.mxu0 0
    %578 = vmatpush1.bf16.xpose.msra.mxu0 0
    %579 = vmatprep.subr.bf16.mxu0 0
    %580 = vmatpush1.bf16.xpose.msra.mxu0 0
    %581 = vmatprep.subr.bf16.mxu0 0
    %582 = vmatpush1.bf16.xpose.msra.mxu0 0
    %583 = vmatprep.subr.bf16.mxu0 0
    %584 = vmatpush1.bf16.xpose.msra.mxu0 %v567
    %585 = vmatprep.subr.bf16.mxu0 0
    %586 = vmatpush2.bf16.xpose.msra.mxu0 0
    %587 = vmatprep.subr.bf16.mxu0 0
    %588 = vmatpush2.bf16.xpose.msra.mxu0 0
    %589 = vmatprep.subr.bf16.mxu0 0
    %590 = vmatpush2.bf16.xpose.msra.mxu0 0
    %591 = vmatprep.subr.bf16.mxu0 0
    %592 = vmatpush2.bf16.xpose.msra.mxu0 0
    %593 = vmatprep.subr.bf16.mxu0 0
    %594 = vmatpush2.bf16.xpose.msra.mxu0 0
    %595 = vmatprep.subr.bf16.mxu0 0
    %596 = vmatpush2.bf16.xpose.msra.mxu0 0
    %597 = vmatprep.subr.bf16.mxu0 0
    %598 = vmatpush2.bf16.xpose.msra.mxu0 0
    %599 = vmatprep.subr.bf16.mxu0 0
    %600 = vmatpush2.bf16.xpose.msra.mxu0 0
    %601 = vmatprep.mubr.bf16.mxu0 0
    %602 = vmatmul.mubr.bf16.gmra.mxu0 %v564
    %v603 = vpop.f32.mrf.mxu0
    %v604 = vadd.f32 0.0, %v603
    %v605 = vpop.f32.mrf.mxu0
    %v606 = vpop.f32.mrf.mxu0
    %v607 = vpop.f32.mrf.mxu0
    %608 = vdwg.mxu0
    %v610 = vsel %vm562, %v499, 0
    %v613 = vsel %vm562, %v527, 0
    %615 = vmatprep.subr.bf16.mxu0 0
    %616 = vmatpush1.bf16.xpose.msra.mxu0 0
    %617 = vmatprep.subr.bf16.mxu0 0
    %618 = vmatpush1.bf16.xpose.msra.mxu0 0
    %619 = vmatprep.subr.bf16.mxu0 0
    %620 = vmatpush1.bf16.xpose.msra.mxu0 0
    %621 = vmatprep.subr.bf16.mxu0 0
    %622 = vmatpush1.bf16.xpose.msra.mxu0 0
    %623 = vmatprep.subr.bf16.mxu0 0
    %624 = vmatpush1.bf16.xpose.msra.mxu0 0
    %625 = vmatprep.subr.bf16.mxu0 0
    %626 = vmatpush1.bf16.xpose.msra.mxu0 0
    %627 = vmatprep.subr.bf16.mxu0 0
    %628 = vmatpush1.bf16.xpose.msra.mxu0 0
    %629 = vmatprep.subr.bf16.mxu0 0
    %630 = vmatpush1.bf16.xpose.msra.mxu0 %v613
    %631 = vmatprep.subr.bf16.mxu0 0
    %632 = vmatpush2.bf16.xpose.msra.mxu0 0
    %633 = vmatprep.subr.bf16.mxu0 0
    %634 = vmatpush2.bf16.xpose.msra.mxu0 0
    %635 = vmatprep.subr.bf16.mxu0 0
    %636 = vmatpush2.bf16.xpose.msra.mxu0 0
    %637 = vmatprep.subr.bf16.mxu0 0
    %638 = vmatpush2.bf16.xpose.msra.mxu0 0
    %639 = vmatprep.subr.bf16.mxu0 0
    %640 = vmatpush2.bf16.xpose.msra.mxu0 0
    %641 = vmatprep.subr.bf16.mxu0 0
    %642 = vmatpush2.bf16.xpose.msra.mxu0 0
    %643 = vmatprep.subr.bf16.mxu0 0
    %644 = vmatpush2.bf16.xpose.msra.mxu0 0
    %645 = vmatprep.subr.bf16.mxu0 0
    %646 = vmatpush2.bf16.xpose.msra.mxu0 0
    %647 = vmatprep.mubr.bf16.mxu0 0
    %648 = vmatmul.mubr.bf16.gmra.mxu0 %v610
    %v649 = vpop.f32.mrf.mxu0
    %v650 = vadd.f32 0.0, %v649
    %v651 = vpop.f32.mrf.mxu0
    %v652 = vpop.f32.mrf.mxu0
    %v653 = vpop.f32.mrf.mxu0
    %654 = vdwg.mxu0
    %v656 = vsel %vm562, %v500, 0
    %v659 = vsel %vm562, %v528, 0
    %661 = vmatprep.subr.bf16.mxu0 0
    %662 = vmatpush1.bf16.xpose.msra.mxu0 0
    %663 = vmatprep.subr.bf16.mxu0 0
    %664 = vmatpush1.bf16.xpose.msra.mxu0 0
    %665 = vmatprep.subr.bf16.mxu0 0
    %666 = vmatpush1.bf16.xpose.msra.mxu0 0
    %667 = vmatprep.subr.bf16.mxu0 0
    %668 = vmatpush1.bf16.xpose.msra.mxu0 0
    %669 = vmatprep.subr.bf16.mxu0 0
    %670 = vmatpush1.bf16.xpose.msra.mxu0 0
    %671 = vmatprep.subr.bf16.mxu0 0
    %672 = vmatpush1.bf16.xpose.msra.mxu0 0
    %673 = vmatprep.subr.bf16.mxu0 0
    %674 = vmatpush1.bf16.xpose.msra.mxu0 0
    %675 = vmatprep.subr.bf16.mxu0 0
    %676 = vmatpush1.bf16.xpose.msra.mxu0 %v659
    %677 = vmatprep.subr.bf16.mxu0 0
    %678 = vmatpush2.bf16.xpose.msra.mxu0 0
    %679 = vmatprep.subr.bf16.mxu0 0
    %680 = vmatpush2.bf16.xpose.msra.mxu0 0
    %681 = vmatprep.subr.bf16.mxu0 0
    %682 = vmatpush2.bf16.xpose.msra.mxu0 0
    %683 = vmatprep.subr.bf16.mxu0 0
    %684 = vmatpush2.bf16.xpose.msra.mxu0 0
    %685 = vmatprep.subr.bf16.mxu0 0
    %686 = vmatpush2.bf16.xpose.msra.mxu0 0
    %687 = vmatprep.subr.bf16.mxu0 0
    %688 = vmatpush2.bf16.xpose.msra.mxu0 0
    %689 = vmatprep.subr.bf16.mxu0 0
    %690 = vmatpush2.bf16.xpose.msra.mxu0 0
    %691 = vmatprep.subr.bf16.mxu0 0
    %692 = vmatpush2.bf16.xpose.msra.mxu0 0
    %693 = vmatprep.mubr.bf16.mxu0 0
    %694 = vmatmul.mubr.bf16.gmra.mxu0 %v656
    %v695 = vpop.f32.mrf.mxu0
    %v696 = vadd.f32 0.0, %v695
    %v697 = vpop.f32.mrf.mxu0
    %v698 = vpop.f32.mrf.mxu0
    %v699 = vpop.f32.mrf.mxu0
    %700 = vdwg.mxu0
    %v702 = vsel %vm562, %v501, 0
    %v705 = vsel %vm562, %v529, 0
    %707 = vmatprep.subr.bf16.mxu0 0
    %708 = vmatpush1.bf16.xpose.msra.mxu0 0
    %709 = vmatprep.subr.bf16.mxu0 0
    %710 = vmatpush1.bf16.xpose.msra.mxu0 0
    %711 = vmatprep.subr.bf16.mxu0 0
    %712 = vmatpush1.bf16.xpose.msra.mxu0 0
    %713 = vmatprep.subr.bf16.mxu0 0
    %714 = vmatpush1.bf16.xpose.msra.mxu0 0
    %715 = vmatprep.subr.bf16.mxu0 0
    %716 = vmatpush1.bf16.xpose.msra.mxu0 0
    %717 = vmatprep.subr.bf16.mxu0 0
    %718 = vmatpush1.bf16.xpose.msra.mxu0 0
    %719 = vmatprep.subr.bf16.mxu0 0
    %720 = vmatpush1.bf16.xpose.msra.mxu0 0
    %721 = vmatprep.subr.bf16.mxu0 0
    %722 = vmatpush1.bf16.xpose.msra.mxu0 %v705
    %723 = vmatprep.subr.bf16.mxu0 0
    %724 = vmatpush2.bf16.xpose.msra.mxu0 0
    %725 = vmatprep.subr.bf16.mxu0 0
    %726 = vmatpush2.bf16.xpose.msra.mxu0 0
    %727 = vmatprep.subr.bf16.mxu0 0
    %728 = vmatpush2.bf16.xpose.msra.mxu0 0
    %729 = vmatprep.subr.bf16.mxu0 0
    %730 = vmatpush2.bf16.xpose.msra.mxu0 0
    %731 = vmatprep.subr.bf16.mxu0 0
    %732 = vmatpush2.bf16.xpose.msra.mxu0 0
    %733 = vmatprep.subr.bf16.mxu0 0
    %734 = vmatpush2.bf16.xpose.msra.mxu0 0
    %735 = vmatprep.subr.bf16.mxu0 0
    %736 = vmatpush2.bf16.xpose.msra.mxu0 0
    %737 = vmatprep.subr.bf16.mxu0 0
    %738 = vmatpush2.bf16.xpose.msra.mxu0 0
    %739 = vmatprep.mubr.bf16.mxu0 0
    %740 = vmatmul.mubr.bf16.gmra.mxu0 %v702
    %v741 = vpop.f32.mrf.mxu0
    %v742 = vadd.f32 0.0, %v741
    %v743 = vpop.f32.mrf.mxu0
    %v744 = vpop.f32.mrf.mxu0
    %v745 = vpop.f32.mrf.mxu0
    %746 = vdwg.mxu0
    %v748 = vsel %vm562, %v502, 0
    %v751 = vsel %vm562, %v530, 0
    %753 = vmatprep.subr.bf16.mxu0 0
    %754 = vmatpush1.bf16.xpose.msra.mxu0 0
    %755 = vmatprep.subr.bf16.mxu0 0
    %756 = vmatpush1.bf16.xpose.msra.mxu0 0
    %757 = vmatprep.subr.bf16.mxu0 0
    %758 = vmatpush1.bf16.xpose.msra.mxu0 0
    %759 = vmatprep.subr.bf16.mxu0 0
    %760 = vmatpush1.bf16.xpose.msra.mxu0 0
    %761 = vmatprep.subr.bf16.mxu0 0
    %762 = vmatpush1.bf16.xpose.msra.mxu0 0
    %763 = vmatprep.subr.bf16.mxu0 0
    %764 = vmatpush1.bf16.xpose.msra.mxu0 0
    %765 = vmatprep.subr.bf16.mxu0 0
    %766 = vmatpush1.bf16.xpose.msra.mxu0 0
    %767 = vmatprep.subr.bf16.mxu0 0
    %768 = vmatpush1.bf16.xpose.msra.mxu0 %v751
    %769 = vmatprep.subr.bf16.mxu0 0
    %770 = vmatpush2.bf16.xpose.msra.mxu0 0
    %771 = vmatprep.subr.bf16.mxu0 0
    %772 = vmatpush2.bf16.xpose.msra.mxu0 0
    %773 = vmatprep.subr.bf16.mxu0 0
    %774 = vmatpush2.bf16.xpose.msra.mxu0 0
    %775 = vmatprep.subr.bf16.mxu0 0
    %776 = vmatpush2.bf16.xpose.msra.mxu0 0
    %777 = vmatprep.subr.bf16.mxu0 0
    %778 = vmatpush2.bf16.xpose.msra.mxu0 0
    %779 = vmatprep.subr.bf16.mxu0 0
    %780 = vmatpush2.bf16.xpose.msra.mxu0 0
    %781 = vmatprep.subr.bf16.mxu0 0
    %782 = vmatpush2.bf16.xpose.msra.mxu0 0
    %783 = vmatprep.subr.bf16.mxu0 0
    %784 = vmatpush2.bf16.xpose.msra.mxu0 0
    %785 = vmatprep.mubr.bf16.mxu0 0
    %786 = vmatmul.mubr.bf16.gmra.mxu0 %v748
    %v787 = vpop.f32.mrf.mxu0
    %v788 = vadd.f32 0.0, %v787
    %v789 = vpop.f32.mrf.mxu0
    %v790 = vpop.f32.mrf.mxu0
    %v791 = vpop.f32.mrf.mxu0
    %792 = vdwg.mxu0
    %v794 = vsel %vm562, %v503, 0
    %v797 = vsel %vm562, %v531, 0
    %799 = vmatprep.subr.bf16.mxu0 0
    %800 = vmatpush1.bf16.xpose.msra.mxu0 0
    %801 = vmatprep.subr.bf16.mxu0 0
    %802 = vmatpush1.bf16.xpose.msra.mxu0 0
    %803 = vmatprep.subr.bf16.mxu0 0
    %804 = vmatpush1.bf16.xpose.msra.mxu0 0
    %805 = vmatprep.subr.bf16.mxu0 0
    %806 = vmatpush1.bf16.xpose.msra.mxu0 0
    %807 = vmatprep.subr.bf16.mxu0 0
    %808 = vmatpush1.bf16.xpose.msra.mxu0 0
    %809 = vmatprep.subr.bf16.mxu0 0
    %810 = vmatpush1.bf16.xpose.msra.mxu0 0
    %811 = vmatprep.subr.bf16.mxu0 0
    %812 = vmatpush1.bf16.xpose.msra.mxu0 0
    %813 = vmatprep.subr.bf16.mxu0 0
    %814 = vmatpush1.bf16.xpose.msra.mxu0 %v797
    %815 = vmatprep.subr.bf16.mxu0 0
    %816 = vmatpush2.bf16.xpose.msra.mxu0 0
    %817 = vmatprep.subr.bf16.mxu0 0
    %818 = vmatpush2.bf16.xpose.msra.mxu0 0
    %819 = vmatprep.subr.bf16.mxu0 0
    %820 = vmatpush2.bf16.xpose.msra.mxu0 0
    %821 = vmatprep.subr.bf16.mxu0 0
    %822 = vmatpush2.bf16.xpose.msra.mxu0 0
    %823 = vmatprep.subr.bf16.mxu0 0
    %824 = vmatpush2.bf16.xpose.msra.mxu0 0
    %825 = vmatprep.subr.bf16.mxu0 0
    %826 = vmatpush2.bf16.xpose.msra.mxu0 0
    %827 = vmatprep.subr.bf16.mxu0 0
    %828 = vmatpush2.bf16.xpose.msra.mxu0 0
    %829 = vmatprep.subr.bf16.mxu0 0
    %830 = vmatpush2.bf16.xpose.msra.mxu0 0
    %831 = vmatprep.mubr.bf16.mxu0 0
    %832 = vmatmul.mubr.bf16.gmra.mxu0 %v794
    %v833 = vpop.f32.mrf.mxu0
    %v834 = vadd.f32 0.0, %v833
    %v835 = vpop.f32.mrf.mxu0
    %v836 = vpop.f32.mrf.mxu0
    %v837 = vpop.f32.mrf.mxu0
    %838 = vdwg.mxu0
    %v840 = vsel %vm562, %v504, 0
    %v843 = vsel %vm562, %v532, 0
    %845 = vmatprep.subr.bf16.mxu0 0
    %846 = vmatpush1.bf16.xpose.msra.mxu0 0
    %847 = vmatprep.subr.bf16.mxu0 0
    %848 = vmatpush1.bf16.xpose.msra.mxu0 0
    %849 = vmatprep.subr.bf16.mxu0 0
    %850 = vmatpush1.bf16.xpose.msra.mxu0 0
    %851 = vmatprep.subr.bf16.mxu0 0
    %852 = vmatpush1.bf16.xpose.msra.mxu0 0
    %853 = vmatprep.subr.bf16.mxu0 0
    %854 = vmatpush1.bf16.xpose.msra.mxu0 0
    %855 = vmatprep.subr.bf16.mxu0 0
    %856 = vmatpush1.bf16.xpose.msra.mxu0 0
    %857 = vmatprep.subr.bf16.mxu0 0
    %858 = vmatpush1.bf16.xpose.msra.mxu0 0
    %859 = vmatprep.subr.bf16.mxu0 0
    %860 = vmatpush1.bf16.xpose.msra.mxu0 %v843
    %861 = vmatprep.subr.bf16.mxu0 0
    %862 = vmatpush2.bf16.xpose.msra.mxu0 0
    %863 = vmatprep.subr.bf16.mxu0 0
    %864 = vmatpush2.bf16.xpose.msra.mxu0 0
    %865 = vmatprep.subr.bf16.mxu0 0
    %866 = vmatpush2.bf16.xpose.msra.mxu0 0
    %867 = vmatprep.subr.bf16.mxu0 0
    %868 = vmatpush2.bf16.xpose.msra.mxu0 0
    %869 = vmatprep.subr.bf16.mxu0 0
    %870 = vmatpush2.bf16.xpose.msra.mxu0 0
    %871 = vmatprep.subr.bf16.mxu0 0
    %872 = vmatpush2.bf16.xpose.msra.mxu0 0
    %873 = vmatprep.subr.bf16.mxu0 0
    %874 = vmatpush2.bf16.xpose.msra.mxu0 0
    %875 = vmatprep.subr.bf16.mxu0 0
    %876 = vmatpush2.bf16.xpose.msra.mxu0 0
    %877 = vmatprep.mubr.bf16.mxu0 0
    %878 = vmatmul.mubr.bf16.gmra.mxu0 %v840
    %v879 = vpop.f32.mrf.mxu0
    %v880 = vadd.f32 0.0, %v879
    %v881 = vpop.f32.mrf.mxu0
    %v882 = vpop.f32.mrf.mxu0
    %v883 = vpop.f32.mrf.mxu0
    %884 = vdwg.mxu0
    %v886 = vsel %vm562, %v505, 0
    %v889 = vsel %vm562, %v533, 0
    %891 = vmatprep.subr.bf16.mxu0 0
    %892 = vmatpush1.bf16.xpose.msra.mxu0 0
    %893 = vmatprep.subr.bf16.mxu0 0
    %894 = vmatpush1.bf16.xpose.msra.mxu0 0
    %895 = vmatprep.subr.bf16.mxu0 0
    %896 = vmatpush1.bf16.xpose.msra.mxu0 0
    %897 = vmatprep.subr.bf16.mxu0 0
    %898 = vmatpush1.bf16.xpose.msra.mxu0 0
    %899 = vmatprep.subr.bf16.mxu0 0
    %900 = vmatpush1.bf16.xpose.msra.mxu0 0
    %901 = vmatprep.subr.bf16.mxu0 0
    %902 = vmatpush1.bf16.xpose.msra.mxu0 0
    %903 = vmatprep.subr.bf16.mxu0 0
    %904 = vmatpush1.bf16.xpose.msra.mxu0 0
    %905 = vmatprep.subr.bf16.mxu0 0
    %906 = vmatpush1.bf16.xpose.msra.mxu0 %v889
    %907 = vmatprep.subr.bf16.mxu0 0
    %908 = vmatpush2.bf16.xpose.msra.mxu0 0
    %909 = vmatprep.subr.bf16.mxu0 0
    %910 = vmatpush2.bf16.xpose.msra.mxu0 0
    %911 = vmatprep.subr.bf16.mxu0 0
    %912 = vmatpush2.bf16.xpose.msra.mxu0 0
    %913 = vmatprep.subr.bf16.mxu0 0
    %914 = vmatpush2.bf16.xpose.msra.mxu0 0
    %915 = vmatprep.subr.bf16.mxu0 0
    %916 = vmatpush2.bf16.xpose.msra.mxu0 0
    %917 = vmatprep.subr.bf16.mxu0 0
    %918 = vmatpush2.bf16.xpose.msra.mxu0 0
    %919 = vmatprep.subr.bf16.mxu0 0
    %920 = vmatpush2.bf16.xpose.msra.mxu0 0
    %921 = vmatprep.subr.bf16.mxu0 0
    %922 = vmatpush2.bf16.xpose.msra.mxu0 0
    %923 = vmatprep.mubr.bf16.mxu0 0
    %924 = vmatmul.mubr.bf16.gmra.mxu0 %v886
    %v925 = vpop.f32.mrf.mxu0
    %v926 = vadd.f32 0.0, %v925
    %v927 = vpop.f32.mrf.mxu0
    %v928 = vpop.f32.mrf.mxu0
    %v929 = vpop.f32.mrf.mxu0
    %930 = vdwg.mxu0
    %v931 = vmul.f32 %v604, 0.17677669
    %v932 = vmul.f32 %v650, 0.17677669
    %v933 = vmul.f32 %v696, 0.17677669
    %v934 = vmul.f32 %v742, 0.17677669
    %v935 = vmul.f32 %v788, 0.17677669
    %v936 = vmul.f32 %v834, 0.17677669
    %v937 = vmul.f32 %v880, 0.17677669
    %v938 = vmul.f32 %v926, 0.17677669
    %vm939 = vcmask 64512
    %v940 = vsel %vm939, %v931, -inf
    %941 = vmax.xlane.f32.xlu0 %v940
    %v942 = vpop.xlane.xlu0 %941
    %v943 = vsel %vm939, %v932, -inf
    %944 = vmax.xlane.f32.xlu0 %v943
    %v945 = vpop.xlane.xlu0 %944
    %v946 = vsel %vm939, %v933, -inf
    %947 = vmax.xlane.f32.xlu0 %v946
    %v948 = vpop.xlane.xlu0 %947
    %v949 = vsel %vm939, %v934, -inf
    %950 = vmax.xlane.f32.xlu0 %v949
    %v951 = vpop.xlane.xlu0 %950
    %v952 = vsel %vm939, %v935, -inf
    %953 = vmax.xlane.f32.xlu0 %v952
    %v954 = vpop.xlane.xlu0 %953
    %v955 = vsel %vm939, %v936, -inf
    %956 = vmax.xlane.f32.xlu0 %v955
    %v957 = vpop.xlane.xlu0 %956
    %v958 = vsel %vm939, %v937, -inf
    %959 = vmax.xlane.f32.xlu0 %v958
    %v960 = vpop.xlane.xlu0 %959
    %v961 = vsel %vm939, %v938, -inf
    %962 = vmax.xlane.f32.xlu0 %v961
    %v963 = vpop.xlane.xlu0 %962
    %v964 = vsub.f32 %v931, %v942
    %v965 = vsub.f32 %v932, %v945
    %v966 = vsub.f32 %v933, %v948
    %v967 = vsub.f32 %v934, %v951
    %v968 = vsub.f32 %v935, %v954
    %v969 = vsub.f32 %v936, %v957
    %v970 = vsub.f32 %v937, %v960
    %v971 = vsub.f32 %v938, %v963
    %v972 = vmul.f32 %v964, 1.442695
    %v973 = vpow.pop %v972
    %v974 = vmul.f32 %v965, 1.442695
    %v975 = vpow.pop %v974
    %v976 = vmul.f32 %v966, 1.442695
    %v977 = vpow.pop %v976
    %v978 = vmul.f32 %v967, 1.442695
    %v979 = vpow.pop %v978
    %v980 = vmul.f32 %v968, 1.442695
    %v981 = vpow.pop %v980
    %v982 = vmul.f32 %v969, 1.442695
    %v983 = vpow.pop %v982
    %v984 = vmul.f32 %v970, 1.442695
    %v985 = vpow.pop %v984
    %v986 = vmul.f32 %v971, 1.442695
    %v987 = vpow.pop %v986
    %v988 = vsel %vm939, %v973, 0.0
    %989 = vadd.xlane.f32.xlu0 %v988
    %v990 = vpop.xlane.xlu0 %989
    %v991 = vsel %vm939, %v975, 0.0
    %992 = vadd.xlane.f32.xlu0 %v991
    %v993 = vpop.xlane.xlu0 %992
    %v994 = vsel %vm939, %v977, 0.0
    %995 = vadd.xlane.f32.xlu0 %v994
    %v996 = vpop.xlane.xlu0 %995
    %v997 = vsel %vm939, %v979, 0.0
    %998 = vadd.xlane.f32.xlu0 %v997
    %v999 = vpop.xlane.xlu0 %998
    %v1000 = vsel %vm939, %v981, 0.0
    %1001 = vadd.xlane.f32.xlu0 %v1000
    %v1002 = vpop.xlane.xlu0 %1001
    %v1003 = vsel %vm939, %v983, 0.0
    %1004 = vadd.xlane.f32.xlu0 %v1003
    %v1005 = vpop.xlane.xlu0 %1004
    %v1006 = vsel %vm939, %v985, 0.0
    %1007 = vadd.xlane.f32.xlu0 %v1006
    %v1008 = vpop.xlane.xlu0 %1007
    %v1009 = vsel %vm939, %v987, 0.0
    %1010 = vadd.xlane.f32.xlu0 %v1009
    %v1011 = vpop.xlane.xlu0 %1010
    %v1012 = vrcp.pop %v990
    %v1013 = vrcp.pop %v993
    %v1014 = vrcp.pop %v996
    %v1015 = vrcp.pop %v999
    %v1016 = vrcp.pop %v1002
    %v1017 = vrcp.pop %v1005
    %v1018 = vrcp.pop %v1008
    %v1019 = vrcp.pop %v1011
    %v1020 = vmul.f32 %v973, %v1012
    %v1021 = vmul.f32 %v975, %v1013
    %v1022 = vmul.f32 %v977, %v1014
    %v1023 = vmul.f32 %v979, %v1015
    %v1024 = vmul.f32 %v981, %v1016
    %v1025 = vmul.f32 %v983, %v1017
    %v1026 = vmul.f32 %v985, %v1018
    %v1027 = vmul.f32 %v987, %v1019
    %v1028 = vpack.c.bf16 %v1020, %v1020
    %v1029 = vpack.c.bf16 %v1021, %v1021
    %v1030 = vpack.c.bf16 %v1022, %v1022
    %v1031 = vpack.c.bf16 %v1023, %v1023
    %v1032 = vpack.c.bf16 %v1024, %v1024
    %v1033 = vpack.c.bf16 %v1025, %v1025
    %v1034 = vpack.c.bf16 %v1026, %v1026
    %v1035 = vpack.c.bf16 %v1027, %v1027
    %v1037 = vsel %vm939, %v1028, 0
    %vm1039 = vcmask 1043456
    %v1041 = vsel %vm1039, %v554, 0
    %1043 = vmatprep.subr.bf16.mxu0 0
    %1044 = vmatpush1.bf16.msra.mxu0 0
    %1045 = vmatprep.subr.bf16.mxu0 0
    %1046 = vmatpush1.bf16.msra.mxu0 0
    %1047 = vmatprep.subr.bf16.mxu0 0
    %1048 = vmatpush1.bf16.msra.mxu0 0
    %1049 = vmatprep.subr.bf16.mxu0 0
    %1050 = vmatpush1.bf16.msra.mxu0 0
    %1051 = vmatprep.subr.bf16.mxu0 0
    %1052 = vmatpush1.bf16.msra.mxu0 0
    %1053 = vmatprep.subr.bf16.mxu0 0
    %1054 = vmatpush1.bf16.msra.mxu0 0
    %1055 = vmatprep.subr.bf16.mxu0 0
    %1056 = vmatpush1.bf16.msra.mxu0 0
    %1057 = vmatprep.subr.bf16.mxu0 0
    %1058 = vmatpush1.bf16.msra.mxu0 %v1041
    %1059 = vmatprep.subr.bf16.mxu0 0
    %1060 = vmatpush2.bf16.msra.mxu0 0
    %1061 = vmatprep.subr.bf16.mxu0 0
    %1062 = vmatpush2.bf16.msra.mxu0 0
    %1063 = vmatprep.subr.bf16.mxu0 0
    %1064 = vmatpush2.bf16.msra.mxu0 0
    %1065 = vmatprep.subr.bf16.mxu0 0
    %1066 = vmatpush2.bf16.msra.mxu0 0
    %1067 = vmatprep.subr.bf16.mxu0 0
    %1068 = vmatpush2.bf16.msra.mxu0 0
    %1069 = vmatprep.subr.bf16.mxu0 0
    %1070 = vmatpush2.bf16.msra.mxu0 0
    %1071 = vmatprep.subr.bf16.mxu0 0
    %1072 = vmatpush2.bf16.msra.mxu0 0
    %1073 = vmatprep.subr.bf16.mxu0 0
    %1074 = vmatpush2.bf16.msra.mxu0 0
    %1075 = vmatprep.mubr.bf16.mxu0 0
    %1076 = vmatmul.mubr.bf16.gmra.mxu0 %v1037
    %v1077 = vpop.f32.mrf.mxu0
    %v1078 = vadd.f32 0.0, %v1077
    %v1079 = vpop.f32.mrf.mxu0
    %v1080 = vpop.f32.mrf.mxu0
    %v1081 = vpop.f32.mrf.mxu0
    %1082 = vdwg.mxu0
    %v1084 = vsel %vm939, %v1029, 0
    %v1087 = vsel %vm1039, %v555, 0
    %1089 = vmatprep.subr.bf16.mxu0 0
    %1090 = vmatpush1.bf16.msra.mxu0 0
    %1091 = vmatprep.subr.bf16.mxu0 0
    %1092 = vmatpush1.bf16.msra.mxu0 0
    %1093 = vmatprep.subr.bf16.mxu0 0
    %1094 = vmatpush1.bf16.msra.mxu0 0
    %1095 = vmatprep.subr.bf16.mxu0 0
    %1096 = vmatpush1.bf16.msra.mxu0 0
    %1097 = vmatprep.subr.bf16.mxu0 0
    %1098 = vmatpush1.bf16.msra.mxu0 0
    %1099 = vmatprep.subr.bf16.mxu0 0
    %1100 = vmatpush1.bf16.msra.mxu0 0
    %1101 = vmatprep.subr.bf16.mxu0 0
    %1102 = vmatpush1.bf16.msra.mxu0 0
    %1103 = vmatprep.subr.bf16.mxu0 0
    %1104 = vmatpush1.bf16.msra.mxu0 %v1087
    %1105 = vmatprep.subr.bf16.mxu0 0
    %1106 = vmatpush2.bf16.msra.mxu0 0
    %1107 = vmatprep.subr.bf16.mxu0 0
    %1108 = vmatpush2.bf16.msra.mxu0 0
    %1109 = vmatprep.subr.bf16.mxu0 0
    %1110 = vmatpush2.bf16.msra.mxu0 0
    %1111 = vmatprep.subr.bf16.mxu0 0
    %1112 = vmatpush2.bf16.msra.mxu0 0
    %1113 = vmatprep.subr.bf16.mxu0 0
    %1114 = vmatpush2.bf16.msra.mxu0 0
    %1115 = vmatprep.subr.bf16.mxu0 0
    %1116 = vmatpush2.bf16.msra.mxu0 0
    %1117 = vmatprep.subr.bf16.mxu0 0
    %1118 = vmatpush2.bf16.msra.mxu0 0
    %1119 = vmatprep.subr.bf16.mxu0 0
    %1120 = vmatpush2.bf16.msra.mxu0 0
    %1121 = vmatprep.mubr.bf16.mxu0 0
    %1122 = vmatmul.mubr.bf16.gmra.mxu0 %v1084
    %v1123 = vpop.f32.mrf.mxu0
    %v1124 = vadd.f32 0.0, %v1123
    %v1125 = vpop.f32.mrf.mxu0
    %v1126 = vpop.f32.mrf.mxu0
    %v1127 = vpop.f32.mrf.mxu0
    %1128 = vdwg.mxu0
    %v1130 = vsel %vm939, %v1030, 0
    %v1133 = vsel %vm1039, %v556, 0
    %1135 = vmatprep.subr.bf16.mxu0 0
    %1136 = vmatpush1.bf16.msra.mxu0 0
    %1137 = vmatprep.subr.bf16.mxu0 0
    %1138 = vmatpush1.bf16.msra.mxu0 0
    %1139 = vmatprep.subr.bf16.mxu0 0
    %1140 = vmatpush1.bf16.msra.mxu0 0
    %1141 = vmatprep.subr.bf16.mxu0 0
    %1142 = vmatpush1.bf16.msra.mxu0 0
    %1143 = vmatprep.subr.bf16.mxu0 0
    %1144 = vmatpush1.bf16.msra.mxu0 0
    %1145 = vmatprep.subr.bf16.mxu0 0
    %1146 = vmatpush1.bf16.msra.mxu0 0
    %1147 = vmatprep.subr.bf16.mxu0 0
    %1148 = vmatpush1.bf16.msra.mxu0 0
    %1149 = vmatprep.subr.bf16.mxu0 0
    %1150 = vmatpush1.bf16.msra.mxu0 %v1133
    %1151 = vmatprep.subr.bf16.mxu0 0
    %1152 = vmatpush2.bf16.msra.mxu0 0
    %1153 = vmatprep.subr.bf16.mxu0 0
    %1154 = vmatpush2.bf16.msra.mxu0 0
    %1155 = vmatprep.subr.bf16.mxu0 0
    %1156 = vmatpush2.bf16.msra.mxu0 0
    %1157 = vmatprep.subr.bf16.mxu0 0
    %1158 = vmatpush2.bf16.msra.mxu0 0
    %1159 = vmatprep.subr.bf16.mxu0 0
    %1160 = vmatpush2.bf16.msra.mxu0 0
    %1161 = vmatprep.subr.bf16.mxu0 0
    %1162 = vmatpush2.bf16.msra.mxu0 0
    %1163 = vmatprep.subr.bf16.mxu0 0
    %1164 = vmatpush2.bf16.msra.mxu0 0
    %1165 = vmatprep.subr.bf16.mxu0 0
    %1166 = vmatpush2.bf16.msra.mxu0 0
    %1167 = vmatprep.mubr.bf16.mxu0 0
    %1168 = vmatmul.mubr.bf16.gmra.mxu0 %v1130
    %v1169 = vpop.f32.mrf.mxu0
    %v1170 = vadd.f32 0.0, %v1169
    %v1171 = vpop.f32.mrf.mxu0
    %v1172 = vpop.f32.mrf.mxu0
    %v1173 = vpop.f32.mrf.mxu0
    %1174 = vdwg.mxu0
    %v1176 = vsel %vm939, %v1031, 0
    %v1179 = vsel %vm1039, %v557, 0
    %1181 = vmatprep.subr.bf16.mxu0 0
    %1182 = vmatpush1.bf16.msra.mxu0 0
    %1183 = vmatprep.subr.bf16.mxu0 0
    %1184 = vmatpush1.bf16.msra.mxu0 0
    %1185 = vmatprep.subr.bf16.mxu0 0
    %1186 = vmatpush1.bf16.msra.mxu0 0
    %1187 = vmatprep.subr.bf16.mxu0 0
    %1188 = vmatpush1.bf16.msra.mxu0 0
    %1189 = vmatprep.subr.bf16.mxu0 0
    %1190 = vmatpush1.bf16.msra.mxu0 0
    %1191 = vmatprep.subr.bf16.mxu0 0
    %1192 = vmatpush1.bf16.msra.mxu0 0
    %1193 = vmatprep.subr.bf16.mxu0 0
    %1194 = vmatpush1.bf16.msra.mxu0 0
    %1195 = vmatprep.subr.bf16.mxu0 0
    %1196 = vmatpush1.bf16.msra.mxu0 %v1179
    %1197 = vmatprep.subr.bf16.mxu0 0
    %1198 = vmatpush2.bf16.msra.mxu0 0
    %1199 = vmatprep.subr.bf16.mxu0 0
    %1200 = vmatpush2.bf16.msra.mxu0 0
    %1201 = vmatprep.subr.bf16.mxu0 0
    %1202 = vmatpush2.bf16.msra.mxu0 0
    %1203 = vmatprep.subr.bf16.mxu0 0
    %1204 = vmatpush2.bf16.msra.mxu0 0
    %1205 = vmatprep.subr.bf16.mxu0 0
    %1206 = vmatpush2.bf16.msra.mxu0 0
    %1207 = vmatprep.subr.bf16.mxu0 0
    %1208 = vmatpush2.bf16.msra.mxu0 0
    %1209 = vmatprep.subr.bf16.mxu0 0
    %1210 = vmatpush2.bf16.msra.mxu0 0
    %1211 = vmatprep.subr.bf16.mxu0 0
    %1212 = vmatpush2.bf16.msra.mxu0 0
    %1213 = vmatprep.mubr.bf16.mxu0 0
    %1214 = vmatmul.mubr.bf16.gmra.mxu0 %v1176
    %v1215 = vpop.f32.mrf.mxu0
    %v1216 = vadd.f32 0.0, %v1215
    %v1217 = vpop.f32.mrf.mxu0
    %v1218 = vpop.f32.mrf.mxu0
    %v1219 = vpop.f32.mrf.mxu0
    %1220 = vdwg.mxu0
    %v1222 = vsel %vm939, %v1032, 0
    %v1225 = vsel %vm1039, %v558, 0
    %1227 = vmatprep.subr.bf16.mxu0 0
    %1228 = vmatpush1.bf16.msra.mxu0 0
    %1229 = vmatprep.subr.bf16.mxu0 0
    %1230 = vmatpush1.bf16.msra.mxu0 0
    %1231 = vmatprep.subr.bf16.mxu0 0
    %1232 = vmatpush1.bf16.msra.mxu0 0
    %1233 = vmatprep.subr.bf16.mxu0 0
    %1234 = vmatpush1.bf16.msra.mxu0 0
    %1235 = vmatprep.subr.bf16.mxu0 0
    %1236 = vmatpush1.bf16.msra.mxu0 0
    %1237 = vmatprep.subr.bf16.mxu0 0
    %1238 = vmatpush1.bf16.msra.mxu0 0
    %1239 = vmatprep.subr.bf16.mxu0 0
    %1240 = vmatpush1.bf16.msra.mxu0 0
    %1241 = vmatprep.subr.bf16.mxu0 0
    %1242 = vmatpush1.bf16.msra.mxu0 %v1225
    %1243 = vmatprep.subr.bf16.mxu0 0
    %1244 = vmatpush2.bf16.msra.mxu0 0
    %1245 = vmatprep.subr.bf16.mxu0 0
    %1246 = vmatpush2.bf16.msra.mxu0 0
    %1247 = vmatprep.subr.bf16.mxu0 0
    %1248 = vmatpush2.bf16.msra.mxu0 0
    %1249 = vmatprep.subr.bf16.mxu0 0
    %1250 = vmatpush2.bf16.msra.mxu0 0
    %1251 = vmatprep.subr.bf16.mxu0 0
    %1252 = vmatpush2.bf16.msra.mxu0 0
    %1253 = vmatprep.subr.bf16.mxu0 0
    %1254 = vmatpush2.bf16.msra.mxu0 0
    %1255 = vmatprep.subr.bf16.mxu0 0
    %1256 = vmatpush2.bf16.msra.mxu0 0
    %1257 = vmatprep.subr.bf16.mxu0 0
    %1258 = vmatpush2.bf16.msra.mxu0 0
    %1259 = vmatprep.mubr.bf16.mxu0 0
    %1260 = vmatmul.mubr.bf16.gmra.mxu0 %v1222
    %v1261 = vpop.f32.mrf.mxu0
    %v1262 = vadd.f32 0.0, %v1261
    %v1263 = vpop.f32.mrf.mxu0
    %v1264 = vpop.f32.mrf.mxu0
    %v1265 = vpop.f32.mrf.mxu0
    %1266 = vdwg.mxu0
    %v1268 = vsel %vm939, %v1033, 0
    %v1271 = vsel %vm1039, %v559, 0
    %1273 = vmatprep.subr.bf16.mxu0 0
    %1274 = vmatpush1.bf16.msra.mxu0 0
    %1275 = vmatprep.subr.bf16.mxu0 0
    %1276 = vmatpush1.bf16.msra.mxu0 0
    %1277 = vmatprep.subr.bf16.mxu0 0
    %1278 = vmatpush1.bf16.msra.mxu0 0
    %1279 = vmatprep.subr.bf16.mxu0 0
    %1280 = vmatpush1.bf16.msra.mxu0 0
    %1281 = vmatprep.subr.bf16.mxu0 0
    %1282 = vmatpush1.bf16.msra.mxu0 0
    %1283 = vmatprep.subr.bf16.mxu0 0
    %1284 = vmatpush1.bf16.msra.mxu0 0
    %1285 = vmatprep.subr.bf16.mxu0 0
    %1286 = vmatpush1.bf16.msra.mxu0 0
    %1287 = vmatprep.subr.bf16.mxu0 0
    %1288 = vmatpush1.bf16.msra.mxu0 %v1271
    %1289 = vmatprep.subr.bf16.mxu0 0
    %1290 = vmatpush2.bf16.msra.mxu0 0
    %1291 = vmatprep.subr.bf16.mxu0 0
    %1292 = vmatpush2.bf16.msra.mxu0 0
    %1293 = vmatprep.subr.bf16.mxu0 0
    %1294 = vmatpush2.bf16.msra.mxu0 0
    %1295 = vmatprep.subr.bf16.mxu0 0
    %1296 = vmatpush2.bf16.msra.mxu0 0
    %1297 = vmatprep.subr.bf16.mxu0 0
    %1298 = vmatpush2.bf16.msra.mxu0 0
    %1299 = vmatprep.subr.bf16.mxu0 0
    %1300 = vmatpush2.bf16.msra.mxu0 0
    %1301 = vmatprep.subr.bf16.mxu0 0
    %1302 = vmatpush2.bf16.msra.mxu0 0
    %1303 = vmatprep.subr.bf16.mxu0 0
    %1304 = vmatpush2.bf16.msra.mxu0 0
    %1305 = vmatprep.mubr.bf16.mxu0 0
    %1306 = vmatmul.mubr.bf16.gmra.mxu0 %v1268
    %v1307 = vpop.f32.mrf.mxu0
    %v1308 = vadd.f32 0.0, %v1307
    %v1309 = vpop.f32.mrf.mxu0
    %v1310 = vpop.f32.mrf.mxu0
    %v1311 = vpop.f32.mrf.mxu0
    %1312 = vdwg.mxu0
    %v1314 = vsel %vm939, %v1034, 0
    %v1317 = vsel %vm1039, %v560, 0
    %1319 = vmatprep.subr.bf16.mxu0 0
    %1320 = vmatpush1.bf16.msra.mxu0 0
    %1321 = vmatprep.subr.bf16.mxu0 0
    %1322 = vmatpush1.bf16.msra.mxu0 0
    %1323 = vmatprep.subr.bf16.mxu0 0
    %1324 = vmatpush1.bf16.msra.mxu0 0
    %1325 = vmatprep.subr.bf16.mxu0 0
    %1326 = vmatpush1.bf16.msra.mxu0 0
    %1327 = vmatprep.subr.bf16.mxu0 0
    %1328 = vmatpush1.bf16.msra.mxu0 0
    %1329 = vmatprep.subr.bf16.mxu0 0
    %1330 = vmatpush1.bf16.msra.mxu0 0
    %1331 = vmatprep.subr.bf16.mxu0 0
    %1332 = vmatpush1.bf16.msra.mxu0 0
    %1333 = vmatprep.subr.bf16.mxu0 0
    %1334 = vmatpush1.bf16.msra.mxu0 %v1317
    %1335 = vmatprep.subr.bf16.mxu0 0
    %1336 = vmatpush2.bf16.msra.mxu0 0
    %1337 = vmatprep.subr.bf16.mxu0 0
    %1338 = vmatpush2.bf16.msra.mxu0 0
    %1339 = vmatprep.subr.bf16.mxu0 0
    %1340 = vmatpush2.bf16.msra.mxu0 0
    %1341 = vmatprep.subr.bf16.mxu0 0
    %1342 = vmatpush2.bf16.msra.mxu0 0
    %1343 = vmatprep.subr.bf16.mxu0 0
    %1344 = vmatpush2.bf16.msra.mxu0 0
    %1345 = vmatprep.subr.bf16.mxu0 0
    %1346 = vmatpush2.bf16.msra.mxu0 0
    %1347 = vmatprep.subr.bf16.mxu0 0
    %1348 = vmatpush2.bf16.msra.mxu0 0
    %1349 = vmatprep.subr.bf16.mxu0 0
    %1350 = vmatpush2.bf16.msra.mxu0 0
    %1351 = vmatprep.mubr.bf16.mxu0 0
    %1352 = vmatmul.mubr.bf16.gmra.mxu0 %v1314
    %v1353 = vpop.f32.mrf.mxu0
    %v1354 = vadd.f32 0.0, %v1353
    %v1355 = vpop.f32.mrf.mxu0
    %v1356 = vpop.f32.mrf.mxu0
    %v1357 = vpop.f32.mrf.mxu0
    %1358 = vdwg.mxu0
    %v1360 = vsel %vm939, %v1035, 0
    %v1363 = vsel %vm1039, %v561, 0
    %1365 = vmatprep.subr.bf16.mxu0 0
    %1366 = vmatpush1.bf16.msra.mxu0 0
    %1367 = vmatprep.subr.bf16.mxu0 0
    %1368 = vmatpush1.bf16.msra.mxu0 0
    %1369 = vmatprep.subr.bf16.mxu0 0
    %1370 = vmatpush1.bf16.msra.mxu0 0
    %1371 = vmatprep.subr.bf16.mxu0 0
    %1372 = vmatpush1.bf16.msra.mxu0 0
    %1373 = vmatprep.subr.bf16.mxu0 0
    %1374 = vmatpush1.bf16.msra.mxu0 0
    %1375 = vmatprep.subr.bf16.mxu0 0
    %1376 = vmatpush1.bf16.msra.mxu0 0
    %1377 = vmatprep.subr.bf16.mxu0 0
    %1378 = vmatpush1.bf16.msra.mxu0 0
    %1379 = vmatprep.subr.bf16.mxu0 0
    %1380 = vmatpush1.bf16.msra.mxu0 %v1363
    %1381 = vmatprep.subr.bf16.mxu0 0
    %1382 = vmatpush2.bf16.msra.mxu0 0
    %1383 = vmatprep.subr.bf16.mxu0 0
    %1384 = vmatpush2.bf16.msra.mxu0 0
    %1385 = vmatprep.subr.bf16.mxu0 0
    %1386 = vmatpush2.bf16.msra.mxu0 0
    %1387 = vmatprep.subr.bf16.mxu0 0
    %1388 = vmatpush2.bf16.msra.mxu0 0
    %1389 = vmatprep.subr.bf16.mxu0 0
    %1390 = vmatpush2.bf16.msra.mxu0 0
    %1391 = vmatprep.subr.bf16.mxu0 0
    %1392 = vmatpush2.bf16.msra.mxu0 0
    %1393 = vmatprep.subr.bf16.mxu0 0
    %1394 = vmatpush2.bf16.msra.mxu0 0
    %1395 = vmatprep.subr.bf16.mxu0 0
    %1396 = vmatpush2.bf16.msra.mxu0 0
    %1397 = vmatprep.mubr.bf16.mxu0 0
    %1398 = vmatmul.mubr.bf16.gmra.mxu0 %v1360
    %v1399 = vpop.f32.mrf.mxu0
    %v1400 = vadd.f32 0.0, %v1399
    %v1401 = vpop.f32.mrf.mxu0
    %v1402 = vpop.f32.mrf.mxu0
    %v1403 = vpop.f32.mrf.mxu0
    %1404 = vdwg.mxu0
    %1407 = vrot.lane.b32.xlu0 %v1170, 32
    %v1408 = vpop.permute.xlu0 %1407
    %1409 = vrot.lane.b32.xlu0 %v1216, 32
    %v1410 = vpop.permute.xlu0 %1409
    %1415 = vrot.lane.b32.xlu0 %v1262, 64
    %v1416 = vpop.permute.xlu0 %1415
    %1417 = vrot.lane.b32.xlu0 %v1308, 64
    %v1418 = vpop.permute.xlu0 %1417
    %1423 = vrot.lane.b32.xlu0 %v1354, 96
    %v1424 = vpop.permute.xlu0 %1423
    %1425 = vrot.lane.b32.xlu0 %v1400, 96
    %v1426 = vpop.permute.xlu0 %1425
    %v1429 = vsel %vm562, %v1078, %v1408
    %v1430 = vsel %vm562, %v1124, %v1410
    %vm1431 = vcmask 523264
    %v1432 = vsel %vm1431, %v1429, %v1416
    %v1433 = vsel %vm1431, %v1430, %v1418
    %vm1434 = vcmask 785408
    %v1435 = vsel %vm1434, %v1432, %v1424
    %v1436 = vsel %vm1434, %v1433, %v1426
    %v1437 = vpack.c.bf16 %v1436, %v1435
    %v1438 = vld [vmem:[#allocation8] sm:$0xf]
    %v1439 = vld [vmem:[#allocation8 + $0x4] sm:$0xf]
    %v1440 = vld [vmem:[#allocation8 + $0x8] sm:$0xf]
    %v1441 = vld [vmem:[#allocation8 + $0xc] sm:$0xf]
    %v1442 = vld [vmem:[#allocation8 + $0x10] sm:$0xf]
    %v1443 = vld [vmem:[#allocation8 + $0x14] sm:$0xf]
    %v1444 = vld [vmem:[#allocation8 + $0x18] sm:$0xf]
    %v1445 = vld [vmem:[#allocation8 + $0x1c] sm:$0xf]
    %v1446 = vld [vmem:[#allocation8 + $0x20] sm:$0xf]
    %v1447 = vld [vmem:[#allocation8 + $0x24] sm:$0xf]
    %v1448 = vld [vmem:[#allocation8 + $0x28] sm:$0xf]
    %v1449 = vld [vmem:[#allocation8 + $0x2c] sm:$0xf]
    %v1450 = vld [vmem:[#allocation8 + $0x30] sm:$0xf]
    %v1451 = vld [vmem:[#allocation8 + $0x34] sm:$0xf]
    %v1452 = vld [vmem:[#allocation8 + $0x38] sm:$0xf]
    %v1453 = vld [vmem:[#allocation8 + $0x3c] sm:$0xf]
    %v1454 = vld [vmem:[#allocation10] sm:$0x1]
    %v1456 = vlaneseq
    %v1457 = vshrl.u32 %v1456, 7
    %v1458 = vsub.s32 0, %v1457
    %v1459 = vrot.slane %v1454, %v1458
    %v1477 = vunpack.c.l.b16 %v1438
    %v1478 = vunpack.c.l.b16 %v1439
    %v1479 = vunpack.c.l.b16 %v1440
    %v1480 = vunpack.c.l.b16 %v1441
    %v1481 = vunpack.c.l.b16 %v1442
    %v1482 = vunpack.c.l.b16 %v1443
    %v1483 = vunpack.c.l.b16 %v1444
    %v1484 = vunpack.c.l.b16 %v1445
    %v1485 = vunpack.c.l.b16 %v1446
    %v1486 = vunpack.c.l.b16 %v1447
    %v1487 = vunpack.c.l.b16 %v1448
    %v1488 = vunpack.c.l.b16 %v1449
    %v1489 = vunpack.c.l.b16 %v1450
    %v1490 = vunpack.c.l.b16 %v1451
    %v1491 = vunpack.c.l.b16 %v1452
    %v1492 = vunpack.c.l.b16 %v1453
    %v1493 = vpack.c.b16 %v1478, %v1477
    %v1494 = vpack.c.b16 %v1480, %v1479
    %v1495 = vpack.c.b16 %v1482, %v1481
    %v1496 = vpack.c.b16 %v1484, %v1483
    %v1497 = vpack.c.b16 %v1486, %v1485
    %v1498 = vpack.c.b16 %v1488, %v1487
    %v1499 = vpack.c.b16 %v1490, %v1489
    %v1500 = vpack.c.b16 %v1492, %v1491
    %1509 = vmatprep.subr.bf16.mxu0 0
    %1510 = vmatpush1.bf16.msra.mxu0 %v1500
    %1511 = vmatprep.subr.bf16.mxu0 0
    %1512 = vmatpush1.bf16.msra.mxu0 %v1499
    %1513 = vmatprep.subr.bf16.mxu0 0
    %1514 = vmatpush1.bf16.msra.mxu0 %v1498
    %1515 = vmatprep.subr.bf16.mxu0 0
    %1516 = vmatpush1.bf16.msra.mxu0 %v1497
    %1517 = vmatprep.subr.bf16.mxu0 0
    %1518 = vmatpush1.bf16.msra.mxu0 %v1496
    %1519 = vmatprep.subr.bf16.mxu0 0
    %1520 = vmatpush1.bf16.msra.mxu0 %v1495
    %1521 = vmatprep.subr.bf16.mxu0 0
    %1522 = vmatpush1.bf16.msra.mxu0 %v1494
    %1523 = vmatprep.subr.bf16.mxu0 0
    %1524 = vmatpush1.bf16.msra.mxu0 %v1493
    %1525 = vmatprep.subr.bf16.mxu0 0
    %1526 = vmatpush2.bf16.msra.mxu0 0
    %1527 = vmatprep.subr.bf16.mxu0 0
    %1528 = vmatpush2.bf16.msra.mxu0 0
    %1529 = vmatprep.subr.bf16.mxu0 0
    %1530 = vmatpush2.bf16.msra.mxu0 0
    %1531 = vmatprep.subr.bf16.mxu0 0
    %1532 = vmatpush2.bf16.msra.mxu0 0
    %1533 = vmatprep.subr.bf16.mxu0 0
    %1534 = vmatpush2.bf16.msra.mxu0 0
    %1535 = vmatprep.subr.bf16.mxu0 0
    %1536 = vmatpush2.bf16.msra.mxu0 0
    %1537 = vmatprep.subr.bf16.mxu0 0
    %1538 = vmatpush2.bf16.msra.mxu0 0
    %1539 = vmatprep.subr.bf16.mxu0 0
    %1540 = vmatpush2.bf16.msra.mxu0 0
    %1541 = vmatprep.mubr.bf16.mxu0 0
    %1542 = vmatmul.mubr.bf16.gmra.mxu0 %v1437
    %v1543 = vpop.f32.mrf.mxu0
    %v1544 = vadd.f32 %v1459, %v1543
    %v1545 = vpop.f32.mrf.mxu0
    %v1546 = vpop.f32.mrf.mxu0
    %v1547 = vadd.f32 %v1459, %v1546
    %v1548 = vpop.f32.mrf.mxu0
    %1549 = vdwg.mxu0
    %v1550 = vadd.f32 %v160, %v1544
    %v1551 = vadd.f32 %v161, %v1547
    %v1552 = vld [vmem:[#allocation11] sm:$0x1]
    %v1553 = vld [vmem:[#allocation13] sm:$0x1]
    %1554 = vadd.xlane.f32.xlu0 %v1550
    %v1555 = vpop.xlane.xlu0 %1554
    %1556 = vadd.xlane.f32.xlu0 %v1551
    %v1557 = vpop.xlane.xlu0 %1556
    %v1558 = vmul.f32 %v1555, 0.0078125
    %v1559 = vmul.f32 %v1557, 0.0078125
    %v1560 = vsub.f32 %v1550, %v1558
    %v1561 = vsub.f32 %v1551, %v1559
    %v1562 = vmul.f32 %v1560, %v1560
    %v1563 = vmul.f32 %v1561, %v1561
    %1564 = vadd.xlane.f32.xlu0 %v1562
    %v1565 = vpop.xlane.xlu0 %1564
    %1566 = vadd.xlane.f32.xlu0 %v1563
    %v1567 = vpop.xlane.xlu0 %1566
    %v1568 = vmul.f32 %v1565, 0.007874016
    %v1569 = vmul.f32 %v1567, 0.007874016
    %v1570 = vrsqrt.pop %v1568
    %v1571 = vmul.f32 %v1568, %v1570
    %vm1572 = vcmp.eq.f32.partialorder %v1568, inf
    %v1573 = vsel %vm1572, %v1568, %v1571
    %vm1574 = vcmp.eq.f32.partialorder %v1568, 0.0
    %v1575 = vand.u32 %v1568, 2147483648
    %v1576 = vsel %vm1574, %v1575, %v1573
    %v1577 = vrsqrt.pop %v1569
    %v1578 = vmul.f32 %v1569, %v1577
    %vm1579 = vcmp.eq.f32.partialorder %v1569, inf
    %v1580 = vsel %vm1579, %v1569, %v1578
    %vm1581 = vcmp.eq.f32.partialorder %v1569, 0.0
    %v1582 = vand.u32 %v1569, 2147483648
    %v1583 = vsel %vm1581, %v1582, %v1580
    %v1584 = vadd.f32 %v1576, 1e-06
    %v1585 = vadd.f32 %v1583, 1e-06
    %v1586 = vrcp.pop %v1584
    %v1587 = vrcp.pop %v1585
    %v1588 = vmul.f32 %v1560, %v1586
    %v1589 = vmul.f32 %v1561, %v1587
    %v1591 = vlaneseq
    %v1592 = vshrl.u32 %v1591, 7
    %v1593 = vsub.s32 0, %v1592
    %v1594 = vrot.slane %v1552, %v1593
    %v1596 = vmul.f32 %v1594, %v1588
    %v1597 = vmul.f32 %v1594, %v1589
    %v1599 = vlaneseq
    %v1600 = vshrl.u32 %v1599, 7
    %v1601 = vsub.s32 0, %v1600
    %v1602 = vrot.slane %v1553, %v1601
    %v1604 = vadd.f32 %v1596, %v1602
    %v1605 = vadd.f32 %v1597, %v1602
    %v1606 = vpack.c.bf16 %v1605, %v1604
    %v1607 = vld [vmem:[#allocation14] sm:$0xff]
    %v1608 = vld [vmem:[#allocation14 + $0x8] sm:$0xff]
    %v1609 = vld [vmem:[#allocation14 + $0x10] sm:$0xff]
    %v1610 = vld [vmem:[#allocation14 + $0x18] sm:$0xff]
    %v1611 = vld [vmem:[#allocation14 + $0x20] sm:$0xff]
    %v1612 = vld [vmem:[#allocation14 + $0x28] sm:$0xff]
    %v1613 = vld [vmem:[#allocation14 + $0x30] sm:$0xff]
    %v1614 = vld [vmem:[#allocation14 + $0x38] sm:$0xff]
    %v1615 = vld [vmem:[#allocation14 + $0x40] sm:$0xff]
    %v1616 = vld [vmem:[#allocation14 + $0x48] sm:$0xff]
    %v1617 = vld [vmem:[#allocation14 + $0x50] sm:$0xff]
    %v1618 = vld [vmem:[#allocation14 + $0x58] sm:$0xff]
    %v1619 = vld [vmem:[#allocation14 + $0x60] sm:$0xff]
    %v1620 = vld [vmem:[#allocation14 + $0x68] sm:$0xff]
    %v1621 = vld [vmem:[#allocation14 + $0x70] sm:$0xff]
    %v1622 = vld [vmem:[#allocation14 + $0x78] sm:$0xff]
    %v1623 = vld [vmem:[#allocation14 + $0x80] sm:$0xff]
    %v1624 = vld [vmem:[#allocation14 + $0x88] sm:$0xff]
    %v1625 = vld [vmem:[#allocation14 + $0x90] sm:$0xff]
    %v1626 = vld [vmem:[#allocation14 + $0x98] sm:$0xff]
    %v1627 = vld [vmem:[#allocation14 + $0xa0] sm:$0xff]
    %v1628 = vld [vmem:[#allocation14 + $0xa8] sm:$0xff]
    %v1629 = vld [vmem:[#allocation14 + $0xb0] sm:$0xff]
    %v1630 = vld [vmem:[#allocation14 + $0xb8] sm:$0xff]
    %v1631 = vld [vmem:[#allocation14 + $0xc0] sm:$0xff]
    %v1632 = vld [vmem:[#allocation14 + $0xc8] sm:$0xff]
    %v1633 = vld [vmem:[#allocation14 + $0xd0] sm:$0xff]
    %v1634 = vld [vmem:[#allocation14 + $0xd8] sm:$0xff]
    %v1635 = vld [vmem:[#allocation14 + $0xe0] sm:$0xff]
    %v1636 = vld [vmem:[#allocation14 + $0xe8] sm:$0xff]
    %v1637 = vld [vmem:[#allocation14 + $0xf0] sm:$0xff]
    %v1638 = vld [vmem:[#allocation14 + $0xf8] sm:$0xff]
    %v1639 = vld [vmem:[#allocation14 + $0x100] sm:$0xff]
    %v1640 = vld [vmem:[#allocation14 + $0x108] sm:$0xff]
    %v1641 = vld [vmem:[#allocation14 + $0x110] sm:$0xff]
    %v1642 = vld [vmem:[#allocation14 + $0x118] sm:$0xff]
    %v1643 = vld [vmem:[#allocation14 + $0x120] sm:$0xff]
    %v1644 = vld [vmem:[#allocation14 + $0x128] sm:$0xff]
    %v1645 = vld [vmem:[#allocation14 + $0x130] sm:$0xff]
    %v1646 = vld [vmem:[#allocation14 + $0x138] sm:$0xff]
    %v1647 = vld [vmem:[#allocation14 + $0x140] sm:$0xff]
    %v1648 = vld [vmem:[#allocation14 + $0x148] sm:$0xff]
    %v1649 = vld [vmem:[#allocation14 + $0x150] sm:$0xff]
    %v1650 = vld [vmem:[#allocation14 + $0x158] sm:$0xff]
    %v1651 = vld [vmem:[#allocation14 + $0x160] sm:$0xff]
    %v1652 = vld [vmem:[#allocation14 + $0x168] sm:$0xff]
    %v1653 = vld [vmem:[#allocation14 + $0x170] sm:$0xff]
    %v1654 = vld [vmem:[#allocation14 + $0x178] sm:$0xff]
    %v1655 = vld [vmem:[#allocation14 + $0x180] sm:$0xff]
    %v1656 = vld [vmem:[#allocation14 + $0x188] sm:$0xff]
    %v1657 = vld [vmem:[#allocation14 + $0x190] sm:$0xff]
    %v1658 = vld [vmem:[#allocation14 + $0x198] sm:$0xff]
    %v1659 = vld [vmem:[#allocation14 + $0x1a0] sm:$0xff]
    %v1660 = vld [vmem:[#allocation14 + $0x1a8] sm:$0xff]
    %v1661 = vld [vmem:[#allocation14 + $0x1b0] sm:$0xff]
    %v1662 = vld [vmem:[#allocation14 + $0x1b8] sm:$0xff]
    %v1663 = vld [vmem:[#allocation14 + $0x1c0] sm:$0xff]
    %v1664 = vld [vmem:[#allocation14 + $0x1c8] sm:$0xff]
    %v1665 = vld [vmem:[#allocation14 + $0x1d0] sm:$0xff]
    %v1666 = vld [vmem:[#allocation14 + $0x1d8] sm:$0xff]
    %v1667 = vld [vmem:[#allocation14 + $0x1e0] sm:$0xff]
    %v1668 = vld [vmem:[#allocation14 + $0x1e8] sm:$0xff]
    %v1669 = vld [vmem:[#allocation14 + $0x1f0] sm:$0xff]
    %v1670 = vld [vmem:[#allocation14 + $0x1f8] sm:$0xff]
    %v1671 = vld [vmem:[#allocation14 + $0x200] sm:$0xff]
    %v1672 = vld [vmem:[#allocation14 + $0x208] sm:$0xff]
    %v1673 = vld [vmem:[#allocation14 + $0x210] sm:$0xff]
    %v1674 = vld [vmem:[#allocation14 + $0x218] sm:$0xff]
    %v1675 = vld [vmem:[#allocation14 + $0x220] sm:$0xff]
    %v1676 = vld [vmem:[#allocation14 + $0x228] sm:$0xff]
    %v1677 = vld [vmem:[#allocation14 + $0x230] sm:$0xff]
    %v1678 = vld [vmem:[#allocation14 + $0x238] sm:$0xff]
    %v1679 = vld [vmem:[#allocation14 + $0x240] sm:$0xff]
    %v1680 = vld [vmem:[#allocation14 + $0x248] sm:$0xff]
    %v1681 = vld [vmem:[#allocation14 + $0x250] sm:$0xff]
    %v1682 = vld [vmem:[#allocation14 + $0x258] sm:$0xff]
    %v1683 = vld [vmem:[#allocation14 + $0x260] sm:$0xff]
    %v1684 = vld [vmem:[#allocation14 + $0x268] sm:$0xff]
    %v1685 = vld [vmem:[#allocation14 + $0x270] sm:$0xff]
    %v1686 = vld [vmem:[#allocation14 + $0x278] sm:$0xff]
    %v1687 = vld [vmem:[#allocation14 + $0x280] sm:$0xff]
    %v1688 = vld [vmem:[#allocation14 + $0x288] sm:$0xff]
    %v1689 = vld [vmem:[#allocation14 + $0x290] sm:$0xff]
    %v1690 = vld [vmem:[#allocation14 + $0x298] sm:$0xff]
    %v1691 = vld [vmem:[#allocation14 + $0x2a0] sm:$0xff]
    %v1692 = vld [vmem:[#allocation14 + $0x2a8] sm:$0xff]
    %v1693 = vld [vmem:[#allocation14 + $0x2b0] sm:$0xff]
    %v1694 = vld [vmem:[#allocation14 + $0x2b8] sm:$0xff]
    %v1695 = vld [vmem:[#allocation14 + $0x2c0] sm:$0xff]
    %v1696 = vld [vmem:[#allocation14 + $0x2c8] sm:$0xff]
    %v1697 = vld [vmem:[#allocation14 + $0x2d0] sm:$0xff]
    %v1698 = vld [vmem:[#allocation14 + $0x2d8] sm:$0xff]
    %v1699 = vld [vmem:[#allocation14 + $0x2e0] sm:$0xff]
    %v1700 = vld [vmem:[#allocation14 + $0x2e8] sm:$0xff]
    %v1701 = vld [vmem:[#allocation14 + $0x2f0] sm:$0xff]
    %v1702 = vld [vmem:[#allocation14 + $0x2f8] sm:$0xff]
    %v1703 = vld [vmem:[#allocation14 + $0x300] sm:$0xff]
    %v1704 = vld [vmem:[#allocation14 + $0x308] sm:$0xff]
    %v1705 = vld [vmem:[#allocation14 + $0x310] sm:$0xff]
    %v1706 = vld [vmem:[#allocation14 + $0x318] sm:$0xff]
    %v1707 = vld [vmem:[#allocation14 + $0x320] sm:$0xff]
    %v1708 = vld [vmem:[#allocation14 + $0x328] sm:$0xff]
    %v1709 = vld [vmem:[#allocation14 + $0x330] sm:$0xff]
    %v1710 = vld [vmem:[#allocation14 + $0x338] sm:$0xff]
    %v1711 = vld [vmem:[#allocation14 + $0x340] sm:$0xff]
    %v1712 = vld [vmem:[#allocation14 + $0x348] sm:$0xff]
    %v1713 = vld [vmem:[#allocation14 + $0x350] sm:$0xff]
    %v1714 = vld [vmem:[#allocation14 + $0x358] sm:$0xff]
    %v1715 = vld [vmem:[#allocation14 + $0x360] sm:$0xff]
    %v1716 = vld [vmem:[#allocation14 + $0x368] sm:$0xff]
    %v1717 = vld [vmem:[#allocation14 + $0x370] sm:$0xff]
    %v1718 = vld [vmem:[#allocation14 + $0x378] sm:$0xff]
    %v1719 = vld [vmem:[#allocation14 + $0x380] sm:$0xff]
    %v1720 = vld [vmem:[#allocation14 + $0x388] sm:$0xff]
    %v1721 = vld [vmem:[#allocation14 + $0x390] sm:$0xff]
    %v1722 = vld [vmem:[#allocation14 + $0x398] sm:$0xff]
    %v1723 = vld [vmem:[#allocation14 + $0x3a0] sm:$0xff]
    %v1724 = vld [vmem:[#allocation14 + $0x3a8] sm:$0xff]
    %v1725 = vld [vmem:[#allocation14 + $0x3b0] sm:$0xff]
    %v1726 = vld [vmem:[#allocation14 + $0x3b8] sm:$0xff]
    %v1727 = vld [vmem:[#allocation14 + $0x3c0] sm:$0xff]
    %v1728 = vld [vmem:[#allocation14 + $0x3c8] sm:$0xff]
    %v1729 = vld [vmem:[#allocation14 + $0x3d0] sm:$0xff]
    %v1730 = vld [vmem:[#allocation14 + $0x3d8] sm:$0xff]
    %v1731 = vld [vmem:[#allocation14 + $0x3e0] sm:$0xff]
    %v1732 = vld [vmem:[#allocation14 + $0x3e8] sm:$0xff]
    %v1733 = vld [vmem:[#allocation14 + $0x3f0] sm:$0xff]
    %v1734 = vld [vmem:[#allocation14 + $0x3f8] sm:$0xff]
    %v1735 = vld [vmem:[%s10] sm:$0xff]
    %v1736 = vld [vmem:[%s10 + $0x8] sm:$0xff]
    %v1739 = vlaneseq
    %v1740 = vshrl.u32 %v1739, 7
    %v1741 = vsub.s32 0, %v1740
    %v1742 = vrot.slane %v1735, %v1741
    %v1743 = vlaneseq
    %v1744 = vshrl.u32 %v1743, 7
    %v1745 = vsub.s32 1, %v1744
    %v1746 = vrot.slane %v1735, %v1745
    %v1747 = vlaneseq
    %v1748 = vshrl.u32 %v1747, 7
    %v1749 = vsub.s32 2, %v1748
    %v1750 = vrot.slane %v1735, %v1749
    %v1751 = vlaneseq
    %v1752 = vshrl.u32 %v1751, 7
    %v1753 = vsub.s32 3, %v1752
    %v1754 = vrot.slane %v1735, %v1753
    %v1755 = vlaneseq
    %v1756 = vshrl.u32 %v1755, 7
    %v1757 = vsub.s32 4, %v1756
    %v1758 = vrot.slane %v1735, %v1757
    %v1759 = vlaneseq
    %v1760 = vshrl.u32 %v1759, 7
    %v1761 = vsub.s32 5, %v1760
    %v1762 = vrot.slane %v1735, %v1761
    %v1763 = vlaneseq
    %v1764 = vshrl.u32 %v1763, 7
    %v1765 = vsub.s32 6, %v1764
    %v1766 = vrot.slane %v1735, %v1765
    %v1767 = vlaneseq
    %v1768 = vshrl.u32 %v1767, 7
    %v1769 = vsub.s32 7, %v1768
    %v1770 = vrot.slane %v1735, %v1769
    %v1771 = vlaneseq
    %v1772 = vshrl.u32 %v1771, 7
    %v1773 = vsub.s32 0, %v1772
    %v1774 = vrot.slane %v1736, %v1773
    %v1775 = vlaneseq
    %v1776 = vshrl.u32 %v1775, 7
    %v1777 = vsub.s32 1, %v1776
    %v1778 = vrot.slane %v1736, %v1777
    %v1779 = vlaneseq
    %v1780 = vshrl.u32 %v1779, 7
    %v1781 = vsub.s32 2, %v1780
    %v1782 = vrot.slane %v1736, %v1781
    %v1783 = vlaneseq
    %v1784 = vshrl.u32 %v1783, 7
    %v1785 = vsub.s32 3, %v1784
    %v1786 = vrot.slane %v1736, %v1785
    %v1787 = vlaneseq
    %v1788 = vshrl.u32 %v1787, 7
    %v1789 = vsub.s32 4, %v1788
    %v1790 = vrot.slane %v1736, %v1789
    %v1791 = vlaneseq
    %v1792 = vshrl.u32 %v1791, 7
    %v1793 = vsub.s32 5, %v1792
    %v1794 = vrot.slane %v1736, %v1793
    %v1795 = vlaneseq
    %v1796 = vshrl.u32 %v1795, 7
    %v1797 = vsub.s32 6, %v1796
    %v1798 = vrot.slane %v1736, %v1797
    %v1799 = vlaneseq
    %v1800 = vshrl.u32 %v1799, 7
    %v1801 = vsub.s32 7, %v1800
    %v1802 = vrot.slane %v1736, %v1801
    %v1947 = vunpack.c.l.b16 %v1607
    %v1948 = vunpack.c.h.b16 %v1607
    %v1949 = vunpack.c.l.b16 %v1608
    %v1950 = vunpack.c.h.b16 %v1608
    %v1951 = vunpack.c.l.b16 %v1609
    %v1952 = vunpack.c.h.b16 %v1609
    %v1953 = vunpack.c.l.b16 %v1610
    %v1954 = vunpack.c.h.b16 %v1610
    %v1955 = vunpack.c.l.b16 %v1611
    %v1956 = vunpack.c.h.b16 %v1611
    %v1957 = vunpack.c.l.b16 %v1612
    %v1958 = vunpack.c.h.b16 %v1612
    %v1959 = vunpack.c.l.b16 %v1613
    %v1960 = vunpack.c.h.b16 %v1613
    %v1961 = vunpack.c.l.b16 %v1614
    %v1962 = vunpack.c.h.b16 %v1614
    %v1963 = vunpack.c.l.b16 %v1615
    %v1964 = vunpack.c.h.b16 %v1615
    %v1965 = vunpack.c.l.b16 %v1616
    %v1966 = vunpack.c.h.b16 %v1616
    %v1967 = vunpack.c.l.b16 %v1617
    %v1968 = vunpack.c.h.b16 %v1617
    %v1969 = vunpack.c.l.b16 %v1618
    %v1970 = vunpack.c.h.b16 %v1618
    %v1971 = vunpack.c.l.b16 %v1619
    %v1972 = vunpack.c.h.b16 %v1619
    %v1973 = vunpack.c.l.b16 %v1620
    %v1974 = vunpack.c.h.b16 %v1620
    %v1975 = vunpack.c.l.b16 %v1621
    %v1976 = vunpack.c.h.b16 %v1621
    %v1977 = vunpack.c.l.b16 %v1622
    %v1978 = vunpack.c.h.b16 %v1622
    %v1979 = vunpack.c.l.b16 %v1623
    %v1980 = vunpack.c.h.b16 %v1623
    %v1981 = vunpack.c.l.b16 %v1624
    %v1982 = vunpack.c.h.b16 %v1624
    %v1983 = vunpack.c.l.b16 %v1625
    %v1984 = vunpack.c.h.b16 %v1625
    %v1985 = vunpack.c.l.b16 %v1626
    %v1986 = vunpack.c.h.b16 %v1626
    %v1987 = vunpack.c.l.b16 %v1627
    %v1988 = vunpack.c.h.b16 %v1627
    %v1989 = vunpack.c.l.b16 %v1628
    %v1990 = vunpack.c.h.b16 %v1628
    %v1991 = vunpack.c.l.b16 %v1629
    %v1992 = vunpack.c.h.b16 %v1629
    %v1993 = vunpack.c.l.b16 %v1630
    %v1994 = vunpack.c.h.b16 %v1630
    %v1995 = vunpack.c.l.b16 %v1631
    %v1996 = vunpack.c.h.b16 %v1631
    %v1997 = vunpack.c.l.b16 %v1632
    %v1998 = vunpack.c.h.b16 %v1632
    %v1999 = vunpack.c.l.b16 %v1633
    %v2000 = vunpack.c.h.b16 %v1633
    %v2001 = vunpack.c.l.b16 %v1634
    %v2002 = vunpack.c.h.b16 %v1634
    %v2003 = vunpack.c.l.b16 %v1635
    %v2004 = vunpack.c.h.b16 %v1635
    %v2005 = vunpack.c.l.b16 %v1636
    %v2006 = vunpack.c.h.b16 %v1636
    %v2007 = vunpack.c.l.b16 %v1637
    %v2008 = vunpack.c.h.b16 %v1637
    %v2009 = vunpack.c.l.b16 %v1638
    %v2010 = vunpack.c.h.b16 %v1638
    %v2011 = vunpack.c.l.b16 %v1639
    %v2012 = vunpack.c.h.b16 %v1639
    %v2013 = vunpack.c.l.b16 %v1640
    %v2014 = vunpack.c.h.b16 %v1640
    %v2015 = vunpack.c.l.b16 %v1641
    %v2016 = vunpack.c.h.b16 %v1641
    %v2017 = vunpack.c.l.b16 %v1642
    %v2018 = vunpack.c.h.b16 %v1642
    %v2019 = vunpack.c.l.b16 %v1643
    %v2020 = vunpack.c.h.b16 %v1643
    %v2021 = vunpack.c.l.b16 %v1644
    %v2022 = vunpack.c.h.b16 %v1644
    %v2023 = vunpack.c.l.b16 %v1645
    %v2024 = vunpack.c.h.b16 %v1645
    %v2025 = vunpack.c.l.b16 %v1646
    %v2026 = vunpack.c.h.b16 %v1646
    %v2027 = vunpack.c.l.b16 %v1647
    %v2028 = vunpack.c.h.b16 %v1647
    %v2029 = vunpack.c.l.b16 %v1648
    %v2030 = vunpack.c.h.b16 %v1648
    %v2031 = vunpack.c.l.b16 %v1649
    %v2032 = vunpack.c.h.b16 %v1649
    %v2033 = vunpack.c.l.b16 %v1650
    %v2034 = vunpack.c.h.b16 %v1650
    %v2035 = vunpack.c.l.b16 %v1651
    %v2036 = vunpack.c.h.b16 %v1651
    %v2037 = vunpack.c.l.b16 %v1652
    %v2038 = vunpack.c.h.b16 %v1652
    %v2039 = vunpack.c.l.b16 %v1653
    %v2040 = vunpack.c.h.b16 %v1653
    %v2041 = vunpack.c.l.b16 %v1654
    %v2042 = vunpack.c.h.b16 %v1654
    %v2043 = vunpack.c.l.b16 %v1655
    %v2044 = vunpack.c.h.b16 %v1655
    %v2045 = vunpack.c.l.b16 %v1656
    %v2046 = vunpack.c.h.b16 %v1656
    %v2047 = vunpack.c.l.b16 %v1657
    %v2048 = vunpack.c.h.b16 %v1657
    %v2049 = vunpack.c.l.b16 %v1658
    %v2050 = vunpack.c.h.b16 %v1658
    %v2051 = vunpack.c.l.b16 %v1659
    %v2052 = vunpack.c.h.b16 %v1659
    %v2053 = vunpack.c.l.b16 %v1660
    %v2054 = vunpack.c.h.b16 %v1660
    %v2055 = vunpack.c.l.b16 %v1661
    %v2056 = vunpack.c.h.b16 %v1661
    %v2057 = vunpack.c.l.b16 %v1662
    %v2058 = vunpack.c.h.b16 %v1662
    %v2059 = vunpack.c.l.b16 %v1663
    %v2060 = vunpack.c.h.b16 %v1663
    %v2061 = vunpack.c.l.b16 %v1664
    %v2062 = vunpack.c.h.b16 %v1664
    %v2063 = vunpack.c.l.b16 %v1665
    %v2064 = vunpack.c.h.b16 %v1665
    %v2065 = vunpack.c.l.b16 %v1666
    %v2066 = vunpack.c.h.b16 %v1666
    %v2067 = vunpack.c.l.b16 %v1667
    %v2068 = vunpack.c.h.b16 %v1667
    %v2069 = vunpack.c.l.b16 %v1668
    %v2070 = vunpack.c.h.b16 %v1668
    %v2071 = vunpack.c.l.b16 %v1669
    %v2072 = vunpack.c.h.b16 %v1669
    %v2073 = vunpack.c.l.b16 %v1670
    %v2074 = vunpack.c.h.b16 %v1670
    %v2075 = vunpack.c.l.b16 %v1671
    %v2076 = vunpack.c.h.b16 %v1671
    %v2077 = vunpack.c.l.b16 %v1672
    %v2078 = vunpack.c.h.b16 %v1672
    %v2079 = vunpack.c.l.b16 %v1673
    %v2080 = vunpack.c.h.b16 %v1673
    %v2081 = vunpack.c.l.b16 %v1674
    %v2082 = vunpack.c.h.b16 %v1674
    %v2083 = vunpack.c.l.b16 %v1675
    %v2084 = vunpack.c.h.b16 %v1675
    %v2085 = vunpack.c.l.b16 %v1676
    %v2086 = vunpack.c.h.b16 %v1676
    %v2087 = vunpack.c.l.b16 %v1677
    %v2088 = vunpack.c.h.b16 %v1677
    %v2089 = vunpack.c.l.b16 %v1678
    %v2090 = vunpack.c.h.b16 %v1678
    %v2091 = vunpack.c.l.b16 %v1679
    %v2092 = vunpack.c.h.b16 %v1679
    %v2093 = vunpack.c.l.b16 %v1680
    %v2094 = vunpack.c.h.b16 %v1680
    %v2095 = vunpack.c.l.b16 %v1681
    %v2096 = vunpack.c.h.b16 %v1681
    %v2097 = vunpack.c.l.b16 %v1682
    %v2098 = vunpack.c.h.b16 %v1682
    %v2099 = vunpack.c.l.b16 %v1683
    %v2100 = vunpack.c.h.b16 %v1683
    %v2101 = vunpack.c.l.b16 %v1684
    %v2102 = vunpack.c.h.b16 %v1684
    %v2103 = vunpack.c.l.b16 %v1685
    %v2104 = vunpack.c.h.b16 %v1685
    %v2105 = vunpack.c.l.b16 %v1686
    %v2106 = vunpack.c.h.b16 %v1686
    %v2107 = vunpack.c.l.b16 %v1687
    %v2108 = vunpack.c.h.b16 %v1687
    %v2109 = vunpack.c.l.b16 %v1688
    %v2110 = vunpack.c.h.b16 %v1688
    %v2111 = vunpack.c.l.b16 %v1689
    %v2112 = vunpack.c.h.b16 %v1689
    %v2113 = vunpack.c.l.b16 %v1690
    %v2114 = vunpack.c.h.b16 %v1690
    %v2115 = vunpack.c.l.b16 %v1691
    %v2116 = vunpack.c.h.b16 %v1691
    %v2117 = vunpack.c.l.b16 %v1692
    %v2118 = vunpack.c.h.b16 %v1692
    %v2119 = vunpack.c.l.b16 %v1693
    %v2120 = vunpack.c.h.b16 %v1693
    %v2121 = vunpack.c.l.b16 %v1694
    %v2122 = vunpack.c.h.b16 %v1694
    %v2123 = vunpack.c.l.b16 %v1695
    %v2124 = vunpack.c.h.b16 %v1695
    %v2125 = vunpack.c.l.b16 %v1696
    %v2126 = vunpack.c.h.b16 %v1696
    %v2127 = vunpack.c.l.b16 %v1697
    %v2128 = vunpack.c.h.b16 %v1697
    %v2129 = vunpack.c.l.b16 %v1698
    %v2130 = vunpack.c.h.b16 %v1698
    %v2131 = vunpack.c.l.b16 %v1699
    %v2132 = vunpack.c.h.b16 %v1699
    %v2133 = vunpack.c.l.b16 %v1700
    %v2134 = vunpack.c.h.b16 %v1700
    %v2135 = vunpack.c.l.b16 %v1701
    %v2136 = vunpack.c.h.b16 %v1701
    %v2137 = vunpack.c.l.b16 %v1702
    %v2138 = vunpack.c.h.b16 %v1702
    %v2139 = vunpack.c.l.b16 %v1703
    %v2140 = vunpack.c.h.b16 %v1703
    %v2141 = vunpack.c.l.b16 %v1704
    %v2142 = vunpack.c.h.b16 %v1704
    %v2143 = vunpack.c.l.b16 %v1705
    %v2144 = vunpack.c.h.b16 %v1705
    %v2145 = vunpack.c.l.b16 %v1706
    %v2146 = vunpack.c.h.b16 %v1706
    %v2147 = vunpack.c.l.b16 %v1707
    %v2148 = vunpack.c.h.b16 %v1707
    %v2149 = vunpack.c.l.b16 %v1708
    %v2150 = vunpack.c.h.b16 %v1708
    %v2151 = vunpack.c.l.b16 %v1709
    %v2152 = vunpack.c.h.b16 %v1709
    %v2153 = vunpack.c.l.b16 %v1710
    %v2154 = vunpack.c.h.b16 %v1710
    %v2155 = vunpack.c.l.b16 %v1711
    %v2156 = vunpack.c.h.b16 %v1711
    %v2157 = vunpack.c.l.b16 %v1712
    %v2158 = vunpack.c.h.b16 %v1712
    %v2159 = vunpack.c.l.b16 %v1713
    %v2160 = vunpack.c.h.b16 %v1713
    %v2161 = vunpack.c.l.b16 %v1714
    %v2162 = vunpack.c.h.b16 %v1714
    %v2163 = vunpack.c.l.b16 %v1715
    %v2164 = vunpack.c.h.b16 %v1715
    %v2165 = vunpack.c.l.b16 %v1716
    %v2166 = vunpack.c.h.b16 %v1716
    %v2167 = vunpack.c.l.b16 %v1717
    %v2168 = vunpack.c.h.b16 %v1717
    %v2169 = vunpack.c.l.b16 %v1718
    %v2170 = vunpack.c.h.b16 %v1718
    %v2171 = vunpack.c.l.b16 %v1719
    %v2172 = vunpack.c.h.b16 %v1719
    %v2173 = vunpack.c.l.b16 %v1720
    %v2174 = vunpack.c.h.b16 %v1720
    %v2175 = vunpack.c.l.b16 %v1721
    %v2176 = vunpack.c.h.b16 %v1721
    %v2177 = vunpack.c.l.b16 %v1722
    %v2178 = vunpack.c.h.b16 %v1722
    %v2179 = vunpack.c.l.b16 %v1723
    %v2180 = vunpack.c.h.b16 %v1723
    %v2181 = vunpack.c.l.b16 %v1724
    %v2182 = vunpack.c.h.b16 %v1724
    %v2183 = vunpack.c.l.b16 %v1725
    %v2184 = vunpack.c.h.b16 %v1725
    %v2185 = vunpack.c.l.b16 %v1726
    %v2186 = vunpack.c.h.b16 %v1726
    %v2187 = vunpack.c.l.b16 %v1727
    %v2188 = vunpack.c.h.b16 %v1727
    %v2189 = vunpack.c.l.b16 %v1728
    %v2190 = vunpack.c.h.b16 %v1728
    %v2191 = vunpack.c.l.b16 %v1729
    %v2192 = vunpack.c.h.b16 %v1729
    %v2193 = vunpack.c.l.b16 %v1730
    %v2194 = vunpack.c.h.b16 %v1730
    %v2195 = vunpack.c.l.b16 %v1731
    %v2196 = vunpack.c.h.b16 %v1731
    %v2197 = vunpack.c.l.b16 %v1732
    %v2198 = vunpack.c.h.b16 %v1732
    %v2199 = vunpack.c.l.b16 %v1733
    %v2200 = vunpack.c.h.b16 %v1733
    %v2201 = vunpack.c.l.b16 %v1734
    %v2202 = vunpack.c.h.b16 %v1734
    %v2203 = vpack.c.b16 %v1963, %v1947
    %v2204 = vpack.c.b16 %v1964, %v1948
    %v2205 = vpack.c.b16 %v1965, %v1949
    %v2206 = vpack.c.b16 %v1966, %v1950
    %v2207 = vpack.c.b16 %v1967, %v1951
    %v2208 = vpack.c.b16 %v1968, %v1952
    %v2209 = vpack.c.b16 %v1969, %v1953
    %v2210 = vpack.c.b16 %v1970, %v1954
    %v2211 = vpack.c.b16 %v1971, %v1955
    %v2212 = vpack.c.b16 %v1972, %v1956
    %v2213 = vpack.c.b16 %v1973, %v1957
    %v2214 = vpack.c.b16 %v1974, %v1958
    %v2215 = vpack.c.b16 %v1975, %v1959
    %v2216 = vpack.c.b16 %v1976, %v1960
    %v2217 = vpack.c.b16 %v1977, %v1961
    %v2218 = vpack.c.b16 %v1978, %v1962
    %v2219 = vpack.c.b16 %v1995, %v1979
    %v2220 = vpack.c.b16 %v1996, %v1980
    %v2221 = vpack.c.b16 %v1997, %v1981
    %v2222 = vpack.c.b16 %v1998, %v1982
    %v2223 = vpack.c.b16 %v1999, %v1983
    %v2224 = vpack.c.b16 %v2000, %v1984
    %v2225 = vpack.c.b16 %v2001, %v1985
    %v2226 = vpack.c.b16 %v2002, %v1986
    %v2227 = vpack.c.b16 %v2003, %v1987
    %v2228 = vpack.c.b16 %v2004, %v1988
    %v2229 = vpack.c.b16 %v2005, %v1989
    %v2230 = vpack.c.b16 %v2006, %v1990
    %v2231 = vpack.c.b16 %v2007, %v1991
    %v2232 = vpack.c.b16 %v2008, %v1992
    %v2233 = vpack.c.b16 %v2009, %v1993
    %v2234 = vpack.c.b16 %v2010, %v1994
    %v2235 = vpack.c.b16 %v2027, %v2011
    %v2236 = vpack.c.b16 %v2028, %v2012
    %v2237 = vpack.c.b16 %v2029, %v2013
    %v2238 = vpack.c.b16 %v2030, %v2014
    %v2239 = vpack.c.b16 %v2031, %v2015
    %v2240 = vpack.c.b16 %v2032, %v2016
    %v2241 = vpack.c.b16 %v2033, %v2017
    %v2242 = vpack.c.b16 %v2034, %v2018
    %v2243 = vpack.c.b16 %v2035, %v2019
    %v2244 = vpack.c.b16 %v2036, %v2020
    %v2245 = vpack.c.b16 %v2037, %v2021
    %v2246 = vpack.c.b16 %v2038, %v2022
    %v2247 = vpack.c.b16 %v2039, %v2023
    %v2248 = vpack.c.b16 %v2040, %v2024
    %v2249 = vpack.c.b16 %v2041, %v2025
    %v2250 = vpack.c.b16 %v2042, %v2026
    %v2251 = vpack.c.b16 %v2059, %v2043
    %v2252 = vpack.c.b16 %v2060, %v2044
    %v2253 = vpack.c.b16 %v2061, %v2045
    %v2254 = vpack.c.b16 %v2062, %v2046
    %v2255 = vpack.c.b16 %v2063, %v2047
    %v2256 = vpack.c.b16 %v2064, %v2048
    %v2257 = vpack.c.b16 %v2065, %v2049
    %v2258 = vpack.c.b16 %v2066, %v2050
    %v2259 = vpack.c.b16 %v2067, %v2051
    %v2260 = vpack.c.b16 %v2068, %v2052
    %v2261 = vpack.c.b16 %v2069, %v2053
    %v2262 = vpack.c.b16 %v2070, %v2054
    %v2263 = vpack.c.b16 %v2071, %v2055
    %v2264 = vpack.c.b16 %v2072, %v2056
    %v2265 = vpack.c.b16 %v2073, %v2057
    %v2266 = vpack.c.b16 %v2074, %v2058
    %v2267 = vpack.c.b16 %v2091, %v2075
    %v2268 = vpack.c.b16 %v2092, %v2076
    %v2269 = vpack.c.b16 %v2093, %v2077
    %v2270 = vpack.c.b16 %v2094, %v2078
    %v2271 = vpack.c.b16 %v2095, %v2079
    %v2272 = vpack.c.b16 %v2096, %v2080
    %v2273 = vpack.c.b16 %v2097, %v2081
    %v2274 = vpack.c.b16 %v2098, %v2082
    %v2275 = vpack.c.b16 %v2099, %v2083
    %v2276 = vpack.c.b16 %v2100, %v2084
    %v2277 = vpack.c.b16 %v2101, %v2085
    %v2278 = vpack.c.b16 %v2102, %v2086
    %v2279 = vpack.c.b16 %v2103, %v2087
    %v2280 = vpack.c.b16 %v2104, %v2088
    %v2281 = vpack.c.b16 %v2105, %v2089
    %v2282 = vpack.c.b16 %v2106, %v2090
    %v2283 = vpack.c.b16 %v2123, %v2107
    %v2284 = vpack.c.b16 %v2124, %v2108
    %v2285 = vpack.c.b16 %v2125, %v2109
    %v2286 = vpack.c.b16 %v2126, %v2110
    %v2287 = vpack.c.b16 %v2127, %v2111
    %v2288 = vpack.c.b16 %v2128, %v2112
    %v2289 = vpack.c.b16 %v2129, %v2113
    %v2290 = vpack.c.b16 %v2130, %v2114
    %v2291 = vpack.c.b16 %v2131, %v2115
    %v2292 = vpack.c.b16 %v2132, %v2116
    %v2293 = vpack.c.b16 %v2133, %v2117
    %v2294 = vpack.c.b16 %v2134, %v2118
    %v2295 = vpack.c.b16 %v2135, %v2119
    %v2296 = vpack.c.b16 %v2136, %v2120
    %v2297 = vpack.c.b16 %v2137, %v2121
    %v2298 = vpack.c.b16 %v2138, %v2122
    %v2299 = vpack.c.b16 %v2155, %v2139
    %v2300 = vpack.c.b16 %v2156, %v2140
    %v2301 = vpack.c.b16 %v2157, %v2141
    %v2302 = vpack.c.b16 %v2158, %v2142
    %v2303 = vpack.c.b16 %v2159, %v2143
    %v2304 = vpack.c.b16 %v2160, %v2144
    %v2305 = vpack.c.b16 %v2161, %v2145
    %v2306 = vpack.c.b16 %v2162, %v2146
    %v2307 = vpack.c.b16 %v2163, %v2147
    %v2308 = vpack.c.b16 %v2164, %v2148
    %v2309 = vpack.c.b16 %v2165, %v2149
    %v2310 = vpack.c.b16 %v2166, %v2150
    %v2311 = vpack.c.b16 %v2167, %v2151
    %v2312 = vpack.c.b16 %v2168, %v2152
    %v2313 = vpack.c.b16 %v2169, %v2153
    %v2314 = vpack.c.b16 %v2170, %v2154
    %v2315 = vpack.c.b16 %v2187, %v2171
    %v2316 = vpack.c.b16 %v2188, %v2172
    %v2317 = vpack.c.b16 %v2189, %v2173
    %v2318 = vpack.c.b16 %v2190, %v2174
    %v2319 = vpack.c.b16 %v2191, %v2175
    %v2320 = vpack.c.b16 %v2192, %v2176
    %v2321 = vpack.c.b16 %v2193, %v2177
    %v2322 = vpack.c.b16 %v2194, %v2178
    %v2323 = vpack.c.b16 %v2195, %v2179
    %v2324 = vpack.c.b16 %v2196, %v2180
    %v2325 = vpack.c.b16 %v2197, %v2181
    %v2326 = vpack.c.b16 %v2198, %v2182
    %v2327 = vpack.c.b16 %v2199, %v2183
    %v2328 = vpack.c.b16 %v2200, %v2184
    %v2329 = vpack.c.b16 %v2201, %v2185
    %v2330 = vpack.c.b16 %v2202, %v2186
    %2459 = vmatprep.subr.bf16.mxu0 %v2316
    %2460 = vmatpush1.bf16.msra.mxu0 %v2315
    %2461 = vmatprep.subr.bf16.mxu0 %v2300
    %2462 = vmatpush1.bf16.msra.mxu0 %v2299
    %2463 = vmatprep.subr.bf16.mxu0 %v2284
    %2464 = vmatpush1.bf16.msra.mxu0 %v2283
    %2465 = vmatprep.subr.bf16.mxu0 %v2268
    %2466 = vmatpush1.bf16.msra.mxu0 %v2267
    %2467 = vmatprep.subr.bf16.mxu0 %v2252
    %2468 = vmatpush1.bf16.msra.mxu0 %v2251
    %2469 = vmatprep.subr.bf16.mxu0 %v2236
    %2470 = vmatpush1.bf16.msra.mxu0 %v2235
    %2471 = vmatprep.subr.bf16.mxu0 %v2220
    %2472 = vmatpush1.bf16.msra.mxu0 %v2219
    %2473 = vmatprep.subr.bf16.mxu0 %v2204
    %2474 = vmatpush1.bf16.msra.mxu0 %v2203
    %2475 = vmatprep.subr.bf16.mxu0 0
    %2476 = vmatpush2.bf16.msra.mxu0 0
    %2477 = vmatprep.subr.bf16.mxu0 0
    %2478 = vmatpush2.bf16.msra.mxu0 0
    %2479 = vmatprep.subr.bf16.mxu0 0
    %2480 = vmatpush2.bf16.msra.mxu0 0
    %2481 = vmatprep.subr.bf16.mxu0 0
    %2482 = vmatpush2.bf16.msra.mxu0 0
    %2483 = vmatprep.subr.bf16.mxu0 0
    %2484 = vmatpush2.bf16.msra.mxu0 0
    %2485 = vmatprep.subr.bf16.mxu0 0
    %2486 = vmatpush2.bf16.msra.mxu0 0
    %2487 = vmatprep.subr.bf16.mxu0 0
    %2488 = vmatpush2.bf16.msra.mxu0 0
    %2489 = vmatprep.subr.bf16.mxu0 0
    %2490 = vmatpush2.bf16.msra.mxu0 0
    %2491 = vmatprep.mubr.bf16.mxu0 0
    %2492 = vmatmul.mubr.bf16.gmra.mxu0 %v1606
    %v2493 = vpop.f32.mrf.mxu0
    %v2494 = vadd.f32 %v1742, %v2493
    %v2495 = vpop.f32.mrf.mxu0
    %v2496 = vadd.f32 %v1746, %v2495
    %v2497 = vpop.f32.mrf.mxu0
    %v2498 = vadd.f32 %v1742, %v2497
    %v2499 = vpop.f32.mrf.mxu0
    %v2500 = vadd.f32 %v1746, %v2499
    %2501 = vdwg.mxu0
    %2502 = vmatprep.subr.bf16.mxu0 %v2318
    %2503 = vmatpush1.bf16.msra.mxu0 %v2317
    %2504 = vmatprep.subr.bf16.mxu0 %v2302
    %2505 = vmatpush1.bf16.msra.mxu0 %v2301
    %2506 = vmatprep.subr.bf16.mxu0 %v2286
    %2507 = vmatpush1.bf16.msra.mxu0 %v2285
    %2508 = vmatprep.subr.bf16.mxu0 %v2270
    %2509 = vmatpush1.bf16.msra.mxu0 %v2269
    %2510 = vmatprep.subr.bf16.mxu0 %v2254
    %2511 = vmatpush1.bf16.msra.mxu0 %v2253
    %2512 = vmatprep.subr.bf16.mxu0 %v2238
    %2513 = vmatpush1.bf16.msra.mxu0 %v2237
    %2514 = vmatprep.subr.bf16.mxu0 %v2222
    %2515 = vmatpush1.bf16.msra.mxu0 %v2221
    %2516 = vmatprep.subr.bf16.mxu0 %v2206
    %2517 = vmatpush1.bf16.msra.mxu0 %v2205
    %2518 = vmatprep.subr.bf16.mxu0 0
    %2519 = vmatpush2.bf16.msra.mxu0 0
    %2520 = vmatprep.subr.bf16.mxu0 0
    %2521 = vmatpush2.bf16.msra.mxu0 0
    %2522 = vmatprep.subr.bf16.mxu0 0
    %2523 = vmatpush2.bf16.msra.mxu0 0
    %2524 = vmatprep.subr.bf16.mxu0 0
    %2525 = vmatpush2.bf16.msra.mxu0 0
    %2526 = vmatprep.subr.bf16.mxu0 0
    %2527 = vmatpush2.bf16.msra.mxu0 0
    %2528 = vmatprep.subr.bf16.mxu0 0
    %2529 = vmatpush2.bf16.msra.mxu0 0
    %2530 = vmatprep.subr.bf16.mxu0 0
    %2531 = vmatpush2.bf16.msra.mxu0 0
    %2532 = vmatprep.subr.bf16.mxu0 0
    %2533 = vmatpush2.bf16.msra.mxu0 0
    %2534 = vmatprep.mubr.bf16.mxu0 0
    %2535 = vmatmul.mubr.bf16.gmra.mxu0 %v1606
    %v2536 = vpop.f32.mrf.mxu0
    %v2537 = vadd.f32 %v1750, %v2536
    %v2538 = vpop.f32.mrf.mxu0
    %v2539 = vadd.f32 %v1754, %v2538
    %v2540 = vpop.f32.mrf.mxu0
    %v2541 = vadd.f32 %v1750, %v2540
    %v2542 = vpop.f32.mrf.mxu0
    %v2543 = vadd.f32 %v1754, %v2542
    %2544 = vdwg.mxu0
    %2545 = vmatprep.subr.bf16.mxu0 %v2320
    %2546 = vmatpush1.bf16.msra.mxu0 %v2319
    %2547 = vmatprep.subr.bf16.mxu0 %v2304
    %2548 = vmatpush1.bf16.msra.mxu0 %v2303
    %2549 = vmatprep.subr.bf16.mxu0 %v2288
    %2550 = vmatpush1.bf16.msra.mxu0 %v2287
    %2551 = vmatprep.subr.bf16.mxu0 %v2272
    %2552 = vmatpush1.bf16.msra.mxu0 %v2271
    %2553 = vmatprep.subr.bf16.mxu0 %v2256
    %2554 = vmatpush1.bf16.msra.mxu0 %v2255
    %2555 = vmatprep.subr.bf16.mxu0 %v2240
    %2556 = vmatpush1.bf16.msra.mxu0 %v2239
    %2557 = vmatprep.subr.bf16.mxu0 %v2224
    %2558 = vmatpush1.bf16.msra.mxu0 %v2223
    %2559 = vmatprep.subr.bf16.mxu0 %v2208
    %2560 = vmatpush1.bf16.msra.mxu0 %v2207
    %2561 = vmatprep.subr.bf16.mxu0 0
    %2562 = vmatpush2.bf16.msra.mxu0 0
    %2563 = vmatprep.subr.bf16.mxu0 0
    %2564 = vmatpush2.bf16.msra.mxu0 0
    %2565 = vmatprep.subr.bf16.mxu0 0
    %2566 = vmatpush2.bf16.msra.mxu0 0
    %2567 = vmatprep.subr.bf16.mxu0 0
    %2568 = vmatpush2.bf16.msra.mxu0 0
    %2569 = vmatprep.subr.bf16.mxu0 0
    %2570 = vmatpush2.bf16.msra.mxu0 0
    %2571 = vmatprep.subr.bf16.mxu0 0
    %2572 = vmatpush2.bf16.msra.mxu0 0
    %2573 = vmatprep.subr.bf16.mxu0 0
    %2574 = vmatpush2.bf16.msra.mxu0 0
    %2575 = vmatprep.subr.bf16.mxu0 0
    %2576 = vmatpush2.bf16.msra.mxu0 0
    %2577 = vmatprep.mubr.bf16.mxu0 0
    %2578 = vmatmul.mubr.bf16.gmra.mxu0 %v1606
    %v2579 = vpop.f32.mrf.mxu0
    %v2580 = vadd.f32 %v1758, %v2579
    %v2581 = vpop.f32.mrf.mxu0
    %v2582 = vadd.f32 %v1762, %v2581
    %v2583 = vpop.f32.mrf.mxu0
    %v2584 = vadd.f32 %v1758, %v2583
    %v2585 = vpop.f32.mrf.mxu0
    %v2586 = vadd.f32 %v1762, %v2585
    %2587 = vdwg.mxu0
    %2588 = vmatprep.subr.bf16.mxu0 %v2322
    %2589 = vmatpush1.bf16.msra.mxu0 %v2321
    %2590 = vmatprep.subr.bf16.mxu0 %v2306
    %2591 = vmatpush1.bf16.msra.mxu0 %v2305
    %2592 = vmatprep.subr.bf16.mxu0 %v2290
    %2593 = vmatpush1.bf16.msra.mxu0 %v2289
    %2594 = vmatprep.subr.bf16.mxu0 %v2274
    %2595 = vmatpush1.bf16.msra.mxu0 %v2273
    %2596 = vmatprep.subr.bf16.mxu0 %v2258
    %2597 = vmatpush1.bf16.msra.mxu0 %v2257
    %2598 = vmatprep.subr.bf16.mxu0 %v2242
    %2599 = vmatpush1.bf16.msra.mxu0 %v2241
    %2600 = vmatprep.subr.bf16.mxu0 %v2226
    %2601 = vmatpush1.bf16.msra.mxu0 %v2225
    %2602 = vmatprep.subr.bf16.mxu0 %v2210
    %2603 = vmatpush1.bf16.msra.mxu0 %v2209
    %2604 = vmatprep.subr.bf16.mxu0 0
    %2605 = vmatpush2.bf16.msra.mxu0 0
    %2606 = vmatprep.subr.bf16.mxu0 0
    %2607 = vmatpush2.bf16.msra.mxu0 0
    %2608 = vmatprep.subr.bf16.mxu0 0
    %2609 = vmatpush2.bf16.msra.mxu0 0
    %2610 = vmatprep.subr.bf16.mxu0 0
    %2611 = vmatpush2.bf16.msra.mxu0 0
    %2612 = vmatprep.subr.bf16.mxu0 0
    %2613 = vmatpush2.bf16.msra.mxu0 0
    %2614 = vmatprep.subr.bf16.mxu0 0
    %2615 = vmatpush2.bf16.msra.mxu0 0
    %2616 = vmatprep.subr.bf16.mxu0 0
    %2617 = vmatpush2.bf16.msra.mxu0 0
    %2618 = vmatprep.subr.bf16.mxu0 0
    %2619 = vmatpush2.bf16.msra.mxu0 0
    %2620 = vmatprep.mubr.bf16.mxu0 0
    %2621 = vmatmul.mubr.bf16.gmra.mxu0 %v1606
    %v2622 = vpop.f32.mrf.mxu0
    %v2623 = vadd.f32 %v1766, %v2622
    %v2624 = vpop.f32.mrf.mxu0
    %v2625 = vadd.f32 %v1770, %v2624
    %v2626 = vpop.f32.mrf.mxu0
    %v2627 = vadd.f32 %v1766, %v2626
    %v2628 = vpop.f32.mrf.mxu0
    %v2629 = vadd.f32 %v1770, %v2628
    %2630 = vdwg.mxu0
    %2631 = vmatprep.subr.bf16.mxu0 %v2324
    %2632 = vmatpush1.bf16.msra.mxu0 %v2323
    %2633 = vmatprep.subr.bf16.mxu0 %v2308
    %2634 = vmatpush1.bf16.msra.mxu0 %v2307
    %2635 = vmatprep.subr.bf16.mxu0 %v2292
    %2636 = vmatpush1.bf16.msra.mxu0 %v2291
    %2637 = vmatprep.subr.bf16.mxu0 %v2276
    %2638 = vmatpush1.bf16.msra.mxu0 %v2275
    %2639 = vmatprep.subr.bf16.mxu0 %v2260
    %2640 = vmatpush1.bf16.msra.mxu0 %v2259
    %2641 = vmatprep.subr.bf16.mxu0 %v2244
    %2642 = vmatpush1.bf16.msra.mxu0 %v2243
    %2643 = vmatprep.subr.bf16.mxu0 %v2228
    %2644 = vmatpush1.bf16.msra.mxu0 %v2227
    %2645 = vmatprep.subr.bf16.mxu0 %v2212
    %2646 = vmatpush1.bf16.msra.mxu0 %v2211
    %2647 = vmatprep.subr.bf16.mxu0 0
    %2648 = vmatpush2.bf16.msra.mxu0 0
    %2649 = vmatprep.subr.bf16.mxu0 0
    %2650 = vmatpush2.bf16.msra.mxu0 0
    %2651 = vmatprep.subr.bf16.mxu0 0
    %2652 = vmatpush2.bf16.msra.mxu0 0
    %2653 = vmatprep.subr.bf16.mxu0 0
    %2654 = vmatpush2.bf16.msra.mxu0 0
    %2655 = vmatprep.subr.bf16.mxu0 0
    %2656 = vmatpush2.bf16.msra.mxu0 0
    %2657 = vmatprep.subr.bf16.mxu0 0
    %2658 = vmatpush2.bf16.msra.mxu0 0
    %2659 = vmatprep.subr.bf16.mxu0 0
    %2660 = vmatpush2.bf16.msra.mxu0 0
    %2661 = vmatprep.subr.bf16.mxu0 0
    %2662 = vmatpush2.bf16.msra.mxu0 0
    %2663 = vmatprep.mubr.bf16.mxu0 0
    %2664 = vmatmul.mubr.bf16.gmra.mxu0 %v1606
    %v2665 = vpop.f32.mrf.mxu0
    %v2666 = vadd.f32 %v1774, %v2665
    %v2667 = vpop.f32.mrf.mxu0
    %v2668 = vadd.f32 %v1778, %v2667
    %v2669 = vpop.f32.mrf.mxu0
    %v2670 = vadd.f32 %v1774, %v2669
    %v2671 = vpop.f32.mrf.mxu0
    %v2672 = vadd.f32 %v1778, %v2671
    %2673 = vdwg.mxu0
    %2674 = vmatprep.subr.bf16.mxu0 %v2326
    %2675 = vmatpush1.bf16.msra.mxu0 %v2325
    %2676 = vmatprep.subr.bf16.mxu0 %v2310
    %2677 = vmatpush1.bf16.msra.mxu0 %v2309
    %2678 = vmatprep.subr.bf16.mxu0 %v2294
    %2679 = vmatpush1.bf16.msra.mxu0 %v2293
    %2680 = vmatprep.subr.bf16.mxu0 %v2278
    %2681 = vmatpush1.bf16.msra.mxu0 %v2277
    %2682 = vmatprep.subr.bf16.mxu0 %v2262
    %2683 = vmatpush1.bf16.msra.mxu0 %v2261
    %2684 = vmatprep.subr.bf16.mxu0 %v2246
    %2685 = vmatpush1.bf16.msra.mxu0 %v2245
    %2686 = vmatprep.subr.bf16.mxu0 %v2230
    %2687 = vmatpush1.bf16.msra.mxu0 %v2229
    %2688 = vmatprep.subr.bf16.mxu0 %v2214
    %2689 = vmatpush1.bf16.msra.mxu0 %v2213
    %2690 = vmatprep.subr.bf16.mxu0 0
    %2691 = vmatpush2.bf16.msra.mxu0 0
    %2692 = vmatprep.subr.bf16.mxu0 0
    %2693 = vmatpush2.bf16.msra.mxu0 0
    %2694 = vmatprep.subr.bf16.mxu0 0
    %2695 = vmatpush2.bf16.msra.mxu0 0
    %2696 = vmatprep.subr.bf16.mxu0 0
    %2697 = vmatpush2.bf16.msra.mxu0 0
    %2698 = vmatprep.subr.bf16.mxu0 0
    %2699 = vmatpush2.bf16.msra.mxu0 0
    %2700 = vmatprep.subr.bf16.mxu0 0
    %2701 = vmatpush2.bf16.msra.mxu0 0
    %2702 = vmatprep.subr.bf16.mxu0 0
    %2703 = vmatpush2.bf16.msra.mxu0 0
    %2704 = vmatprep.subr.bf16.mxu0 0
    %2705 = vmatpush2.bf16.msra.mxu0 0
    %2706 = vmatprep.mubr.bf16.mxu0 0
    %2707 = vmatmul.mubr.bf16.gmra.mxu0 %v1606
    %v2708 = vpop.f32.mrf.mxu0
    %v2709 = vadd.f32 %v1782, %v2708
    %v2710 = vpop.f32.mrf.mxu0
    %v2711 = vadd.f32 %v1786, %v2710
    %v2712 = vpop.f32.mrf.mxu0
    %v2713 = vadd.f32 %v1782, %v2712
    %v2714 = vpop.f32.mrf.mxu0
    %v2715 = vadd.f32 %v1786, %v2714
    %2716 = vdwg.mxu0
    %2717 = vmatprep.subr.bf16.mxu0 %v2328
    %2718 = vmatpush1.bf16.msra.mxu0 %v2327
    %2719 = vmatprep.subr.bf16.mxu0 %v2312
    %2720 = vmatpush1.bf16.msra.mxu0 %v2311
    %2721 = vmatprep.subr.bf16.mxu0 %v2296
    %2722 = vmatpush1.bf16.msra.mxu0 %v2295
    %2723 = vmatprep.subr.bf16.mxu0 %v2280
    %2724 = vmatpush1.bf16.msra.mxu0 %v2279
    %2725 = vmatprep.subr.bf16.mxu0 %v2264
    %2726 = vmatpush1.bf16.msra.mxu0 %v2263
    %2727 = vmatprep.subr.bf16.mxu0 %v2248
    %2728 = vmatpush1.bf16.msra.mxu0 %v2247
    %2729 = vmatprep.subr.bf16.mxu0 %v2232
    %2730 = vmatpush1.bf16.msra.mxu0 %v2231
    %2731 = vmatprep.subr.bf16.mxu0 %v2216
    %2732 = vmatpush1.bf16.msra.mxu0 %v2215
    %2733 = vmatprep.subr.bf16.mxu0 0
    %2734 = vmatpush2.bf16.msra.mxu0 0
    %2735 = vmatprep.subr.bf16.mxu0 0
    %2736 = vmatpush2.bf16.msra.mxu0 0
    %2737 = vmatprep.subr.bf16.mxu0 0
    %2738 = vmatpush2.bf16.msra.mxu0 0
    %2739 = vmatprep.subr.bf16.mxu0 0
    %2740 = vmatpush2.bf16.msra.mxu0 0
    %2741 = vmatprep.subr.bf16.mxu0 0
    %2742 = vmatpush2.bf16.msra.mxu0 0
    %2743 = vmatprep.subr.bf16.mxu0 0
    %2744 = vmatpush2.bf16.msra.mxu0 0
    %2745 = vmatprep.subr.bf16.mxu0 0
    %2746 = vmatpush2.bf16.msra.mxu0 0
    %2747 = vmatprep.subr.bf16.mxu0 0
    %2748 = vmatpush2.bf16.msra.mxu0 0
    %2749 = vmatprep.mubr.bf16.mxu0 0
    %2750 = vmatmul.mubr.bf16.gmra.mxu0 %v1606
    %v2751 = vpop.f32.mrf.mxu0
    %v2752 = vadd.f32 %v1790, %v2751
    %v2753 = vpop.f32.mrf.mxu0
    %v2754 = vadd.f32 %v1794, %v2753
    %v2755 = vpop.f32.mrf.mxu0
    %v2756 = vadd.f32 %v1790, %v2755
    %v2757 = vpop.f32.mrf.mxu0
    %v2758 = vadd.f32 %v1794, %v2757
    %2759 = vdwg.mxu0
    %2760 = vmatprep.subr.bf16.mxu0 %v2330
    %2761 = vmatpush1.bf16.msra.mxu0 %v2329
    %2762 = vmatprep.subr.bf16.mxu0 %v2314
    %2763 = vmatpush1.bf16.msra.mxu0 %v2313
    %2764 = vmatprep.subr.bf16.mxu0 %v2298
    %2765 = vmatpush1.bf16.msra.mxu0 %v2297
    %2766 = vmatprep.subr.bf16.mxu0 %v2282
    %2767 = vmatpush1.bf16.msra.mxu0 %v2281
    %2768 = vmatprep.subr.bf16.mxu0 %v2266
    %2769 = vmatpush1.bf16.msra.mxu0 %v2265
    %2770 = vmatprep.subr.bf16.mxu0 %v2250
    %2771 = vmatpush1.bf16.msra.mxu0 %v2249
    %2772 = vmatprep.subr.bf16.mxu0 %v2234
    %2773 = vmatpush1.bf16.msra.mxu0 %v2233
    %2774 = vmatprep.subr.bf16.mxu0 %v2218
    %2775 = vmatpush1.bf16.msra.mxu0 %v2217
    %2776 = vmatprep.subr.bf16.mxu0 0
    %2777 = vmatpush2.bf16.msra.mxu0 0
    %2778 = vmatprep.subr.bf16.mxu0 0
    %2779 = vmatpush2.bf16.msra.mxu0 0
    %2780 = vmatprep.subr.bf16.mxu0 0
    %2781 = vmatpush2.bf16.msra.mxu0 0
    %2782 = vmatprep.subr.bf16.mxu0 0
    %2783 = vmatpush2.bf16.msra.mxu0 0
    %2784 = vmatprep.subr.bf16.mxu0 0
    %2785 = vmatpush2.bf16.msra.mxu0 0
    %2786 = vmatprep.subr.bf16.mxu0 0
    %2787 = vmatpush2.bf16.msra.mxu0 0
    %2788 = vmatprep.subr.bf16.mxu0 0
    %2789 = vmatpush2.bf16.msra.mxu0 0
    %2790 = vmatprep.subr.bf16.mxu0 0
    %2791 = vmatpush2.bf16.msra.mxu0 0
    %2792 = vmatprep.mubr.bf16.mxu0 0
    %2793 = vmatmul.mubr.bf16.gmra.mxu0 %v1606
    %v2794 = vpop.f32.mrf.mxu0
    %v2795 = vadd.f32 %v1798, %v2794
    %v2796 = vpop.f32.mrf.mxu0
    %v2797 = vadd.f32 %v1802, %v2796
    %v2798 = vpop.f32.mrf.mxu0
    %v2799 = vadd.f32 %v1798, %v2798
    %v2800 = vpop.f32.mrf.mxu0
    %v2801 = vadd.f32 %v1802, %v2800
    %2802 = vdwg.mxu0
    %v2803 = vmax.f32 %v2494, 0.0
    %v2804 = vmax.f32 %v2496, 0.0
    %v2805 = vmax.f32 %v2537, 0.0
    %v2806 = vmax.f32 %v2539, 0.0
    %v2807 = vmax.f32 %v2580, 0.0
    %v2808 = vmax.f32 %v2582, 0.0
    %v2809 = vmax.f32 %v2623, 0.0
    %v2810 = vmax.f32 %v2625, 0.0
    %v2811 = vmax.f32 %v2666, 0.0
    %v2812 = vmax.f32 %v2668, 0.0
    %v2813 = vmax.f32 %v2709, 0.0
    %v2814 = vmax.f32 %v2711, 0.0
    %v2815 = vmax.f32 %v2752, 0.0
    %v2816 = vmax.f32 %v2754, 0.0
    %v2817 = vmax.f32 %v2795, 0.0
    %v2818 = vmax.f32 %v2797, 0.0
    %v2819 = vmax.f32 %v2498, 0.0
    %v2820 = vmax.f32 %v2500, 0.0
    %v2821 = vmax.f32 %v2541, 0.0
    %v2822 = vmax.f32 %v2543, 0.0
    %v2823 = vmax.f32 %v2584, 0.0
    %v2824 = vmax.f32 %v2586, 0.0
    %v2825 = vmax.f32 %v2627, 0.0
    %v2826 = vmax.f32 %v2629, 0.0
    %v2827 = vmax.f32 %v2670, 0.0
    %v2828 = vmax.f32 %v2672, 0.0
    %v2829 = vmax.f32 %v2713, 0.0
    %v2830 = vmax.f32 %v2715, 0.0
    %v2831 = vmax.f32 %v2756, 0.0
    %v2832 = vmax.f32 %v2758, 0.0
    %v2833 = vmax.f32 %v2799, 0.0
    %v2834 = vmax.f32 %v2801, 0.0
    %v2835 = vpack.c.bf16 %v2819, %v2803
    %v2836 = vpack.c.bf16 %v2820, %v2804
    %v2837 = vpack.c.bf16 %v2821, %v2805
    %v2838 = vpack.c.bf16 %v2822, %v2806
    %v2839 = vpack.c.bf16 %v2823, %v2807
    %v2840 = vpack.c.bf16 %v2824, %v2808
    %v2841 = vpack.c.bf16 %v2825, %v2809
    %v2842 = vpack.c.bf16 %v2826, %v2810
    %v2843 = vpack.c.bf16 %v2827, %v2811
    %v2844 = vpack.c.bf16 %v2828, %v2812
    %v2845 = vpack.c.bf16 %v2829, %v2813
    %v2846 = vpack.c.bf16 %v2830, %v2814
    %v2847 = vpack.c.bf16 %v2831, %v2815
    %v2848 = vpack.c.bf16 %v2832, %v2816
    %v2849 = vpack.c.bf16 %v2833, %v2817
    %v2850 = vpack.c.bf16 %v2834, %v2818
    %v2851 = vld [vmem:[#allocation16] sm:$0xf]
    %v2852 = vld [vmem:[#allocation16 + $0x4] sm:$0xf]
    %v2853 = vld [vmem:[#allocation16 + $0x8] sm:$0xf]
    %v2854 = vld [vmem:[#allocation16 + $0xc] sm:$0xf]
    %v2855 = vld [vmem:[#allocation16 + $0x10] sm:$0xf]
    %v2856 = vld [vmem:[#allocation16 + $0x14] sm:$0xf]
    %v2857 = vld [vmem:[#allocation16 + $0x18] sm:$0xf]
    %v2858 = vld [vmem:[#allocation16 + $0x1c] sm:$0xf]
    %v2859 = vld [vmem:[#allocation16 + $0x20] sm:$0xf]
    %v2860 = vld [vmem:[#allocation16 + $0x24] sm:$0xf]
    %v2861 = vld [vmem:[#allocation16 + $0x28] sm:$0xf]
    %v2862 = vld [vmem:[#allocation16 + $0x2c] sm:$0xf]
    %v2863 = vld [vmem:[#allocation16 + $0x30] sm:$0xf]
    %v2864 = vld [vmem:[#allocation16 + $0x34] sm:$0xf]
    %v2865 = vld [vmem:[#allocation16 + $0x38] sm:$0xf]
    %v2866 = vld [vmem:[#allocation16 + $0x3c] sm:$0xf]
    %v2867 = vld [vmem:[#allocation16 + $0x40] sm:$0xf]
    %v2868 = vld [vmem:[#allocation16 + $0x44] sm:$0xf]
    %v2869 = vld [vmem:[#allocation16 + $0x48] sm:$0xf]
    %v2870 = vld [vmem:[#allocation16 + $0x4c] sm:$0xf]
    %v2871 = vld [vmem:[#allocation16 + $0x50] sm:$0xf]
    %v2872 = vld [vmem:[#allocation16 + $0x54] sm:$0xf]
    %v2873 = vld [vmem:[#allocation16 + $0x58] sm:$0xf]
    %v2874 = vld [vmem:[#allocation16 + $0x5c] sm:$0xf]
    %v2875 = vld [vmem:[#allocation16 + $0x60] sm:$0xf]
    %v2876 = vld [vmem:[#allocation16 + $0x64] sm:$0xf]
    %v2877 = vld [vmem:[#allocation16 + $0x68] sm:$0xf]
    %v2878 = vld [vmem:[#allocation16 + $0x6c] sm:$0xf]
    %v2879 = vld [vmem:[#allocation16 + $0x70] sm:$0xf]
    %v2880 = vld [vmem:[#allocation16 + $0x74] sm:$0xf]
    %v2881 = vld [vmem:[#allocation16 + $0x78] sm:$0xf]
    %v2882 = vld [vmem:[#allocation16 + $0x7c] sm:$0xf]
    %v2883 = vld [vmem:[#allocation16 + $0x80] sm:$0xf]
    %v2884 = vld [vmem:[#allocation16 + $0x84] sm:$0xf]
    %v2885 = vld [vmem:[#allocation16 + $0x88] sm:$0xf]
    %v2886 = vld [vmem:[#allocation16 + $0x8c] sm:$0xf]
    %v2887 = vld [vmem:[#allocation16 + $0x90] sm:$0xf]
    %v2888 = vld [vmem:[#allocation16 + $0x94] sm:$0xf]
    %v2889 = vld [vmem:[#allocation16 + $0x98] sm:$0xf]
    %v2890 = vld [vmem:[#allocation16 + $0x9c] sm:$0xf]
    %v2891 = vld [vmem:[#allocation16 + $0xa0] sm:$0xf]
    %v2892 = vld [vmem:[#allocation16 + $0xa4] sm:$0xf]
    %v2893 = vld [vmem:[#allocation16 + $0xa8] sm:$0xf]
    %v2894 = vld [vmem:[#allocation16 + $0xac] sm:$0xf]
    %v2895 = vld [vmem:[#allocation16 + $0xb0] sm:$0xf]
    %v2896 = vld [vmem:[#allocation16 + $0xb4] sm:$0xf]
    %v2897 = vld [vmem:[#allocation16 + $0xb8] sm:$0xf]
    %v2898 = vld [vmem:[#allocation16 + $0xbc] sm:$0xf]
    %v2899 = vld [vmem:[#allocation16 + $0xc0] sm:$0xf]
    %v2900 = vld [vmem:[#allocation16 + $0xc4] sm:$0xf]
    %v2901 = vld [vmem:[#allocation16 + $0xc8] sm:$0xf]
    %v2902 = vld [vmem:[#allocation16 + $0xcc] sm:$0xf]
    %v2903 = vld [vmem:[#allocation16 + $0xd0] sm:$0xf]
    %v2904 = vld [vmem:[#allocation16 + $0xd4] sm:$0xf]
    %v2905 = vld [vmem:[#allocation16 + $0xd8] sm:$0xf]
    %v2906 = vld [vmem:[#allocation16 + $0xdc] sm:$0xf]
    %v2907 = vld [vmem:[#allocation16 + $0xe0] sm:$0xf]
    %v2908 = vld [vmem:[#allocation16 + $0xe4] sm:$0xf]
    %v2909 = vld [vmem:[#allocation16 + $0xe8] sm:$0xf]
    %v2910 = vld [vmem:[#allocation16 + $0xec] sm:$0xf]
    %v2911 = vld [vmem:[#allocation16 + $0xf0] sm:$0xf]
    %v2912 = vld [vmem:[#allocation16 + $0xf4] sm:$0xf]
    %v2913 = vld [vmem:[#allocation16 + $0xf8] sm:$0xf]
    %v2914 = vld [vmem:[#allocation16 + $0xfc] sm:$0xf]
    %v2915 = vld [vmem:[#allocation16 + $0x100] sm:$0xf]
    %v2916 = vld [vmem:[#allocation16 + $0x104] sm:$0xf]
    %v2917 = vld [vmem:[#allocation16 + $0x108] sm:$0xf]
    %v2918 = vld [vmem:[#allocation16 + $0x10c] sm:$0xf]
    %v2919 = vld [vmem:[#allocation16 + $0x110] sm:$0xf]
    %v2920 = vld [vmem:[#allocation16 + $0x114] sm:$0xf]
    %v2921 = vld [vmem:[#allocation16 + $0x118] sm:$0xf]
    %v2922 = vld [vmem:[#allocation16 + $0x11c] sm:$0xf]
    %v2923 = vld [vmem:[#allocation16 + $0x120] sm:$0xf]
    %v2924 = vld [vmem:[#allocation16 + $0x124] sm:$0xf]
    %v2925 = vld [vmem:[#allocation16 + $0x128] sm:$0xf]
    %v2926 = vld [vmem:[#allocation16 + $0x12c] sm:$0xf]
    %v2927 = vld [vmem:[#allocation16 + $0x130] sm:$0xf]
    %v2928 = vld [vmem:[#allocation16 + $0x134] sm:$0xf]
    %v2929 = vld [vmem:[#allocation16 + $0x138] sm:$0xf]
    %v2930 = vld [vmem:[#allocation16 + $0x13c] sm:$0xf]
    %v2931 = vld [vmem:[#allocation16 + $0x140] sm:$0xf]
    %v2932 = vld [vmem:[#allocation16 + $0x144] sm:$0xf]
    %v2933 = vld [vmem:[#allocation16 + $0x148] sm:$0xf]
    %v2934 = vld [vmem:[#allocation16 + $0x14c] sm:$0xf]
    %v2935 = vld [vmem:[#allocation16 + $0x150] sm:$0xf]
    %v2936 = vld [vmem:[#allocation16 + $0x154] sm:$0xf]
    %v2937 = vld [vmem:[#allocation16 + $0x158] sm:$0xf]
    %v2938 = vld [vmem:[#allocation16 + $0x15c] sm:$0xf]
    %v2939 = vld [vmem:[#allocation16 + $0x160] sm:$0xf]
    %v2940 = vld [vmem:[#allocation16 + $0x164] sm:$0xf]
    %v2941 = vld [vmem:[#allocation16 + $0x168] sm:$0xf]
    %v2942 = vld [vmem:[#allocation16 + $0x16c] sm:$0xf]
    %v2943 = vld [vmem:[#allocation16 + $0x170] sm:$0xf]
    %v2944 = vld [vmem:[#allocation16 + $0x174] sm:$0xf]
    %v2945 = vld [vmem:[#allocation16 + $0x178] sm:$0xf]
    %v2946 = vld [vmem:[#allocation16 + $0x17c] sm:$0xf]
    %v2947 = vld [vmem:[#allocation16 + $0x180] sm:$0xf]
    %v2948 = vld [vmem:[#allocation16 + $0x184] sm:$0xf]
    %v2949 = vld [vmem:[#allocation16 + $0x188] sm:$0xf]
    %v2950 = vld [vmem:[#allocation16 + $0x18c] sm:$0xf]
    %v2951 = vld [vmem:[#allocation16 + $0x190] sm:$0xf]
    %v2952 = vld [vmem:[#allocation16 + $0x194] sm:$0xf]
    %v2953 = vld [vmem:[#allocation16 + $0x198] sm:$0xf]
    %v2954 = vld [vmem:[#allocation16 + $0x19c] sm:$0xf]
    %v2955 = vld [vmem:[#allocation16 + $0x1a0] sm:$0xf]
    %v2956 = vld [vmem:[#allocation16 + $0x1a4] sm:$0xf]
    %v2957 = vld [vmem:[#allocation16 + $0x1a8] sm:$0xf]
    %v2958 = vld [vmem:[#allocation16 + $0x1ac] sm:$0xf]
    %v2959 = vld [vmem:[#allocation16 + $0x1b0] sm:$0xf]
    %v2960 = vld [vmem:[#allocation16 + $0x1b4] sm:$0xf]
    %v2961 = vld [vmem:[#allocation16 + $0x1b8] sm:$0xf]
    %v2962 = vld [vmem:[#allocation16 + $0x1bc] sm:$0xf]
    %v2963 = vld [vmem:[#allocation16 + $0x1c0] sm:$0xf]
    %v2964 = vld [vmem:[#allocation16 + $0x1c4] sm:$0xf]
    %v2965 = vld [vmem:[#allocation16 + $0x1c8] sm:$0xf]
    %v2966 = vld [vmem:[#allocation16 + $0x1cc] sm:$0xf]
    %v2967 = vld [vmem:[#allocation16 + $0x1d0] sm:$0xf]
    %v2968 = vld [vmem:[#allocation16 + $0x1d4] sm:$0xf]
    %v2969 = vld [vmem:[#allocation16 + $0x1d8] sm:$0xf]
    %v2970 = vld [vmem:[#allocation16 + $0x1dc] sm:$0xf]
    %v2971 = vld [vmem:[#allocation16 + $0x1e0] sm:$0xf]
    %v2972 = vld [vmem:[#allocation16 + $0x1e4] sm:$0xf]
    %v2973 = vld [vmem:[#allocation16 + $0x1e8] sm:$0xf]
    %v2974 = vld [vmem:[#allocation16 + $0x1ec] sm:$0xf]
    %v2975 = vld [vmem:[#allocation16 + $0x1f0] sm:$0xf]
    %v2976 = vld [vmem:[#allocation16 + $0x1f4] sm:$0xf]
    %v2977 = vld [vmem:[#allocation16 + $0x1f8] sm:$0xf]
    %v2978 = vld [vmem:[#allocation16 + $0x1fc] sm:$0xf]
    %v2979 = vld [vmem:[#allocation16 + $0x200] sm:$0xf]
    %v2980 = vld [vmem:[#allocation16 + $0x204] sm:$0xf]
    %v2981 = vld [vmem:[#allocation16 + $0x208] sm:$0xf]
    %v2982 = vld [vmem:[#allocation16 + $0x20c] sm:$0xf]
    %v2983 = vld [vmem:[#allocation16 + $0x210] sm:$0xf]
    %v2984 = vld [vmem:[#allocation16 + $0x214] sm:$0xf]
    %v2985 = vld [vmem:[#allocation16 + $0x218] sm:$0xf]
    %v2986 = vld [vmem:[#allocation16 + $0x21c] sm:$0xf]
    %v2987 = vld [vmem:[#allocation16 + $0x220] sm:$0xf]
    %v2988 = vld [vmem:[#allocation16 + $0x224] sm:$0xf]
    %v2989 = vld [vmem:[#allocation16 + $0x228] sm:$0xf]
    %v2990 = vld [vmem:[#allocation16 + $0x22c] sm:$0xf]
    %v2991 = vld [vmem:[#allocation16 + $0x230] sm:$0xf]
    %v2992 = vld [vmem:[#allocation16 + $0x234] sm:$0xf]
    %v2993 = vld [vmem:[#allocation16 + $0x238] sm:$0xf]
    %v2994 = vld [vmem:[#allocation16 + $0x23c] sm:$0xf]
    %v2995 = vld [vmem:[#allocation16 + $0x240] sm:$0xf]
    %v2996 = vld [vmem:[#allocation16 + $0x244] sm:$0xf]
    %v2997 = vld [vmem:[#allocation16 + $0x248] sm:$0xf]
    %v2998 = vld [vmem:[#allocation16 + $0x24c] sm:$0xf]
    %v2999 = vld [vmem:[#allocation16 + $0x250] sm:$0xf]
    %v3000 = vld [vmem:[#allocation16 + $0x254] sm:$0xf]
    %v3001 = vld [vmem:[#allocation16 + $0x258] sm:$0xf]
    %v3002 = vld [vmem:[#allocation16 + $0x25c] sm:$0xf]
    %v3003 = vld [vmem:[#allocation16 + $0x260] sm:$0xf]
    %v3004 = vld [vmem:[#allocation16 + $0x264] sm:$0xf]
    %v3005 = vld [vmem:[#allocation16 + $0x268] sm:$0xf]
    %v3006 = vld [vmem:[#allocation16 + $0x26c] sm:$0xf]
    %v3007 = vld [vmem:[#allocation16 + $0x270] sm:$0xf]
    %v3008 = vld [vmem:[#allocation16 + $0x274] sm:$0xf]
    %v3009 = vld [vmem:[#allocation16 + $0x278] sm:$0xf]
    %v3010 = vld [vmem:[#allocation16 + $0x27c] sm:$0xf]
    %v3011 = vld [vmem:[#allocation16 + $0x280] sm:$0xf]
    %v3012 = vld [vmem:[#allocation16 + $0x284] sm:$0xf]
    %v3013 = vld [vmem:[#allocation16 + $0x288] sm:$0xf]
    %v3014 = vld [vmem:[#allocation16 + $0x28c] sm:$0xf]
    %v3015 = vld [vmem:[#allocation16 + $0x290] sm:$0xf]
    %v3016 = vld [vmem:[#allocation16 + $0x294] sm:$0xf]
    %v3017 = vld [vmem:[#allocation16 + $0x298] sm:$0xf]
    %v3018 = vld [vmem:[#allocation16 + $0x29c] sm:$0xf]
    %v3019 = vld [vmem:[#allocation16 + $0x2a0] sm:$0xf]
    %v3020 = vld [vmem:[#allocation16 + $0x2a4] sm:$0xf]
    %v3021 = vld [vmem:[#allocation16 + $0x2a8] sm:$0xf]
    %v3022 = vld [vmem:[#allocation16 + $0x2ac] sm:$0xf]
    %v3023 = vld [vmem:[#allocation16 + $0x2b0] sm:$0xf]
    %v3024 = vld [vmem:[#allocation16 + $0x2b4] sm:$0xf]
    %v3025 = vld [vmem:[#allocation16 + $0x2b8] sm:$0xf]
    %v3026 = vld [vmem:[#allocation16 + $0x2bc] sm:$0xf]
    %v3027 = vld [vmem:[#allocation16 + $0x2c0] sm:$0xf]
    %v3028 = vld [vmem:[#allocation16 + $0x2c4] sm:$0xf]
    %v3029 = vld [vmem:[#allocation16 + $0x2c8] sm:$0xf]
    %v3030 = vld [vmem:[#allocation16 + $0x2cc] sm:$0xf]
    %v3031 = vld [vmem:[#allocation16 + $0x2d0] sm:$0xf]
    %v3032 = vld [vmem:[#allocation16 + $0x2d4] sm:$0xf]
    %v3033 = vld [vmem:[#allocation16 + $0x2d8] sm:$0xf]
    %v3034 = vld [vmem:[#allocation16 + $0x2dc] sm:$0xf]
    %v3035 = vld [vmem:[#allocation16 + $0x2e0] sm:$0xf]
    %v3036 = vld [vmem:[#allocation16 + $0x2e4] sm:$0xf]
    %v3037 = vld [vmem:[#allocation16 + $0x2e8] sm:$0xf]
    %v3038 = vld [vmem:[#allocation16 + $0x2ec] sm:$0xf]
    %v3039 = vld [vmem:[#allocation16 + $0x2f0] sm:$0xf]
    %v3040 = vld [vmem:[#allocation16 + $0x2f4] sm:$0xf]
    %v3041 = vld [vmem:[#allocation16 + $0x2f8] sm:$0xf]
    %v3042 = vld [vmem:[#allocation16 + $0x2fc] sm:$0xf]
    %v3043 = vld [vmem:[#allocation16 + $0x300] sm:$0xf]
    %v3044 = vld [vmem:[#allocation16 + $0x304] sm:$0xf]
    %v3045 = vld [vmem:[#allocation16 + $0x308] sm:$0xf]
    %v3046 = vld [vmem:[#allocation16 + $0x30c] sm:$0xf]
    %v3047 = vld [vmem:[#allocation16 + $0x310] sm:$0xf]
    %v3048 = vld [vmem:[#allocation16 + $0x314] sm:$0xf]
    %v3049 = vld [vmem:[#allocation16 + $0x318] sm:$0xf]
    %v3050 = vld [vmem:[#allocation16 + $0x31c] sm:$0xf]
    %v3051 = vld [vmem:[#allocation16 + $0x320] sm:$0xf]
    %v3052 = vld [vmem:[#allocation16 + $0x324] sm:$0xf]
    %v3053 = vld [vmem:[#allocation16 + $0x328] sm:$0xf]
    %v3054 = vld [vmem:[#allocation16 + $0x32c] sm:$0xf]
    %v3055 = vld [vmem:[#allocation16 + $0x330] sm:$0xf]
    %v3056 = vld [vmem:[#allocation16 + $0x334] sm:$0xf]
    %v3057 = vld [vmem:[#allocation16 + $0x338] sm:$0xf]
    %v3058 = vld [vmem:[#allocation16 + $0x33c] sm:$0xf]
    %v3059 = vld [vmem:[#allocation16 + $0x340] sm:$0xf]
    %v3060 = vld [vmem:[#allocation16 + $0x344] sm:$0xf]
    %v3061 = vld [vmem:[#allocation16 + $0x348] sm:$0xf]
    %v3062 = vld [vmem:[#allocation16 + $0x34c] sm:$0xf]
    %v3063 = vld [vmem:[#allocation16 + $0x350] sm:$0xf]
    %v3064 = vld [vmem:[#allocation16 + $0x354] sm:$0xf]
    %v3065 = vld [vmem:[#allocation16 + $0x358] sm:$0xf]
    %v3066 = vld [vmem:[#allocation16 + $0x35c] sm:$0xf]
    %v3067 = vld [vmem:[#allocation16 + $0x360] sm:$0xf]
    %v3068 = vld [vmem:[#allocation16 + $0x364] sm:$0xf]
    %v3069 = vld [vmem:[#allocation16 + $0x368] sm:$0xf]
    %v3070 = vld [vmem:[#allocation16 + $0x36c] sm:$0xf]
    %v3071 = vld [vmem:[#allocation16 + $0x370] sm:$0xf]
    %v3072 = vld [vmem:[#allocation16 + $0x374] sm:$0xf]
    %v3073 = vld [vmem:[#allocation16 + $0x378] sm:$0xf]
    %v3074 = vld [vmem:[#allocation16 + $0x37c] sm:$0xf]
    %v3075 = vld [vmem:[#allocation16 + $0x380] sm:$0xf]
    %v3076 = vld [vmem:[#allocation16 + $0x384] sm:$0xf]
    %v3077 = vld [vmem:[#allocation16 + $0x388] sm:$0xf]
    %v3078 = vld [vmem:[#allocation16 + $0x38c] sm:$0xf]
    %v3079 = vld [vmem:[#allocation16 + $0x390] sm:$0xf]
    %v3080 = vld [vmem:[#allocation16 + $0x394] sm:$0xf]
    %v3081 = vld [vmem:[#allocation16 + $0x398] sm:$0xf]
    %v3082 = vld [vmem:[#allocation16 + $0x39c] sm:$0xf]
    %v3083 = vld [vmem:[#allocation16 + $0x3a0] sm:$0xf]
    %v3084 = vld [vmem:[#allocation16 + $0x3a4] sm:$0xf]
    %v3085 = vld [vmem:[#allocation16 + $0x3a8] sm:$0xf]
    %v3086 = vld [vmem:[#allocation16 + $0x3ac] sm:$0xf]
    %v3087 = vld [vmem:[#allocation16 + $0x3b0] sm:$0xf]
    %v3088 = vld [vmem:[#allocation16 + $0x3b4] sm:$0xf]
    %v3089 = vld [vmem:[#allocation16 + $0x3b8] sm:$0xf]
    %v3090 = vld [vmem:[#allocation16 + $0x3bc] sm:$0xf]
    %v3091 = vld [vmem:[#allocation16 + $0x3c0] sm:$0xf]
    %v3092 = vld [vmem:[#allocation16 + $0x3c4] sm:$0xf]
    %v3093 = vld [vmem:[#allocation16 + $0x3c8] sm:$0xf]
    %v3094 = vld [vmem:[#allocation16 + $0x3cc] sm:$0xf]
    %v3095 = vld [vmem:[#allocation16 + $0x3d0] sm:$0xf]
    %v3096 = vld [vmem:[#allocation16 + $0x3d4] sm:$0xf]
    %v3097 = vld [vmem:[#allocation16 + $0x3d8] sm:$0xf]
    %v3098 = vld [vmem:[#allocation16 + $0x3dc] sm:$0xf]
    %v3099 = vld [vmem:[#allocation16 + $0x3e0] sm:$0xf]
    %v3100 = vld [vmem:[#allocation16 + $0x3e4] sm:$0xf]
    %v3101 = vld [vmem:[#allocation16 + $0x3e8] sm:$0xf]
    %v3102 = vld [vmem:[#allocation16 + $0x3ec] sm:$0xf]
    %v3103 = vld [vmem:[#allocation16 + $0x3f0] sm:$0xf]
    %v3104 = vld [vmem:[#allocation16 + $0x3f4] sm:$0xf]
    %v3105 = vld [vmem:[#allocation16 + $0x3f8] sm:$0xf]
    %v3106 = vld [vmem:[#allocation16 + $0x3fc] sm:$0xf]
    %v3107 = vld [vmem:[%s12] sm:$0x1]
    %v3109 = vlaneseq
    %v3110 = vshrl.u32 %v3109, 7
    %v3111 = vsub.s32 0, %v3110
    %v3112 = vrot.slane %v3107, %v3111
    %v3370 = vunpack.c.l.b16 %v2851
    %v3371 = vunpack.c.l.b16 %v2852
    %v3372 = vunpack.c.l.b16 %v2853
    %v3373 = vunpack.c.l.b16 %v2854
    %v3374 = vunpack.c.l.b16 %v2855
    %v3375 = vunpack.c.l.b16 %v2856
    %v3376 = vunpack.c.l.b16 %v2857
    %v3377 = vunpack.c.l.b16 %v2858
    %v3378 = vunpack.c.l.b16 %v2859
    %v3379 = vunpack.c.l.b16 %v2860
    %v3380 = vunpack.c.l.b16 %v2861
    %v3381 = vunpack.c.l.b16 %v2862
    %v3382 = vunpack.c.l.b16 %v2863
    %v3383 = vunpack.c.l.b16 %v2864
    %v3384 = vunpack.c.l.b16 %v2865
    %v3385 = vunpack.c.l.b16 %v2866
    %v3386 = vunpack.c.l.b16 %v2867
    %v3387 = vunpack.c.l.b16 %v2868
    %v3388 = vunpack.c.l.b16 %v2869
    %v3389 = vunpack.c.l.b16 %v2870
    %v3390 = vunpack.c.l.b16 %v2871
    %v3391 = vunpack.c.l.b16 %v2872
    %v3392 = vunpack.c.l.b16 %v2873
    %v3393 = vunpack.c.l.b16 %v2874
    %v3394 = vunpack.c.l.b16 %v2875
    %v3395 = vunpack.c.l.b16 %v2876
    %v3396 = vunpack.c.l.b16 %v2877
    %v3397 = vunpack.c.l.b16 %v2878
    %v3398 = vunpack.c.l.b16 %v2879
    %v3399 = vunpack.c.l.b16 %v2880
    %v3400 = vunpack.c.l.b16 %v2881
    %v3401 = vunpack.c.l.b16 %v2882
    %v3402 = vunpack.c.l.b16 %v2883
    %v3403 = vunpack.c.l.b16 %v2884
    %v3404 = vunpack.c.l.b16 %v2885
    %v3405 = vunpack.c.l.b16 %v2886
    %v3406 = vunpack.c.l.b16 %v2887
    %v3407 = vunpack.c.l.b16 %v2888
    %v3408 = vunpack.c.l.b16 %v2889
    %v3409 = vunpack.c.l.b16 %v2890
    %v3410 = vunpack.c.l.b16 %v2891
    %v3411 = vunpack.c.l.b16 %v2892
    %v3412 = vunpack.c.l.b16 %v2893
    %v3413 = vunpack.c.l.b16 %v2894
    %v3414 = vunpack.c.l.b16 %v2895
    %v3415 = vunpack.c.l.b16 %v2896
    %v3416 = vunpack.c.l.b16 %v2897
    %v3417 = vunpack.c.l.b16 %v2898
    %v3418 = vunpack.c.l.b16 %v2899
    %v3419 = vunpack.c.l.b16 %v2900
    %v3420 = vunpack.c.l.b16 %v2901
    %v3421 = vunpack.c.l.b16 %v2902
    %v3422 = vunpack.c.l.b16 %v2903
    %v3423 = vunpack.c.l.b16 %v2904
    %v3424 = vunpack.c.l.b16 %v2905
    %v3425 = vunpack.c.l.b16 %v2906
    %v3426 = vunpack.c.l.b16 %v2907
    %v3427 = vunpack.c.l.b16 %v2908
    %v3428 = vunpack.c.l.b16 %v2909
    %v3429 = vunpack.c.l.b16 %v2910
    %v3430 = vunpack.c.l.b16 %v2911
    %v3431 = vunpack.c.l.b16 %v2912
    %v3432 = vunpack.c.l.b16 %v2913
    %v3433 = vunpack.c.l.b16 %v2914
    %v3434 = vunpack.c.l.b16 %v2915
    %v3435 = vunpack.c.l.b16 %v2916
    %v3436 = vunpack.c.l.b16 %v2917
    %v3437 = vunpack.c.l.b16 %v2918
    %v3438 = vunpack.c.l.b16 %v2919
    %v3439 = vunpack.c.l.b16 %v2920
    %v3440 = vunpack.c.l.b16 %v2921
    %v3441 = vunpack.c.l.b16 %v2922
    %v3442 = vunpack.c.l.b16 %v2923
    %v3443 = vunpack.c.l.b16 %v2924
    %v3444 = vunpack.c.l.b16 %v2925
    %v3445 = vunpack.c.l.b16 %v2926
    %v3446 = vunpack.c.l.b16 %v2927
    %v3447 = vunpack.c.l.b16 %v2928
    %v3448 = vunpack.c.l.b16 %v2929
    %v3449 = vunpack.c.l.b16 %v2930
    %v3450 = vunpack.c.l.b16 %v2931
    %v3451 = vunpack.c.l.b16 %v2932
    %v3452 = vunpack.c.l.b16 %v2933
    %v3453 = vunpack.c.l.b16 %v2934
    %v3454 = vunpack.c.l.b16 %v2935
    %v3455 = vunpack.c.l.b16 %v2936
    %v3456 = vunpack.c.l.b16 %v2937
    %v3457 = vunpack.c.l.b16 %v2938
    %v3458 = vunpack.c.l.b16 %v2939
    %v3459 = vunpack.c.l.b16 %v2940
    %v3460 = vunpack.c.l.b16 %v2941
    %v3461 = vunpack.c.l.b16 %v2942
    %v3462 = vunpack.c.l.b16 %v2943
    %v3463 = vunpack.c.l.b16 %v2944
    %v3464 = vunpack.c.l.b16 %v2945
    %v3465 = vunpack.c.l.b16 %v2946
    %v3466 = vunpack.c.l.b16 %v2947
    %v3467 = vunpack.c.l.b16 %v2948
    %v3468 = vunpack.c.l.b16 %v2949
    %v3469 = vunpack.c.l.b16 %v2950
    %v3470 = vunpack.c.l.b16 %v2951
    %v3471 = vunpack.c.l.b16 %v2952
    %v3472 = vunpack.c.l.b16 %v2953
    %v3473 = vunpack.c.l.b16 %v2954
    %v3474 = vunpack.c.l.b16 %v2955
    %v3475 = vunpack.c.l.b16 %v2956
    %v3476 = vunpack.c.l.b16 %v2957
    %v3477 = vunpack.c.l.b16 %v2958
    %v3478 = vunpack.c.l.b16 %v2959
    %v3479 = vunpack.c.l.b16 %v2960
    %v3480 = vunpack.c.l.b16 %v2961
    %v3481 = vunpack.c.l.b16 %v2962
    %v3482 = vunpack.c.l.b16 %v2963
    %v3483 = vunpack.c.l.b16 %v2964
    %v3484 = vunpack.c.l.b16 %v2965
    %v3485 = vunpack.c.l.b16 %v2966
    %v3486 = vunpack.c.l.b16 %v2967
    %v3487 = vunpack.c.l.b16 %v2968
    %v3488 = vunpack.c.l.b16 %v2969
    %v3489 = vunpack.c.l.b16 %v2970
    %v3490 = vunpack.c.l.b16 %v2971
    %v3491 = vunpack.c.l.b16 %v2972
    %v3492 = vunpack.c.l.b16 %v2973
    %v3493 = vunpack.c.l.b16 %v2974
    %v3494 = vunpack.c.l.b16 %v2975
    %v3495 = vunpack.c.l.b16 %v2976
    %v3496 = vunpack.c.l.b16 %v2977
    %v3497 = vunpack.c.l.b16 %v2978
    %v3498 = vunpack.c.l.b16 %v2979
    %v3499 = vunpack.c.l.b16 %v2980
    %v3500 = vunpack.c.l.b16 %v2981
    %v3501 = vunpack.c.l.b16 %v2982
    %v3502 = vunpack.c.l.b16 %v2983
    %v3503 = vunpack.c.l.b16 %v2984
    %v3504 = vunpack.c.l.b16 %v2985
    %v3505 = vunpack.c.l.b16 %v2986
    %v3506 = vunpack.c.l.b16 %v2987
    %v3507 = vunpack.c.l.b16 %v2988
    %v3508 = vunpack.c.l.b16 %v2989
    %v3509 = vunpack.c.l.b16 %v2990
    %v3510 = vunpack.c.l.b16 %v2991
    %v3511 = vunpack.c.l.b16 %v2992
    %v3512 = vunpack.c.l.b16 %v2993
    %v3513 = vunpack.c.l.b16 %v2994
    %v3514 = vunpack.c.l.b16 %v2995
    %v3515 = vunpack.c.l.b16 %v2996
    %v3516 = vunpack.c.l.b16 %v2997
    %v3517 = vunpack.c.l.b16 %v2998
    %v3518 = vunpack.c.l.b16 %v2999
    %v3519 = vunpack.c.l.b16 %v3000
    %v3520 = vunpack.c.l.b16 %v3001
    %v3521 = vunpack.c.l.b16 %v3002
    %v3522 = vunpack.c.l.b16 %v3003
    %v3523 = vunpack.c.l.b16 %v3004
    %v3524 = vunpack.c.l.b16 %v3005
    %v3525 = vunpack.c.l.b16 %v3006
    %v3526 = vunpack.c.l.b16 %v3007
    %v3527 = vunpack.c.l.b16 %v3008
    %v3528 = vunpack.c.l.b16 %v3009
    %v3529 = vunpack.c.l.b16 %v3010
    %v3530 = vunpack.c.l.b16 %v3011
    %v3531 = vunpack.c.l.b16 %v3012
    %v3532 = vunpack.c.l.b16 %v3013
    %v3533 = vunpack.c.l.b16 %v3014
    %v3534 = vunpack.c.l.b16 %v3015
    %v3535 = vunpack.c.l.b16 %v3016
    %v3536 = vunpack.c.l.b16 %v3017
    %v3537 = vunpack.c.l.b16 %v3018
    %v3538 = vunpack.c.l.b16 %v3019
    %v3539 = vunpack.c.l.b16 %v3020
    %v3540 = vunpack.c.l.b16 %v3021
    %v3541 = vunpack.c.l.b16 %v3022
    %v3542 = vunpack.c.l.b16 %v3023
    %v3543 = vunpack.c.l.b16 %v3024
    %v3544 = vunpack.c.l.b16 %v3025
    %v3545 = vunpack.c.l.b16 %v3026
    %v3546 = vunpack.c.l.b16 %v3027
    %v3547 = vunpack.c.l.b16 %v3028
    %v3548 = vunpack.c.l.b16 %v3029
    %v3549 = vunpack.c.l.b16 %v3030
    %v3550 = vunpack.c.l.b16 %v3031
    %v3551 = vunpack.c.l.b16 %v3032
    %v3552 = vunpack.c.l.b16 %v3033
    %v3553 = vunpack.c.l.b16 %v3034
    %v3554 = vunpack.c.l.b16 %v3035
    %v3555 = vunpack.c.l.b16 %v3036
    %v3556 = vunpack.c.l.b16 %v3037
    %v3557 = vunpack.c.l.b16 %v3038
    %v3558 = vunpack.c.l.b16 %v3039
    %v3559 = vunpack.c.l.b16 %v3040
    %v3560 = vunpack.c.l.b16 %v3041
    %v3561 = vunpack.c.l.b16 %v3042
    %v3562 = vunpack.c.l.b16 %v3043
    %v3563 = vunpack.c.l.b16 %v3044
    %v3564 = vunpack.c.l.b16 %v3045
    %v3565 = vunpack.c.l.b16 %v3046
    %v3566 = vunpack.c.l.b16 %v3047
    %v3567 = vunpack.c.l.b16 %v3048
    %v3568 = vunpack.c.l.b16 %v3049
    %v3569 = vunpack.c.l.b16 %v3050
    %v3570 = vunpack.c.l.b16 %v3051
    %v3571 = vunpack.c.l.b16 %v3052
    %v3572 = vunpack.c.l.b16 %v3053
    %v3573 = vunpack.c.l.b16 %v3054
    %v3574 = vunpack.c.l.b16 %v3055
    %v3575 = vunpack.c.l.b16 %v3056
    %v3576 = vunpack.c.l.b16 %v3057
    %v3577 = vunpack.c.l.b16 %v3058
    %v3578 = vunpack.c.l.b16 %v3059
    %v3579 = vunpack.c.l.b16 %v3060
    %v3580 = vunpack.c.l.b16 %v3061
    %v3581 = vunpack.c.l.b16 %v3062
    %v3582 = vunpack.c.l.b16 %v3063
    %v3583 = vunpack.c.l.b16 %v3064
    %v3584 = vunpack.c.l.b16 %v3065
    %v3585 = vunpack.c.l.b16 %v3066
    %v3586 = vunpack.c.l.b16 %v3067
    %v3587 = vunpack.c.l.b16 %v3068
    %v3588 = vunpack.c.l.b16 %v3069
    %v3589 = vunpack.c.l.b16 %v3070
    %v3590 = vunpack.c.l.b16 %v3071
    %v3591 = vunpack.c.l.b16 %v3072
    %v3592 = vunpack.c.l.b16 %v3073
    %v3593 = vunpack.c.l.b16 %v3074
    %v3594 = vunpack.c.l.b16 %v3075
    %v3595 = vunpack.c.l.b16 %v3076
    %v3596 = vunpack.c.l.b16 %v3077
    %v3597 = vunpack.c.l.b16 %v3078
    %v3598 = vunpack.c.l.b16 %v3079
    %v3599 = vunpack.c.l.b16 %v3080
    %v3600 = vunpack.c.l.b16 %v3081
    %v3601 = vunpack.c.l.b16 %v3082
    %v3602 = vunpack.c.l.b16 %v3083
    %v3603 = vunpack.c.l.b16 %v3084
    %v3604 = vunpack.c.l.b16 %v3085
    %v3605 = vunpack.c.l.b16 %v3086
    %v3606 = vunpack.c.l.b16 %v3087
    %v3607 = vunpack.c.l.b16 %v3088
    %v3608 = vunpack.c.l.b16 %v3089
    %v3609 = vunpack.c.l.b16 %v3090
    %v3610 = vunpack.c.l.b16 %v3091
    %v3611 = vunpack.c.l.b16 %v3092
    %v3612 = vunpack.c.l.b16 %v3093
    %v3613 = vunpack.c.l.b16 %v3094
    %v3614 = vunpack.c.l.b16 %v3095
    %v3615 = vunpack.c.l.b16 %v3096
    %v3616 = vunpack.c.l.b16 %v3097
    %v3617 = vunpack.c.l.b16 %v3098
    %v3618 = vunpack.c.l.b16 %v3099
    %v3619 = vunpack.c.l.b16 %v3100
    %v3620 = vunpack.c.l.b16 %v3101
    %v3621 = vunpack.c.l.b16 %v3102
    %v3622 = vunpack.c.l.b16 %v3103
    %v3623 = vunpack.c.l.b16 %v3104
    %v3624 = vunpack.c.l.b16 %v3105
    %v3625 = vunpack.c.l.b16 %v3106
    %v3626 = vpack.c.b16 %v3371, %v3370
    %v3627 = vpack.c.b16 %v3373, %v3372
    %v3628 = vpack.c.b16 %v3375, %v3374
    %v3629 = vpack.c.b16 %v3377, %v3376
    %v3630 = vpack.c.b16 %v3379, %v3378
    %v3631 = vpack.c.b16 %v3381, %v3380
    %v3632 = vpack.c.b16 %v3383, %v3382
    %v3633 = vpack.c.b16 %v3385, %v3384
    %v3634 = vpack.c.b16 %v3387, %v3386
    %v3635 = vpack.c.b16 %v3389, %v3388
    %v3636 = vpack.c.b16 %v3391, %v3390
    %v3637 = vpack.c.b16 %v3393, %v3392
    %v3638 = vpack.c.b16 %v3395, %v3394
    %v3639 = vpack.c.b16 %v3397, %v3396
    %v3640 = vpack.c.b16 %v3399, %v3398
    %v3641 = vpack.c.b16 %v3401, %v3400
    %v3642 = vpack.c.b16 %v3403, %v3402
    %v3643 = vpack.c.b16 %v3405, %v3404
    %v3644 = vpack.c.b16 %v3407, %v3406
    %v3645 = vpack.c.b16 %v3409, %v3408
    %v3646 = vpack.c.b16 %v3411, %v3410
    %v3647 = vpack.c.b16 %v3413, %v3412
    %v3648 = vpack.c.b16 %v3415, %v3414
    %v3649 = vpack.c.b16 %v3417, %v3416
    %v3650 = vpack.c.b16 %v3419, %v3418
    %v3651 = vpack.c.b16 %v3421, %v3420
    %v3652 = vpack.c.b16 %v3423, %v3422
    %v3653 = vpack.c.b16 %v3425, %v3424
    %v3654 = vpack.c.b16 %v3427, %v3426
    %v3655 = vpack.c.b16 %v3429, %v3428
    %v3656 = vpack.c.b16 %v3431, %v3430
    %v3657 = vpack.c.b16 %v3433, %v3432
    %v3658 = vpack.c.b16 %v3435, %v3434
    %v3659 = vpack.c.b16 %v3437, %v3436
    %v3660 = vpack.c.b16 %v3439, %v3438
    %v3661 = vpack.c.b16 %v3441, %v3440
    %v3662 = vpack.c.b16 %v3443, %v3442
    %v3663 = vpack.c.b16 %v3445, %v3444
    %v3664 = vpack.c.b16 %v3447, %v3446
    %v3665 = vpack.c.b16 %v3449, %v3448
    %v3666 = vpack.c.b16 %v3451, %v3450
    %v3667 = vpack.c.b16 %v3453, %v3452
    %v3668 = vpack.c.b16 %v3455, %v3454
    %v3669 = vpack.c.b16 %v3457, %v3456
    %v3670 = vpack.c.b16 %v3459, %v3458
    %v3671 = vpack.c.b16 %v3461, %v3460
    %v3672 = vpack.c.b16 %v3463, %v3462
    %v3673 = vpack.c.b16 %v3465, %v3464
    %v3674 = vpack.c.b16 %v3467, %v3466
    %v3675 = vpack.c.b16 %v3469, %v3468
    %v3676 = vpack.c.b16 %v3471, %v3470
    %v3677 = vpack.c.b16 %v3473, %v3472
    %v3678 = vpack.c.b16 %v3475, %v3474
    %v3679 = vpack.c.b16 %v3477, %v3476
    %v3680 = vpack.c.b16 %v3479, %v3478
    %v3681 = vpack.c.b16 %v3481, %v3480
    %v3682 = vpack.c.b16 %v3483, %v3482
    %v3683 = vpack.c.b16 %v3485, %v3484
    %v3684 = vpack.c.b16 %v3487, %v3486
    %v3685 = vpack.c.b16 %v3489, %v3488
    %v3686 = vpack.c.b16 %v3491, %v3490
    %v3687 = vpack.c.b16 %v3493, %v3492
    %v3688 = vpack.c.b16 %v3495, %v3494
    %v3689 = vpack.c.b16 %v3497, %v3496
    %v3690 = vpack.c.b16 %v3499, %v3498
    %v3691 = vpack.c.b16 %v3501, %v3500
    %v3692 = vpack.c.b16 %v3503, %v3502
    %v3693 = vpack.c.b16 %v3505, %v3504
    %v3694 = vpack.c.b16 %v3507, %v3506
    %v3695 = vpack.c.b16 %v3509, %v3508
    %v3696 = vpack.c.b16 %v3511, %v3510
    %v3697 = vpack.c.b16 %v3513, %v3512
    %v3698 = vpack.c.b16 %v3515, %v3514
    %v3699 = vpack.c.b16 %v3517, %v3516
    %v3700 = vpack.c.b16 %v3519, %v3518
    %v3701 = vpack.c.b16 %v3521, %v3520
    %v3702 = vpack.c.b16 %v3523, %v3522
    %v3703 = vpack.c.b16 %v3525, %v3524
    %v3704 = vpack.c.b16 %v3527, %v3526
    %v3705 = vpack.c.b16 %v3529, %v3528
    %v3706 = vpack.c.b16 %v3531, %v3530
    %v3707 = vpack.c.b16 %v3533, %v3532
    %v3708 = vpack.c.b16 %v3535, %v3534
    %v3709 = vpack.c.b16 %v3537, %v3536
    %v3710 = vpack.c.b16 %v3539, %v3538
    %v3711 = vpack.c.b16 %v3541, %v3540
    %v3712 = vpack.c.b16 %v3543, %v3542
    %v3713 = vpack.c.b16 %v3545, %v3544
    %v3714 = vpack.c.b16 %v3547, %v3546
    %v3715 = vpack.c.b16 %v3549, %v3548
    %v3716 = vpack.c.b16 %v3551, %v3550
    %v3717 = vpack.c.b16 %v3553, %v3552
    %v3718 = vpack.c.b16 %v3555, %v3554
    %v3719 = vpack.c.b16 %v3557, %v3556
    %v3720 = vpack.c.b16 %v3559, %v3558
    %v3721 = vpack.c.b16 %v3561, %v3560
    %v3722 = vpack.c.b16 %v3563, %v3562
    %v3723 = vpack.c.b16 %v3565, %v3564
    %v3724 = vpack.c.b16 %v3567, %v3566
    %v3725 = vpack.c.b16 %v3569, %v3568
    %v3726 = vpack.c.b16 %v3571, %v3570
    %v3727 = vpack.c.b16 %v3573, %v3572
    %v3728 = vpack.c.b16 %v3575, %v3574
    %v3729 = vpack.c.b16 %v3577, %v3576
    %v3730 = vpack.c.b16 %v3579, %v3578
    %v3731 = vpack.c.b16 %v3581, %v3580
    %v3732 = vpack.c.b16 %v3583, %v3582
    %v3733 = vpack.c.b16 %v3585, %v3584
    %v3734 = vpack.c.b16 %v3587, %v3586
    %v3735 = vpack.c.b16 %v3589, %v3588
    %v3736 = vpack.c.b16 %v3591, %v3590
    %v3737 = vpack.c.b16 %v3593, %v3592
    %v3738 = vpack.c.b16 %v3595, %v3594
    %v3739 = vpack.c.b16 %v3597, %v3596
    %v3740 = vpack.c.b16 %v3599, %v3598
    %v3741 = vpack.c.b16 %v3601, %v3600
    %v3742 = vpack.c.b16 %v3603, %v3602
    %v3743 = vpack.c.b16 %v3605, %v3604
    %v3744 = vpack.c.b16 %v3607, %v3606
    %v3745 = vpack.c.b16 %v3609, %v3608
    %v3746 = vpack.c.b16 %v3611, %v3610
    %v3747 = vpack.c.b16 %v3613, %v3612
    %v3748 = vpack.c.b16 %v3615, %v3614
    %v3749 = vpack.c.b16 %v3617, %v3616
    %v3750 = vpack.c.b16 %v3619, %v3618
    %v3751 = vpack.c.b16 %v3621, %v3620
    %v3752 = vpack.c.b16 %v3623, %v3622
    %v3753 = vpack.c.b16 %v3625, %v3624
    %3882 = vmatprep.subr.bf16.mxu0 0
    %3883 = vmatpush1.bf16.msra.mxu0 %v3633
    %3884 = vmatprep.subr.bf16.mxu0 0
    %3885 = vmatpush1.bf16.msra.mxu0 %v3632
    %3886 = vmatprep.subr.bf16.mxu0 0
    %3887 = vmatpush1.bf16.msra.mxu0 %v3631
    %3888 = vmatprep.subr.bf16.mxu0 0
    %3889 = vmatpush1.bf16.msra.mxu0 %v3630
    %3890 = vmatprep.subr.bf16.mxu0 0
    %3891 = vmatpush1.bf16.msra.mxu0 %v3629
    %3892 = vmatprep.subr.bf16.mxu0 0
    %3893 = vmatpush1.bf16.msra.mxu0 %v3628
    %3894 = vmatprep.subr.bf16.mxu0 0
    %3895 = vmatpush1.bf16.msra.mxu0 %v3627
    %3896 = vmatprep.subr.bf16.mxu0 0
    %3897 = vmatpush1.bf16.msra.mxu0 %v3626
    %3898 = vmatprep.subr.bf16.mxu0 0
    %3899 = vmatpush2.bf16.msra.mxu0 %v3641
    %3900 = vmatprep.subr.bf16.mxu0 0
    %3901 = vmatpush2.bf16.msra.mxu0 %v3640
    %3902 = vmatprep.subr.bf16.mxu0 0
    %3903 = vmatpush2.bf16.msra.mxu0 %v3639
    %3904 = vmatprep.subr.bf16.mxu0 0
    %3905 = vmatpush2.bf16.msra.mxu0 %v3638
    %3906 = vmatprep.subr.bf16.mxu0 0
    %3907 = vmatpush2.bf16.msra.mxu0 %v3637
    %3908 = vmatprep.subr.bf16.mxu0 0
    %3909 = vmatpush2.bf16.msra.mxu0 %v3636
    %3910 = vmatprep.subr.bf16.mxu0 0
    %3911 = vmatpush2.bf16.msra.mxu0 %v3635
    %3912 = vmatprep.subr.bf16.mxu0 0
    %3913 = vmatpush2.bf16.msra.mxu0 %v3634
    %3914 = vmatprep.mubr.bf16.mxu0 %v2836
    %3915 = vmatmul.mubr.bf16.gmra.mxu0 %v2835
    %v3916 = vpop.f32.mrf.mxu0
    %v3917 = vadd.f32 %v3112, %v3916
    %v3918 = vpop.f32.mrf.mxu0
    %v3919 = vpop.f32.mrf.mxu0
    %v3920 = vadd.f32 %v3112, %v3919
    %v3921 = vpop.f32.mrf.mxu0
    %3922 = vdwg.mxu0
    %3923 = vmatprep.subr.bf16.mxu0 0
    %3924 = vmatpush1.bf16.msra.mxu0 %v3649
    %3925 = vmatprep.subr.bf16.mxu0 0
    %3926 = vmatpush1.bf16.msra.mxu0 %v3648
    %3927 = vmatprep.subr.bf16.mxu0 0
    %3928 = vmatpush1.bf16.msra.mxu0 %v3647
    %3929 = vmatprep.subr.bf16.mxu0 0
    %3930 = vmatpush1.bf16.msra.mxu0 %v3646
    %3931 = vmatprep.subr.bf16.mxu0 0
    %3932 = vmatpush1.bf16.msra.mxu0 %v3645
    %3933 = vmatprep.subr.bf16.mxu0 0
    %3934 = vmatpush1.bf16.msra.mxu0 %v3644
    %3935 = vmatprep.subr.bf16.mxu0 0
    %3936 = vmatpush1.bf16.msra.mxu0 %v3643
    %3937 = vmatprep.subr.bf16.mxu0 0
    %3938 = vmatpush1.bf16.msra.mxu0 %v3642
    %3939 = vmatprep.subr.bf16.mxu0 0
    %3940 = vmatpush2.bf16.msra.mxu0 %v3657
    %3941 = vmatprep.subr.bf16.mxu0 0
    %3942 = vmatpush2.bf16.msra.mxu0 %v3656
    %3943 = vmatprep.subr.bf16.mxu0 0
    %3944 = vmatpush2.bf16.msra.mxu0 %v3655
    %3945 = vmatprep.subr.bf16.mxu0 0
    %3946 = vmatpush2.bf16.msra.mxu0 %v3654
    %3947 = vmatprep.subr.bf16.mxu0 0
    %3948 = vmatpush2.bf16.msra.mxu0 %v3653
    %3949 = vmatprep.subr.bf16.mxu0 0
    %3950 = vmatpush2.bf16.msra.mxu0 %v3652
    %3951 = vmatprep.subr.bf16.mxu0 0
    %3952 = vmatpush2.bf16.msra.mxu0 %v3651
    %3953 = vmatprep.subr.bf16.mxu0 0
    %3954 = vmatpush2.bf16.msra.mxu0 %v3650
    %3955 = vmatprep.mubr.bf16.mxu0 %v2838
    %3956 = vmatmul.mubr.bf16.gmra.mxu0 %v2837
    %v3957 = vpop.f32.mrf.mxu0
    %v3958 = vadd.f32 %v3917, %v3957
    %v3959 = vpop.f32.mrf.mxu0
    %v3960 = vpop.f32.mrf.mxu0
    %v3961 = vadd.f32 %v3920, %v3960
    %v3962 = vpop.f32.mrf.mxu0
    %3963 = vdwg.mxu0
    %3964 = vmatprep.subr.bf16.mxu0 0
    %3965 = vmatpush1.bf16.msra.mxu0 %v3665
    %3966 = vmatprep.subr.bf16.mxu0 0
    %3967 = vmatpush1.bf16.msra.mxu0 %v3664
    %3968 = vmatprep.subr.bf16.mxu0 0
    %3969 = vmatpush1.bf16.msra.mxu0 %v3663
    %3970 = vmatprep.subr.bf16.mxu0 0
    %3971 = vmatpush1.bf16.msra.mxu0 %v3662
    %3972 = vmatprep.subr.bf16.mxu0 0
    %3973 = vmatpush1.bf16.msra.mxu0 %v3661
    %3974 = vmatprep.subr.bf16.mxu0 0
    %3975 = vmatpush1.bf16.msra.mxu0 %v3660
    %3976 = vmatprep.subr.bf16.mxu0 0
    %3977 = vmatpush1.bf16.msra.mxu0 %v3659
    %3978 = vmatprep.subr.bf16.mxu0 0
    %3979 = vmatpush1.bf16.msra.mxu0 %v3658
    %3980 = vmatprep.subr.bf16.mxu0 0
    %3981 = vmatpush2.bf16.msra.mxu0 %v3673
    %3982 = vmatprep.subr.bf16.mxu0 0
    %3983 = vmatpush2.bf16.msra.mxu0 %v3672
    %3984 = vmatprep.subr.bf16.mxu0 0
    %3985 = vmatpush2.bf16.msra.mxu0 %v3671
    %3986 = vmatprep.subr.bf16.mxu0 0
    %3987 = vmatpush2.bf16.msra.mxu0 %v3670
    %3988 = vmatprep.subr.bf16.mxu0 0
    %3989 = vmatpush2.bf16.msra.mxu0 %v3669
    %3990 = vmatprep.subr.bf16.mxu0 0
    %3991 = vmatpush2.bf16.msra.mxu0 %v3668
    %3992 = vmatprep.subr.bf16.mxu0 0
    %3993 = vmatpush2.bf16.msra.mxu0 %v3667
    %3994 = vmatprep.subr.bf16.mxu0 0
    %3995 = vmatpush2.bf16.msra.mxu0 %v3666
    %3996 = vmatprep.mubr.bf16.mxu0 %v2840
    %3997 = vmatmul.mubr.bf16.gmra.mxu0 %v2839
    %v3998 = vpop.f32.mrf.mxu0
    %v3999 = vadd.f32 %v3958, %v3998
    %v4000 = vpop.f32.mrf.mxu0
    %v4001 = vpop.f32.mrf.mxu0
    %v4002 = vadd.f32 %v3961, %v4001
    %v4003 = vpop.f32.mrf.mxu0
    %4004 = vdwg.mxu0
    %4005 = vmatprep.subr.bf16.mxu0 0
    %4006 = vmatpush1.bf16.msra.mxu0 %v3681
    %4007 = vmatprep.subr.bf16.mxu0 0
    %4008 = vmatpush1.bf16.msra.mxu0 %v3680
    %4009 = vmatprep.subr.bf16.mxu0 0
    %4010 = vmatpush1.bf16.msra.mxu0 %v3679
    %4011 = vmatprep.subr.bf16.mxu0 0
    %4012 = vmatpush1.bf16.msra.mxu0 %v3678
    %4013 = vmatprep.subr.bf16.mxu0 0
    %4014 = vmatpush1.bf16.msra.mxu0 %v3677
    %4015 = vmatprep.subr.bf16.mxu0 0
    %4016 = vmatpush1.bf16.msra.mxu0 %v3676
    %4017 = vmatprep.subr.bf16.mxu0 0
    %4018 = vmatpush1.bf16.msra.mxu0 %v3675
    %4019 = vmatprep.subr.bf16.mxu0 0
    %4020 = vmatpush1.bf16.msra.mxu0 %v3674
    %4021 = vmatprep.subr.bf16.mxu0 0
    %4022 = vmatpush2.bf16.msra.mxu0 %v3689
    %4023 = vmatprep.subr.bf16.mxu0 0
    %4024 = vmatpush2.bf16.msra.mxu0 %v3688
    %4025 = vmatprep.subr.bf16.mxu0 0
    %4026 = vmatpush2.bf16.msra.mxu0 %v3687
    %4027 = vmatprep.subr.bf16.mxu0 0
    %4028 = vmatpush2.bf16.msra.mxu0 %v3686
    %4029 = vmatprep.subr.bf16.mxu0 0
    %4030 = vmatpush2.bf16.msra.mxu0 %v3685
    %4031 = vmatprep.subr.bf16.mxu0 0
    %4032 = vmatpush2.bf16.msra.mxu0 %v3684
    %4033 = vmatprep.subr.bf16.mxu0 0
    %4034 = vmatpush2.bf16.msra.mxu0 %v3683
    %4035 = vmatprep.subr.bf16.mxu0 0
    %4036 = vmatpush2.bf16.msra.mxu0 %v3682
    %4037 = vmatprep.mubr.bf16.mxu0 %v2842
    %4038 = vmatmul.mubr.bf16.gmra.mxu0 %v2841
    %v4039 = vpop.f32.mrf.mxu0
    %v4040 = vadd.f32 %v3999, %v4039
    %v4041 = vpop.f32.mrf.mxu0
    %v4042 = vpop.f32.mrf.mxu0
    %v4043 = vadd.f32 %v4002, %v4042
    %v4044 = vpop.f32.mrf.mxu0
    %4045 = vdwg.mxu0
    %4046 = vmatprep.subr.bf16.mxu0 0
    %4047 = vmatpush1.bf16.msra.mxu0 %v3697
    %4048 = vmatprep.subr.bf16.mxu0 0
    %4049 = vmatpush1.bf16.msra.mxu0 %v3696
    %4050 = vmatprep.subr.bf16.mxu0 0
    %4051 = vmatpush1.bf16.msra.mxu0 %v3695
    %4052 = vmatprep.subr.bf16.mxu0 0
    %4053 = vmatpush1.bf16.msra.mxu0 %v3694
    %4054 = vmatprep.subr.bf16.mxu0 0
    %4055 = vmatpush1.bf16.msra.mxu0 %v3693
    %4056 = vmatprep.subr.bf16.mxu0 0
    %4057 = vmatpush1.bf16.msra.mxu0 %v3692
    %4058 = vmatprep.subr.bf16.mxu0 0
    %4059 = vmatpush1.bf16.msra.mxu0 %v3691
    %4060 = vmatprep.subr.bf16.mxu0 0
    %4061 = vmatpush1.bf16.msra.mxu0 %v3690
    %4062 = vmatprep.subr.bf16.mxu0 0
    %4063 = vmatpush2.bf16.msra.mxu0 %v3705
    %4064 = vmatprep.subr.bf16.mxu0 0
    %4065 = vmatpush2.bf16.msra.mxu0 %v3704
    %4066 = vmatprep.subr.bf16.mxu0 0
    %4067 = vmatpush2.bf16.msra.mxu0 %v3703
    %4068 = vmatprep.subr.bf16.mxu0 0
    %4069 = vmatpush2.bf16.msra.mxu0 %v3702
    %4070 = vmatprep.subr.bf16.mxu0 0
    %4071 = vmatpush2.bf16.msra.mxu0 %v3701
    %4072 = vmatprep.subr.bf16.mxu0 0
    %4073 = vmatpush2.bf16.msra.mxu0 %v3700
    %4074 = vmatprep.subr.bf16.mxu0 0
    %4075 = vmatpush2.bf16.msra.mxu0 %v3699
    %4076 = vmatprep.subr.bf16.mxu0 0
    %4077 = vmatpush2.bf16.msra.mxu0 %v3698
    %4078 = vmatprep.mubr.bf16.mxu0 %v2844
    %4079 = vmatmul.mubr.bf16.gmra.mxu0 %v2843
    %v4080 = vpop.f32.mrf.mxu0
    %v4081 = vadd.f32 %v4040, %v4080
    %v4082 = vpop.f32.mrf.mxu0
    %v4083 = vpop.f32.mrf.mxu0
    %v4084 = vadd.f32 %v4043, %v4083
    %v4085 = vpop.f32.mrf.mxu0
    %4086 = vdwg.mxu0
    %4087 = vmatprep.subr.bf16.mxu0 0
    %4088 = vmatpush1.bf16.msra.mxu0 %v3713
    %4089 = vmatprep.subr.bf16.mxu0 0
    %4090 = vmatpush1.bf16.msra.mxu0 %v3712
    %4091 = vmatprep.subr.bf16.mxu0 0
    %4092 = vmatpush1.bf16.msra.mxu0 %v3711
    %4093 = vmatprep.subr.bf16.mxu0 0
    %4094 = vmatpush1.bf16.msra.mxu0 %v3710
    %4095 = vmatprep.subr.bf16.mxu0 0
    %4096 = vmatpush1.bf16.msra.mxu0 %v3709
    %4097 = vmatprep.subr.bf16.mxu0 0
    %4098 = vmatpush1.bf16.msra.mxu0 %v3708
    %4099 = vmatprep.subr.bf16.mxu0 0
    %4100 = vmatpush1.bf16.msra.mxu0 %v3707
    %4101 = vmatprep.subr.bf16.mxu0 0
    %4102 = vmatpush1.bf16.msra.mxu0 %v3706
    %4103 = vmatprep.subr.bf16.mxu0 0
    %4104 = vmatpush2.bf16.msra.mxu0 %v3721
    %4105 = vmatprep.subr.bf16.mxu0 0
    %4106 = vmatpush2.bf16.msra.mxu0 %v3720
    %4107 = vmatprep.subr.bf16.mxu0 0
    %4108 = vmatpush2.bf16.msra.mxu0 %v3719
    %4109 = vmatprep.subr.bf16.mxu0 0
    %4110 = vmatpush2.bf16.msra.mxu0 %v3718
    %4111 = vmatprep.subr.bf16.mxu0 0
    %4112 = vmatpush2.bf16.msra.mxu0 %v3717
    %4113 = vmatprep.subr.bf16.mxu0 0
    %4114 = vmatpush2.bf16.msra.mxu0 %v3716
    %4115 = vmatprep.subr.bf16.mxu0 0
    %4116 = vmatpush2.bf16.msra.mxu0 %v3715
    %4117 = vmatprep.subr.bf16.mxu0 0
    %4118 = vmatpush2.bf16.msra.mxu0 %v3714
    %4119 = vmatprep.mubr.bf16.mxu0 %v2846
    %4120 = vmatmul.mubr.bf16.gmra.mxu0 %v2845
    %v4121 = vpop.f32.mrf.mxu0
    %v4122 = vadd.f32 %v4081, %v4121
    %v4123 = vpop.f32.mrf.mxu0
    %v4124 = vpop.f32.mrf.mxu0
    %v4125 = vadd.f32 %v4084, %v4124
    %v4126 = vpop.f32.mrf.mxu0
    %4127 = vdwg.mxu0
    %4128 = vmatprep.subr.bf16.mxu0 0
    %4129 = vmatpush1.bf16.msra.mxu0 %v3729
    %4130 = vmatprep.subr.bf16.mxu0 0
    %4131 = vmatpush1.bf16.msra.mxu0 %v3728
    %4132 = vmatprep.subr.bf16.mxu0 0
    %4133 = vmatpush1.bf16.msra.mxu0 %v3727
    %4134 = vmatprep.subr.bf16.mxu0 0
    %4135 = vmatpush1.bf16.msra.mxu0 %v3726
    %4136 = vmatprep.subr.bf16.mxu0 0
    %4137 = vmatpush1.bf16.msra.mxu0 %v3725
    %4138 = vmatprep.subr.bf16.mxu0 0
    %4139 = vmatpush1.bf16.msra.mxu0 %v3724
    %4140 = vmatprep.subr.bf16.mxu0 0
    %4141 = vmatpush1.bf16.msra.mxu0 %v3723
    %4142 = vmatprep.subr.bf16.mxu0 0
    %4143 = vmatpush1.bf16.msra.mxu0 %v3722
    %4144 = vmatprep.subr.bf16.mxu0 0
    %4145 = vmatpush2.bf16.msra.mxu0 %v3737
    %4146 = vmatprep.subr.bf16.mxu0 0
    %4147 = vmatpush2.bf16.msra.mxu0 %v3736
    %4148 = vmatprep.subr.bf16.mxu0 0
    %4149 = vmatpush2.bf16.msra.mxu0 %v3735
    %4150 = vmatprep.subr.bf16.mxu0 0
    %4151 = vmatpush2.bf16.msra.mxu0 %v3734
    %4152 = vmatprep.subr.bf16.mxu0 0
    %4153 = vmatpush2.bf16.msra.mxu0 %v3733
    %4154 = vmatprep.subr.bf16.mxu0 0
    %4155 = vmatpush2.bf16.msra.mxu0 %v3732
    %4156 = vmatprep.subr.bf16.mxu0 0
    %4157 = vmatpush2.bf16.msra.mxu0 %v3731
    %4158 = vmatprep.subr.bf16.mxu0 0
    %4159 = vmatpush2.bf16.msra.mxu0 %v3730
    %4160 = vmatprep.mubr.bf16.mxu0 %v2848
    %4161 = vmatmul.mubr.bf16.gmra.mxu0 %v2847
    %v4162 = vpop.f32.mrf.mxu0
    %v4163 = vadd.f32 %v4122, %v4162
    %v4164 = vpop.f32.mrf.mxu0
    %v4165 = vpop.f32.mrf.mxu0
    %v4166 = vadd.f32 %v4125, %v4165
    %v4167 = vpop.f32.mrf.mxu0
    %4168 = vdwg.mxu0
    %4169 = vmatprep.subr.bf16.mxu0 0
    %4170 = vmatpush1.bf16.msra.mxu0 %v3745
    %4171 = vmatprep.subr.bf16.mxu0 0
    %4172 = vmatpush1.bf16.msra.mxu0 %v3744
    %4173 = vmatprep.subr.bf16.mxu0 0
    %4174 = vmatpush1.bf16.msra.mxu0 %v3743
    %4175 = vmatprep.subr.bf16.mxu0 0
    %4176 = vmatpush1.bf16.msra.mxu0 %v3742
    %4177 = vmatprep.subr.bf16.mxu0 0
    %4178 = vmatpush1.bf16.msra.mxu0 %v3741
    %4179 = vmatprep.subr.bf16.mxu0 0
    %4180 = vmatpush1.bf16.msra.mxu0 %v3740
    %4181 = vmatprep.subr.bf16.mxu0 0
    %4182 = vmatpush1.bf16.msra.mxu0 %v3739
    %4183 = vmatprep.subr.bf16.mxu0 0
    %4184 = vmatpush1.bf16.msra.mxu0 %v3738
    %4185 = vmatprep.subr.bf16.mxu0 0
    %4186 = vmatpush2.bf16.msra.mxu0 %v3753
    %4187 = vmatprep.subr.bf16.mxu0 0
    %4188 = vmatpush2.bf16.msra.mxu0 %v3752
    %4189 = vmatprep.subr.bf16.mxu0 0
    %4190 = vmatpush2.bf16.msra.mxu0 %v3751
    %4191 = vmatprep.subr.bf16.mxu0 0
    %4192 = vmatpush2.bf16.msra.mxu0 %v3750
    %4193 = vmatprep.subr.bf16.mxu0 0
    %4194 = vmatpush2.bf16.msra.mxu0 %v3749
    %4195 = vmatprep.subr.bf16.mxu0 0
    %4196 = vmatpush2.bf16.msra.mxu0 %v3748
    %4197 = vmatprep.subr.bf16.mxu0 0
    %4198 = vmatpush2.bf16.msra.mxu0 %v3747
    %4199 = vmatprep.subr.bf16.mxu0 0
    %4200 = vmatpush2.bf16.msra.mxu0 %v3746
    %4201 = vmatprep.mubr.bf16.mxu0 %v2850
    %4202 = vmatmul.mubr.bf16.gmra.mxu0 %v2849
    %v4203 = vpop.f32.mrf.mxu0
    %v4204 = vadd.f32 %v4163, %v4203
    %v4205 = vpop.f32.mrf.mxu0
    %v4206 = vpop.f32.mrf.mxu0
    %v4207 = vadd.f32 %v4166, %v4206
    %v4208 = vpop.f32.mrf.mxu0
    %4209 = vdwg.mxu0
    %v4210 = vadd.f32 %v1550, %v4204
    %v4211 = vadd.f32 %v1551, %v4207
    %4212 = vst [vmem:[#allocation17] sm:$0xff] %v4210
    %4213 = vst [vmem:[#allocation17 + $0x8] sm:$0xff] %v4211
    // Predicated region
    $region90: #{tpu_custom_call.1} parent=1 // pred_check
      _
    $region91: #{tpu_custom_call.1} parent=1 // pred_check_branch
      %4215 = sbr.rel (0) target = $region93
    $region92: #{tpu_custom_call.1} parent=1 // pred_region
      %s4217 = ssub.s32 256, 256
      %4218 = vsyncadd [#allocation4], %s4217
      %s4219 = sshll.u32 [#allocation17], 4
      %s4220 = int_to_ptr.vmem [resolvable:$true] %s4219
      %4225 = dma.vmem_to_hbm [thread:$0]  %s4220, 256, %s13, [#allocation4], 128, 128, 8
    $region93: #{tpu_custom_call.1} parent=1 // pred_fallthru
      _
    // Predicated region
    $region94: #{tpu_custom_call.1} parent=1 // pred_check
      _
    $region95: #{tpu_custom_call.1} parent=1 // pred_check_branch
      %4227 = sbr.rel (0) target = $region97
    $region96: #{tpu_custom_call.1} parent=1 // pred_region
      %4228 = dma.done [#allocation4], 256
    $region97: #{tpu_custom_call.1} parent=1 // pred_fallthru
      _
    %4229 = vsyncpa [#allocation3], 1
    %4230 = vsyncpa [#allocation6], 1
    %4231 = vsyncpa [#allocation9], 1
    %4232 = vsyncpa [#allocation12], 1
    %4233 = vsyncpa [#allocation15], 1
    %4234 = vsyncpa [#allocation4], 1

</llo_original>
